<compile_context>
chip_gen: v6e
topology: v6e:2x2x1
jax: 0.10.0
libtpu: 0.0.40
codegen_flags: <defaults>
</compile_context>

<pallas_src>
import functools

import jax
import jax.numpy as jnp
from jax.experimental import pallas as pl
from jax.experimental.pallas import tpu as pltpu


# ----------------------------------------------------------------------------
# Pallas kernels
# ----------------------------------------------------------------------------
def _convT_kernel(w_ref, cols_ref, shift_ref, o_ref, *, use_lrelu):
    # w_ref:     (Cout, K)   bf16, BN scale pre-folded into the weights
    # cols_ref:  (K, tm)     bf16 transposed im2col tile (lanes = M)
    # shift_ref: (Cout, 1)   f32  folded conv-bias / BN shift
    # o_ref:     (Cout, tm)  lane-dense output
    acc = jnp.dot(w_ref[...], cols_ref[...], preferred_element_type=jnp.float32)
    y = acc + shift_ref[...]                 # f32 epilogue (v5e-safe)
    if use_lrelu:
        y = jnp.maximum(y, 0.2 * y)          # LeakyReLU(0.2)
    o_ref[...] = y.astype(o_ref.dtype)


def _tail_kernel(w3_ref, cols_ref, shift3_ref, w4_ref, gsel_ref, b4_ref, o_ref):
    # Fused layer3 (conv k4 s2 p1 + BN + LeakyReLU, Dropout = identity in eval)
    # and layer4 (conv k4 s1 p0 on the 4x4 map == full contraction per sample).
    #   w3_ref:   (C3, K3)  bf16          cols_ref: (K3, M3) bf16, M3 = N*16
    #   shift3:   (C3, 1)   f32           w4_ref:   (C3, M3) f32 (w4 tiled / N)
    #   gsel_ref: (M3, N)   f32 one-hot per-sample group-sum selector
    #   b4_ref:   (1, 1)    f32           o_ref:    (1, N)   f32
    act3 = jnp.dot(w3_ref[...], cols_ref[...],
                   preferred_element_type=jnp.float32) + shift3_ref[...]
    act3 = jnp.maximum(act3, 0.2 * act3)
    # TODO(synk): Dropout after layer3 is identity (eval mode).
    prod = act3 * w4_ref[...]                                    # (C3, M3) f32
    t = jnp.dot(prod, gsel_ref[...],
                preferred_element_type=jnp.float32)              # (C3, N)
    out = jnp.sum(t, axis=0, keepdims=True) + b4_ref[...]        # (1, N)
    o_ref[...] = out.astype(o_ref.dtype)


# ----------------------------------------------------------------------------
# Tiling helper + pallas_call wrappers
# ----------------------------------------------------------------------------
def _choose_tm(M, K):
    """Lane-dense M tile: multiple of 128 dividing M, VMEM-bounded, and >= 2
    grid steps when possible so both v7x TensorCores get work."""
    if M % 128 != 0:
        return M                               # tiny tail / ragged: full block
    # cap the bf16 cols block at ~8 MiB so double-buffering stays comfortable
    # even on v7x's smaller (64 MiB) VMEM at large batch sizes.
    cap = max(128, (((8 << 20) // (2 * max(K, 1))) // 128) * 128)
    tm = min(M, cap)
    while M % tm != 0:                         # tm, M both multiples of 128
        tm -= 128
    if tm == M and M >= 256 and (M // 2) % 128 == 0:
        tm = M // 2                            # give the 2nd TensorCore work
    return tm


def _conv_matmul_T(w_mat, cols_T, shift, *, use_lrelu, out_dtype):
    """w_mat: (Cout, K) bf16, cols_T: (K, M) bf16, shift: (Cout, 1) f32
       -> (Cout, M) out_dtype (lane-dense)."""
    Cout, K = w_mat.shape
    M = cols_T.shape[1]
    tm = _choose_tm(M, K)
    kernel = functools.partial(_convT_kernel, use_lrelu=use_lrelu)
    return pl.pallas_call(
        kernel,
        out_shape=jax.ShapeDtypeStruct((Cout, M), out_dtype),
        grid_spec=pltpu.PrefetchScalarGridSpec(
            num_scalar_prefetch=0,
            grid=(M // tm,),
            in_specs=[
                pl.BlockSpec((Cout, K), lambda i: (0, 0)),
                pl.BlockSpec((K, tm), lambda i: (0, i)),
                pl.BlockSpec((Cout, 1), lambda i: (0, 0)),
            ],
            out_specs=pl.BlockSpec((Cout, tm), lambda i: (0, i)),
        ),
        compiler_params=pltpu.CompilerParams(
            dimension_semantics=("parallel",)),
    )(w_mat, cols_T, shift)


# ----------------------------------------------------------------------------
# Plain-JAX glue: transposed im2col (gather/reshape only, no arithmetic)
# ----------------------------------------------------------------------------
def _im2col_T(x_cnhw, kh, kw, stride, pad):
    """x: (C, N, H, W) -> (C*kh*kw, N*OH*OW); K-order (C,kh,kw), M-order (N,OH,OW)."""
    C, N, H, W = x_cnhw.shape
    xp = jnp.pad(x_cnhw, ((0, 0), (0, 0), (pad, pad), (pad, pad)))
    OH = (H + 2 * pad - kh) // stride + 1
    OW = (W + 2 * pad - kw) // stride + 1
    taps = []
    for i in range(kh):
        for j in range(kw):
            taps.append(xp[:, :, i:i + stride * OH:stride,
                           j:j + stride * OW:stride])      # (C, N, OH, OW)
    cols = jnp.stack(taps, axis=0).reshape(kh, kw, C, N, OH, OW)
    cols = cols.transpose(2, 0, 1, 3, 4, 5).reshape(C * kh * kw, N * OH * OW)
    return cols, OH, OW


# ----------------------------------------------------------------------------
# Parameters: DCGAN-style init + one-time folding into kernel-ready form
# ----------------------------------------------------------------------------
def init_discriminator_params(key, nch=3, nch_d=16):
    """Deterministic DCGAN-style init (normal * 0.02); eval-mode BN stats."""
    chans = [nch, nch_d, nch_d * 2, nch_d * 4, nch_d * 8, 1]
    params = []
    for li in range(5):
        key, kw_, kb_, kg_, kbt_ = jax.random.split(key, 5)
        cin, cout = chans[li], chans[li + 1]
        w = 0.02 * jax.random.normal(kw_, (cout, cin, 4, 4), jnp.float32)
        b = 0.02 * jax.random.normal(kb_, (cout,), jnp.float32)
        if 1 <= li <= 3:  # layers 1..3 carry BatchNorm2d
            gamma = 1.0 + 0.02 * jax.random.normal(kg_, (cout,), jnp.float32)
            beta = 0.02 * jax.random.normal(kbt_, (cout,), jnp.float32)
            bn = (gamma, beta, jnp.zeros((cout,), jnp.float32),
                  jnp.ones((cout,), jnp.float32), 1e-5)
        else:
            bn = None
        params.append({"w": w, "b": b, "bn": bn})
    return params


def prepare_params(params):
    """Fold eval-mode BN scale into the conv weights once; bf16 matmul weights,
    f32 per-channel shift. Layer 4 kept raw (handled by the fused tail)."""
    prepped = []
    for li in range(4):
        w, b, bn = params[li]["w"], params[li]["b"], params[li]["bn"]
        cout = w.shape[0]
        w_mat = w.reshape(cout, -1)                 # (Cout, K), K = (Cin,kh,kw)
        if bn is not None:
            gamma, beta, mean, var, eps = bn
            s = gamma / jnp.sqrt(var + eps)
            w_mat = w_mat * s[:, None]
            shift = (b - mean) * s + beta
        else:
            shift = b
        prepped.append((w_mat.astype(jnp.bfloat16),
                        shift.reshape(cout, 1).astype(jnp.float32)))
    prepped.append((params[4]["w"].astype(jnp.float32),
                    params[4]["b"].astype(jnp.float32)))
    return prepped


# ----------------------------------------------------------------------------
# Forward pass
# ----------------------------------------------------------------------------
def discriminator_forward(prepped, x):
    """x: (N, C, H, W) f32 -> (N,) logits (eval-mode inference)."""
    N = x.shape[0]
    a = jnp.transpose(x, (1, 0, 2, 3))       # channel-major, once at boundary

    # layers 0..2: conv(k4,s2,p1) [+ folded BN] + LeakyReLU, lane-dense matmul
    for li in range(3):
        w_mat, shift = prepped[li]
        cols, OH, OW = _im2col_T(a, 4, 4, 2, 1)
        out = _conv_matmul_T(w_mat, cols.astype(jnp.bfloat16), shift,
                             use_lrelu=True, out_dtype=jnp.bfloat16)
        a = out.reshape(w_mat.shape[0], N, OH, OW)

    # fused tail: layer3 (conv+BN+LReLU+Dropout[=id]) + layer4 (conv k4 s1 p0)
    w3_mat, shift3 = prepped[3]
    w4, b4 = prepped[4]
    C3, K3 = w3_mat.shape
    cols3, OH3, OW3 = _im2col_T(a, 4, 4, 2, 1)

    if OH3 == 4 and OW3 == 4:                # standard DCGAN 64x64 geometry
        P = OH3 * OW3                        # 16 spatial positions / sample
        M3 = N * P
        w4a = jnp.tile(w4.reshape(C3, P), (1, N))                  # (C3, M3)
        gsel = (jnp.arange(M3)[:, None] // P
                == jnp.arange(N)[None, :]).astype(jnp.float32)     # (M3, N)
        b4_2d = b4.reshape(1, 1)
        out = pl.pallas_call(
            _tail_kernel,
            out_shape=jax.ShapeDtypeStruct((1, N), jnp.float32),
            grid_spec=pltpu.PrefetchScalarGridSpec(
                num_scalar_prefetch=0,
                grid=(1,),
                in_specs=[
                    pl.BlockSpec((C3, K3), lambda i: (0, 0)),
                    pl.BlockSpec((K3, M3), lambda i: (0, 0)),
                    pl.BlockSpec((C3, 1), lambda i: (0, 0)),
                    pl.BlockSpec((C3, M3), lambda i: (0, 0)),
                    pl.BlockSpec((M3, N), lambda i: (0, 0)),
                    pl.BlockSpec((1, 1), lambda i: (0, 0)),
                ],
                out_specs=pl.BlockSpec((1, N), lambda i: (0, 0)),
            ),
            compiler_params=pltpu.CompilerParams(
                dimension_semantics=("arbitrary",)),
        )(w3_mat, cols3.astype(jnp.bfloat16), shift3, w4a, gsel, b4_2d)
        return jnp.squeeze(out)              # (N,)  == PyTorch .squeeze()

    # fallback for non-64x64 geometries: un-fused layer3 then layer4
    out3 = _conv_matmul_T(w3_mat, cols3.astype(jnp.bfloat16), shift3,
                          use_lrelu=True, out_dtype=jnp.bfloat16)
    a = out3.reshape(C3, N, OH3, OW3)
    cols4, OH4, OW4 = _im2col_T(a, 4, 4, 1, 0)
    w4_mat = w4.reshape(1, -1).astype(jnp.bfloat16)
    out4 = _conv_matmul_T(w4_mat, cols4.astype(jnp.bfloat16),
                          b4.reshape(1, 1).astype(jnp.float32),
                          use_lrelu=False, out_dtype=jnp.float32)
    return jnp.squeeze(out4.reshape(1, N, OH4, OW4).transpose(1, 0, 2, 3))


if __name__ == "__main__":
    key = jax.random.PRNGKey(0)
    k_par, k_x = jax.random.split(key)

    nch, nch_d = 3, 16           # small channel count for the example
    N, H, W = 2, 64, 64          # DCGAN discriminator expects 64x64 inputs

    params = init_discriminator_params(k_par, nch=nch, nch_d=nch_d)
    prepped = prepare_params(params)
    x = jax.random.normal(k_x, (N, nch, H, W), jnp.float32)

    out = jax.jit(discriminator_forward)(prepped, x)
    out = jax.block_until_ready(out)
    assert out.shape == (N,), out.shape
    print("KERNEL_OK")
</pallas_src>

<mosaic_0001>
module attributes {stable_mosaic.version = 11 : i64} {
  func.func @_convT_kernel(%arg0: i32, %arg1: memref<16x48xbf16, #tpu.memory_space<vmem>>, %arg2: memref<48x1024xbf16, #tpu.memory_space<vmem>>, %arg3: memref<16x1xf32, #tpu.memory_space<vmem>>, %arg4: memref<16x1024xbf16, #tpu.memory_space<vmem>>) attributes {dimension_semantics = [#tpu.dimension_semantics<parallel>], iteration_bounds = array<i64: 2>, scalar_prefetch = 0 : i64, scratch_operands = 0 : i64, tpu.core_type = #tpu.core_type<tc>, window_params = [{pipeline_mode = #tpu.pipeline_mode<synchronous>, transform_indices = @transform_0, window_bounds = array<i64: 16, 48>}, {transform_indices = @transform_1, window_bounds = array<i64: 48, 1024>}, {pipeline_mode = #tpu.pipeline_mode<synchronous>, transform_indices = @transform_2, window_bounds = array<i64: 16, 1>}, {transform_indices = @transform_3, window_bounds = array<i64: 16, 1024>}]} {
    %c0 = arith.constant 0 : index
    %c0_0 = arith.constant 0 : index
    %0 = vector.load %arg1[%c0, %c0_0] : memref<16x48xbf16, #tpu.memory_space<vmem>>, vector<16x48xbf16>
    %c0_1 = arith.constant 0 : index
    %c0_2 = arith.constant 0 : index
    %1 = vector.load %arg2[%c0_1, %c0_2] : memref<48x1024xbf16, #tpu.memory_space<vmem>>, vector<48x1024xbf16>
    %cst = arith.constant dense<0.000000e+00> : vector<16x1024xf32>
    %2 = tpu.matmul %0, %1, %cst {dimension_numbers = #tpu.dot_dimension_numbers<[1], [0], [0], [1], [0, 0, 1, 1], [], []>} : vector<16x48xbf16>, vector<48x1024xbf16>, vector<16x1024xf32> -> vector<16x1024xf32>
    %c0_3 = arith.constant 0 : index
    %c0_4 = arith.constant 0 : index
    %3 = vector.load %arg3[%c0_3, %c0_4] : memref<16x1xf32, #tpu.memory_space<vmem>>, vector<16x1xf32>
    %4 = vector.broadcast %3 : vector<16x1xf32> to vector<16x1024xf32>
    %5 = arith.addf %2, %4 : vector<16x1024xf32>
    %cst_5 = arith.constant 2.000000e-01 : f32
    %6 = vector.broadcast %cst_5 : f32 to vector<16x1024xf32>
    %7 = arith.mulf %6, %5 : vector<16x1024xf32>
    %8 = arith.maximumf %5, %7 : vector<16x1024xf32>
    %9 = arith.truncf %8 : vector<16x1024xf32> to vector<16x1024xbf16>
    %c0_6 = arith.constant 0 : index
    %c0_7 = arith.constant 0 : index
    %10 = vector.load %arg4[%c0_6, %c0_7] : memref<16x1024xbf16, #tpu.memory_space<vmem>>, vector<16x1024xbf16>
    tpu.vector_store %arg4[%c0_6, %c0_7], %9 {strides = array<i32>} : memref<16x1024xbf16, #tpu.memory_space<vmem>>, vector<16x1024xbf16>,
    return
  }
  func.func @transform_0(%arg0: i32) -> (i32, i32) {
    %c0_i32 = arith.constant 0 : i32
    %c0_i32_0 = arith.constant 0 : i32
    %c0_i32_1 = arith.constant 0 : i32
    return %c0_i32, %c0_i32_0 : i32, i32
  }
  func.func @transform_1(%arg0: i32) -> (i32, i32) {
    %c0_i32 = arith.constant 0 : i32
    %c0_i32_0 = arith.constant 0 : i32
    return %c0_i32, %arg0 : i32, i32
  }
  func.func @transform_2(%arg0: i32) -> (i32, i32) {
    %c0_i32 = arith.constant 0 : i32
    %c0_i32_0 = arith.constant 0 : i32
    %c0_i32_1 = arith.constant 0 : i32
    return %c0_i32, %c0_i32_0 : i32, i32
  }
  func.func @transform_3(%arg0: i32) -> (i32, i32) {
    %c0_i32 = arith.constant 0 : i32
    %c0_i32_0 = arith.constant 0 : i32
    return %c0_i32, %arg0 : i32, i32
  }
}

module attributes {stable_mosaic.version = 11 : i64} {
  func.func @_convT_kernel(%arg0: i32, %arg1: memref<32x256xbf16, #tpu.memory_space<vmem>>, %arg2: memref<256x256xbf16, #tpu.memory_space<vmem>>, %arg3: memref<32x1xf32, #tpu.memory_space<vmem>>, %arg4: memref<32x256xbf16, #tpu.memory_space<vmem>>) attributes {dimension_semantics = [#tpu.dimension_semantics<parallel>], iteration_bounds = array<i64: 2>, scalar_prefetch = 0 : i64, scratch_operands = 0 : i64, tpu.core_type = #tpu.core_type<tc>, window_params = [{pipeline_mode = #tpu.pipeline_mode<synchronous>, transform_indices = @transform_0, window_bounds = array<i64: 32, 256>}, {transform_indices = @transform_1, window_bounds = array<i64: 256, 256>}, {pipeline_mode = #tpu.pipeline_mode<synchronous>, transform_indices = @transform_2, window_bounds = array<i64: 32, 1>}, {transform_indices = @transform_3, window_bounds = array<i64: 32, 256>}]} {
    %c0 = arith.constant 0 : index
    %c0_0 = arith.constant 0 : index
    %0 = vector.load %arg1[%c0, %c0_0] : memref<32x256xbf16, #tpu.memory_space<vmem>>, vector<32x256xbf16>
    %c0_1 = arith.constant 0 : index
    %c0_2 = arith.constant 0 : index
    %1 = vector.load %arg2[%c0_1, %c0_2] : memref<256x256xbf16, #tpu.memory_space<vmem>>, vector<256x256xbf16>
    %cst = arith.constant dense<0.000000e+00> : vector<32x256xf32>
    %2 = tpu.matmul %0, %1, %cst {dimension_numbers = #tpu.dot_dimension_numbers<[1], [0], [0], [1], [0, 0, 1, 1], [], []>} : vector<32x256xbf16>, vector<256x256xbf16>, vector<32x256xf32> -> vector<32x256xf32>
    %c0_3 = arith.constant 0 : index
    %c0_4 = arith.constant 0 : index
    %3 = vector.load %arg3[%c0_3, %c0_4] : memref<32x1xf32, #tpu.memory_space<vmem>>, vector<32x1xf32>
    %4 = vector.broadcast %3 : vector<32x1xf32> to vector<32x256xf32>
    %5 = arith.addf %2, %4 : vector<32x256xf32>
    %cst_5 = arith.constant 2.000000e-01 : f32
    %6 = vector.broadcast %cst_5 : f32 to vector<32x256xf32>
    %7 = arith.mulf %6, %5 : vector<32x256xf32>
    %8 = arith.maximumf %5, %7 : vector<32x256xf32>
    %9 = arith.truncf %8 : vector<32x256xf32> to vector<32x256xbf16>
    %c0_6 = arith.constant 0 : index
    %c0_7 = arith.constant 0 : index
    %10 = vector.load %arg4[%c0_6, %c0_7] : memref<32x256xbf16, #tpu.memory_space<vmem>>, vector<32x256xbf16>
    tpu.vector_store %arg4[%c0_6, %c0_7], %9 {strides = array<i32>} : memref<32x256xbf16, #tpu.memory_space<vmem>>, vector<32x256xbf16>,
    return
  }
  func.func @transform_0(%arg0: i32) -> (i32, i32) {
    %c0_i32 = arith.constant 0 : i32
    %c0_i32_0 = arith.constant 0 : i32
    %c0_i32_1 = arith.constant 0 : i32
    return %c0_i32, %c0_i32_0 : i32, i32
  }
  func.func @transform_1(%arg0: i32) -> (i32, i32) {
    %c0_i32 = arith.constant 0 : i32
    %c0_i32_0 = arith.constant 0 : i32
    return %c0_i32, %arg0 : i32, i32
  }
  func.func @transform_2(%arg0: i32) -> (i32, i32) {
    %c0_i32 = arith.constant 0 : i32
    %c0_i32_0 = arith.constant 0 : i32
    %c0_i32_1 = arith.constant 0 : i32
    return %c0_i32, %c0_i32_0 : i32, i32
  }
  func.func @transform_3(%arg0: i32) -> (i32, i32) {
    %c0_i32 = arith.constant 0 : i32
    %c0_i32_0 = arith.constant 0 : i32
    return %c0_i32, %arg0 : i32, i32
  }
}

module attributes {stable_mosaic.version = 11 : i64} {
  func.func @_convT_kernel(%arg0: i32, %arg1: memref<64x512xbf16, #tpu.memory_space<vmem>>, %arg2: memref<512x128xbf16, #tpu.memory_space<vmem>>, %arg3: memref<64x1xf32, #tpu.memory_space<vmem>>, %arg4: memref<64x128xbf16, #tpu.memory_space<vmem>>) attributes {dimension_semantics = [#tpu.dimension_semantics<parallel>], iteration_bounds = array<i64: 1>, scalar_prefetch = 0 : i64, scratch_operands = 0 : i64, tpu.core_type = #tpu.core_type<tc>, window_params = [{pipeline_mode = #tpu.pipeline_mode<synchronous>, transform_indices = @transform_0, window_bounds = array<i64: 64, 512>}, {transform_indices = @transform_1, window_bounds = array<i64: 512, 128>}, {pipeline_mode = #tpu.pipeline_mode<synchronous>, transform_indices = @transform_2, window_bounds = array<i64: 64, 1>}, {transform_indices = @transform_3, window_bounds = array<i64: 64, 128>}]} {
    %c0 = arith.constant 0 : index
    %c0_0 = arith.constant 0 : index
    %0 = vector.load %arg1[%c0, %c0_0] : memref<64x512xbf16, #tpu.memory_space<vmem>>, vector<64x512xbf16>
    %c0_1 = arith.constant 0 : index
    %c0_2 = arith.constant 0 : index
    %1 = vector.load %arg2[%c0_1, %c0_2] : memref<512x128xbf16, #tpu.memory_space<vmem>>, vector<512x128xbf16>
    %cst = arith.constant dense<0.000000e+00> : vector<64x128xf32>
    %2 = tpu.matmul %0, %1, %cst {dimension_numbers = #tpu.dot_dimension_numbers<[1], [0], [0], [1], [0, 0, 1, 1], [], []>} : vector<64x512xbf16>, vector<512x128xbf16>, vector<64x128xf32> -> vector<64x128xf32>
    %c0_3 = arith.constant 0 : index
    %c0_4 = arith.constant 0 : index
    %3 = vector.load %arg3[%c0_3, %c0_4] : memref<64x1xf32, #tpu.memory_space<vmem>>, vector<64x1xf32>
    %4 = vector.broadcast %3 : vector<64x1xf32> to vector<64x128xf32>
    %5 = arith.addf %2, %4 : vector<64x128xf32>
    %cst_5 = arith.constant 2.000000e-01 : f32
    %6 = vector.broadcast %cst_5 : f32 to vector<64x128xf32>
    %7 = arith.mulf %6, %5 : vector<64x128xf32>
    %8 = arith.maximumf %5, %7 : vector<64x128xf32>
    %9 = arith.truncf %8 : vector<64x128xf32> to vector<64x128xbf16>
    %c0_6 = arith.constant 0 : index
    %c0_7 = arith.constant 0 : index
    %10 = vector.load %arg4[%c0_6, %c0_7] : memref<64x128xbf16, #tpu.memory_space<vmem>>, vector<64x128xbf16>
    tpu.vector_store %arg4[%c0_6, %c0_7], %9 {strides = array<i32>} : memref<64x128xbf16, #tpu.memory_space<vmem>>, vector<64x128xbf16>,
    return
  }
  func.func @transform_0(%arg0: i32) -> (i32, i32) {
    %c0_i32 = arith.constant 0 : i32
    %c0_i32_0 = arith.constant 0 : i32
    %c0_i32_1 = arith.constant 0 : i32
    return %c0_i32, %c0_i32_0 : i32, i32
  }
  func.func @transform_1(%arg0: i32) -> (i32, i32) {
    %c0_i32 = arith.constant 0 : i32
    %c0_i32_0 = arith.constant 0 : i32
    return %c0_i32, %arg0 : i32, i32
  }
  func.func @transform_2(%arg0: i32) -> (i32, i32) {
    %c0_i32 = arith.constant 0 : i32
    %c0_i32_0 = arith.constant 0 : i32
    %c0_i32_1 = arith.constant 0 : i32
    return %c0_i32, %c0_i32_0 : i32, i32
  }
  func.func @transform_3(%arg0: i32) -> (i32, i32) {
    %c0_i32 = arith.constant 0 : i32
    %c0_i32_0 = arith.constant 0 : i32
    return %c0_i32, %arg0 : i32, i32
  }
}

module attributes {stable_mosaic.version = 11 : i64} {
  func.func @_tail_kernel(%arg0: i32, %arg1: memref<128x1024xbf16, #tpu.memory_space<vmem>>, %arg2: memref<1024x32xbf16, #tpu.memory_space<vmem>>, %arg3: memref<128x1xf32, #tpu.memory_space<vmem>>, %arg4: memref<128x32xf32, #tpu.memory_space<vmem>>, %arg5: memref<32x2xf32, #tpu.memory_space<vmem>>, %arg6: memref<1x1xf32, #tpu.memory_space<vmem>>, %arg7: memref<1x2xf32, #tpu.memory_space<vmem>>) attributes {dimension_semantics = [#tpu.dimension_semantics<arbitrary>], iteration_bounds = array<i64: 1>, scalar_prefetch = 0 : i64, scratch_operands = 0 : i64, tpu.core_type = #tpu.core_type<tc>, window_params = [{pipeline_mode = #tpu.pipeline_mode<synchronous>, transform_indices = @transform_0, window_bounds = array<i64: 128, 1024>}, {pipeline_mode = #tpu.pipeline_mode<synchronous>, transform_indices = @transform_1, window_bounds = array<i64: 1024, 32>}, {pipeline_mode = #tpu.pipeline_mode<synchronous>, transform_indices = @transform_2, window_bounds = array<i64: 128, 1>}, {pipeline_mode = #tpu.pipeline_mode<synchronous>, transform_indices = @transform_3, window_bounds = array<i64: 128, 32>}, {pipeline_mode = #tpu.pipeline_mode<synchronous>, transform_indices = @transform_4, window_bounds = array<i64: 32, 2>}, {pipeline_mode = #tpu.pipeline_mode<synchronous>, transform_indices = @transform_5, window_bounds = array<i64: 1, 1>}, {pipeline_mode = #tpu.pipeline_mode<synchronous>, transform_indices = @transform_6, window_bounds = array<i64: 1, 2>}]} {
    %c0 = arith.constant 0 : index
    %c0_0 = arith.constant 0 : index
    %0 = vector.load %arg1[%c0, %c0_0] : memref<128x1024xbf16, #tpu.memory_space<vmem>>, vector<128x1024xbf16>
    %c0_1 = arith.constant 0 : index
    %c0_2 = arith.constant 0 : index
    %1 = vector.load %arg2[%c0_1, %c0_2] : memref<1024x32xbf16, #tpu.memory_space<vmem>>, vector<1024x32xbf16>
    %cst = arith.constant dense<0.000000e+00> : vector<128x32xf32>
    %2 = tpu.matmul %0, %1, %cst {dimension_numbers = #tpu.dot_dimension_numbers<[1], [0], [0], [1], [0, 0, 1, 1], [], []>} : vector<128x1024xbf16>, vector<1024x32xbf16>, vector<128x32xf32> -> vector<128x32xf32>
    %c0_3 = arith.constant 0 : index
    %c0_4 = arith.constant 0 : index
    %3 = vector.load %arg3[%c0_3, %c0_4] : memref<128x1xf32, #tpu.memory_space<vmem>>, vector<128x1xf32>
    %4 = vector.broadcast %3 : vector<128x1xf32> to vector<128x32xf32>
    %5 = arith.addf %2, %4 : vector<128x32xf32>
    %cst_5 = arith.constant 2.000000e-01 : f32
    %6 = vector.broadcast %cst_5 : f32 to vector<128x32xf32>
    %7 = arith.mulf %6, %5 : vector<128x32xf32>
    %8 = arith.maximumf %5, %7 : vector<128x32xf32>
    %c0_6 = arith.constant 0 : index
    %c0_7 = arith.constant 0 : index
    %9 = vector.load %arg4[%c0_6, %c0_7] : memref<128x32xf32, #tpu.memory_space<vmem>>, vector<128x32xf32>
    %10 = arith.mulf %8, %9 : vector<128x32xf32>
    %c0_8 = arith.constant 0 : index
    %c0_9 = arith.constant 0 : index
    %11 = vector.load %arg5[%c0_8, %c0_9] : memref<32x2xf32, #tpu.memory_space<vmem>>, vector<32x2xf32>
    %cst_10 = arith.constant dense<0.000000e+00> : vector<128x2xf32>
    %12 = tpu.matmul %10, %11, %cst_10 {dimension_numbers = #tpu.dot_dimension_numbers<[1], [0], [0], [1], [0, 0, 1, 1], [], []>} : vector<128x32xf32>, vector<32x2xf32>, vector<128x2xf32> -> vector<128x2xf32>
    %cst_11 = arith.constant dense<0.000000e+00> : vector<2xf32>
    %13 = vector.multi_reduction <add>, %12, %cst_11 [0] : vector<128x2xf32> to vector<2xf32>
    %14 = vector.shape_cast %13 : vector<2xf32> to vector<1x2xf32>
    %c0_12 = arith.constant 0 : index
    %c0_13 = arith.constant 0 : index
    %15 = vector.load %arg6[%c0_12, %c0_13] : memref<1x1xf32, #tpu.memory_space<vmem>>, vector<1x1xf32>
    %16 = vector.broadcast %15 : vector<1x1xf32> to vector<1x2xf32>
    %17 = arith.addf %14, %16 : vector<1x2xf32>
    %c0_14 = arith.constant 0 : index
    %c0_15 = arith.constant 0 : index
    %18 = vector.load %arg7[%c0_14, %c0_15] : memref<1x2xf32, #tpu.memory_space<vmem>>, vector<1x2xf32>
    tpu.vector_store %arg7[%c0_14, %c0_15], %17 {strides = array<i32>} : memref<1x2xf32, #tpu.memory_space<vmem>>, vector<1x2xf32>,
    return
  }
  func.func @transform_0(%arg0: i32) -> (i32, i32) {
    %c0_i32 = arith.constant 0 : i32
    %c0_i32_0 = arith.constant 0 : i32
    %c0_i32_1 = arith.constant 0 : i32
    return %c0_i32, %c0_i32_0 : i32, i32
  }
  func.func @transform_1(%arg0: i32) -> (i32, i32) {
    %c0_i32 = arith.constant 0 : i32
    %c0_i32_0 = arith.constant 0 : i32
    %c0_i32_1 = arith.constant 0 : i32
    return %c0_i32, %c0_i32_0 : i32, i32
  }
  func.func @transform_2(%arg0: i32) -> (i32, i32) {
    %c0_i32 = arith.constant 0 : i32
    %c0_i32_0 = arith.constant 0 : i32
    %c0_i32_1 = arith.constant 0 : i32
    return %c0_i32, %c0_i32_0 : i32, i32
  }
  func.func @transform_3(%arg0: i32) -> (i32, i32) {
    %c0_i32 = arith.constant 0 : i32
    %c0_i32_0 = arith.constant 0 : i32
    %c0_i32_1 = arith.constant 0 : i32
    return %c0_i32, %c0_i32_0 : i32, i32
  }
  func.func @transform_4(%arg0: i32) -> (i32, i32) {
    %c0_i32 = arith.constant 0 : i32
    %c0_i32_0 = arith.constant 0 : i32
    %c0_i32_1 = arith.constant 0 : i32
    return %c0_i32, %c0_i32_0 : i32, i32
  }
  func.func @transform_5(%arg0: i32) -> (i32, i32) {
    %c0_i32 = arith.constant 0 : i32
    %c0_i32_0 = arith.constant 0 : i32
    %c0_i32_1 = arith.constant 0 : i32
    return %c0_i32, %c0_i32_0 : i32, i32
  }
  func.func @transform_6(%arg0: i32) -> (i32, i32) {
    %c0_i32 = arith.constant 0 : i32
    %c0_i32_0 = arith.constant 0 : i32
    %c0_i32_1 = arith.constant 0 : i32
    return %c0_i32, %c0_i32_0 : i32, i32
  }
}

</mosaic_0001>

<llo_original>
// kernel: discriminator_forward.4
$region0: #{discriminator_forward.4}
  #allocation0 [shape = 'u32[]', space=smem, size = 0x4, offset = 0x4, fixed_abs, tag = 'smem constant byte address 0x4 - core index']
  #allocation1 [shape = 'u32[144,128]{1,0:T(1,128)}', space=vmem, size = 0x12000, scoped, tag = 'internal scratch']
  %s0 = inlined_call_operand.vmem [shape: bf16[16,48], index: 0, kind: input, shape index: {}]
  %s1 = inlined_call_operand.vmem [shape: bf16[48,2048], index: 1, kind: input, shape index: {}]
  %s2 = inlined_call_operand.vmem [shape: f32[16,1], index: 2, kind: input, shape index: {}]
  %s3 = inlined_call_operand.vmem [shape: bf16[16,2048], index: 3, kind: output, shape index: {}]
  %s4 = sld [smem:[#allocation0]]
  $region87: #{discriminator_forward.4} parent=0
    _
  %s6 = ssub.s32 1, %s4
  %s7 = scalar_select 0, %s6, %s4
  $region1: #{discriminator_forward.4} parent=0
    #allocation2 [shape = 'u8[196608]{0}', space=vmem, size = 0x30000, scoped, tag = 'input window, operand 1']
    #allocation3 [shape = 'u8[65536]{0}', space=vmem, size = 0x10000, scoped, tag = 'output window, operand 0']
    loop: start=0, step=1, limit=4
    $region2: #{discriminator_forward.4} parent=1 // loop_pre_header
      _
    $region3: #{discriminator_forward.4} parent=1 // loop_header
      %s9 = sphi 0, %s13
      %p10 = scmp.ge.s32.totalorder %s9, 4
      %s17 = sphi 0, %s17
      %s19 = sphi 0, %s17
      %s20 = sphi 0, %s19
      %s34 = sphi 0, %s20
      %s40 = sphi 0, %s42
      %s43 = sphi 0, %s40
      %s44 = sphi 0, %s43
      %s60 = sphi 0, %s44
      %s64 = sphi 0, %s64
      %s66 = sphi 0, %s64
      %s67 = sphi 0, %s66
      %s81 = sphi 0, %s67
      %s87 = sphi 0, %s89
      %s90 = sphi 0, %s87
      %s91 = sphi 0, %s90
      %s107 = sphi 0, %s91
    $region4: #{discriminator_forward.4} parent=1 // loop_header_branch
      %12 = sbr.rel (%p10) target = $region8
    $region5: #{discriminator_forward.4} parent=1 // loop_body
      %s14 = ssub.s32 %s9, 1
      %s15 = ssub.s32 %s9, 2
      %s16 = sadd.s32 %s9, 1
      %s18 = sadd.s32 %s17, 1
      %p21 = scmp.eq.s32.totalorder %s9, 1
      %p22 = scmp.ne.s32.totalorder %s17, %s19
      %p23 = scmp.eq.s32.totalorder %s9, 0
      %p24 = por %p22, %p23
      %p25 = scmp.ne.s32.totalorder %s17, %s19
      %p26 = scmp.eq.s32.totalorder %s14, 1
      %p27 = por %p25, %p26
      %p28 = scmp.ne.s32.totalorder %s19, %s20
      %p29 = scmp.eq.s32.totalorder %s14, 0
      %p30 = por %p28, %p29
      %p31 = scmp.ne.s32.totalorder %s19, %s20
      %p32 = scmp.eq.s32.totalorder %s15, 1
      %p33 = por %p31, %p32
      %p35 = scmp.ne.s32.totalorder %s20, %s34
      %p36 = scmp.eq.s32.totalorder %s15, 0
      %p37 = por %p35, %p36
      %s38 = ssub.s32 %s9, %s16
      %p39 = scmp.eq.s32.totalorder %s38, 0
      %s41 = sadd.s32 %s40, 1
      %s42 = scalar_select %p39, %s40, %s41
      %p45 = pneg %p39
      %p46 = scmp.eq.s32.totalorder %s9, 1
      %p47 = por %p45, %p46
      %p48 = scmp.ne.s32.totalorder %s40, %s43
      %p49 = scmp.eq.s32.totalorder %s9, 0
      %p50 = por %p48, %p49
      %p51 = scmp.ne.s32.totalorder %s40, %s43
      %p52 = scmp.eq.s32.totalorder %s14, 1
      %p53 = por %p51, %p52
      %p54 = scmp.ne.s32.totalorder %s43, %s44
      %p55 = scmp.eq.s32.totalorder %s14, 0
      %p56 = por %p54, %p55
      %p57 = scmp.ne.s32.totalorder %s43, %s44
      %p58 = scmp.eq.s32.totalorder %s15, 1
      %p59 = por %p57, %p58
      %p61 = scmp.ne.s32.totalorder %s44, %s60
      %p62 = scmp.eq.s32.totalorder %s15, 0
      %p63 = por %p61, %p62
      %s65 = sadd.s32 %s64, 1
      %p68 = scmp.eq.s32.totalorder %s9, 1
      %p69 = scmp.ne.s32.totalorder %s64, %s66
      %p70 = scmp.eq.s32.totalorder %s9, 0
      %p71 = por %p69, %p70
      %p72 = scmp.ne.s32.totalorder %s64, %s66
      %p73 = scmp.eq.s32.totalorder %s14, 1
      %p74 = por %p72, %p73
      %p75 = scmp.ne.s32.totalorder %s66, %s67
      %p76 = scmp.eq.s32.totalorder %s14, 0
      %p77 = por %p75, %p76
      %p78 = scmp.ne.s32.totalorder %s66, %s67
      %p79 = scmp.eq.s32.totalorder %s15, 1
      %p80 = por %p78, %p79
      %p82 = scmp.ne.s32.totalorder %s67, %s81
      %p83 = scmp.eq.s32.totalorder %s15, 0
      %p84 = por %p82, %p83
      %s85 = ssub.s32 %s9, %s16
      %p86 = scmp.eq.s32.totalorder %s85, 0
      %s88 = sadd.s32 %s87, 1
      %s89 = scalar_select %p86, %s87, %s88
      %p92 = pneg %p86
      %p93 = scmp.eq.s32.totalorder %s9, 1
      %p94 = por %p92, %p93
      %p95 = scmp.ne.s32.totalorder %s87, %s90
      %p96 = scmp.eq.s32.totalorder %s9, 0
      %p97 = por %p95, %p96
      %p98 = scmp.ne.s32.totalorder %s87, %s90
      %p99 = scmp.eq.s32.totalorder %s14, 1
      %p100 = por %p98, %p99
      %p101 = scmp.ne.s32.totalorder %s90, %s91
      %p102 = scmp.eq.s32.totalorder %s14, 0
      %p103 = por %p101, %p102
      %p104 = scmp.ne.s32.totalorder %s90, %s91
      %p105 = scmp.eq.s32.totalorder %s15, 1
      %p106 = por %p104, %p105
      %p108 = scmp.ne.s32.totalorder %s91, %s107
      %p109 = scmp.eq.s32.totalorder %s15, 0
      %p110 = por %p108, %p109
      %p111 = scmp.le.s32.totalorder 1, %s9
      %p112 = scmp.lt.s32.totalorder %s9, 3
      %p113 = pnand %p111, %p112
      %p114 = pneg %p113
      // Predicated region
      $region9: #{discriminator_forward.4} parent=5 // pred_check
        _
      $region10: #{discriminator_forward.4} parent=5 // pred_check_branch
        %116 = sbr.rel (%p113) target = $region12
      $region11: #{discriminator_forward.4} parent=5 // pred_region
        %s117 = ssub.s32 %s9, 1
        // Predicated region
        $region13: #{discriminator_forward.4} parent=11 // pred_check
          %p118 = pneg %p30
        $region14: #{discriminator_forward.4} parent=11 // pred_check_branch
          %120 = sbr.rel (%p118) target = $region16
        $region15: #{discriminator_forward.4} parent=11 // pred_region
          _
        $region16: #{discriminator_forward.4} parent=11 // pred_fallthru
          _
        // Predicated region
        $region17: #{discriminator_forward.4} parent=11 // pred_check
          %p121 = pneg %p77
        $region18: #{discriminator_forward.4} parent=11 // pred_check_branch
          %123 = sbr.rel (%p121) target = $region20
        $region19: #{discriminator_forward.4} parent=11 // pred_region
          _
        $region20: #{discriminator_forward.4} parent=11 // pred_fallthru
          _
      $region12: #{discriminator_forward.4} parent=5 // pred_fallthru
        _
      %p124 = scmp.lt.s32.totalorder %s9, 2
      // Predicated region
      $region21: #{discriminator_forward.4} parent=5 // pred_check
        %p125 = pneg %p124
      $region22: #{discriminator_forward.4} parent=5 // pred_check_branch
        %127 = sbr.rel (%p125) target = $region24
      $region23: #{discriminator_forward.4} parent=5 // pred_region
        // Predicated region
        $region25: #{discriminator_forward.4} parent=23 // pred_check
          %p128 = pneg %p50
        $region26: #{discriminator_forward.4} parent=23 // pred_check_branch
          %130 = sbr.rel (%p128) target = $region28
        $region27: #{discriminator_forward.4} parent=23 // pred_region
          %s131 = sand.u32 %s40, 1
          %s132 = sand.u32 %s40, 1
          %s133 = smul.addr %s132, 192
          %s134 = scalar_lea.vmem [#allocation2], %s133
          %s135 = smul.u32 8, %s9
          %s136 = smul.addr %s135, 4
          %s137 = scalar_lea.vmem %s1, %s136
          // Predicated region
          $region29: #{discriminator_forward.4} parent=27 // pred_check
            _
          $region30: #{discriminator_forward.4} parent=27 // pred_check_branch
            %139 = sbr.rel (0) target = $region32
          $region31: #{discriminator_forward.4} parent=27 // pred_region
            // Predicated region
            $region33: #{discriminator_forward.4} parent=31 // pred_check
              _
            $region34: #{discriminator_forward.4} parent=31 // pred_check_branch
              %141 = sbr.rel (0) target = $region36
            $region35: #{discriminator_forward.4} parent=31 // pred_region
              loop: start=0, step=1, limit=1
              $region37: #{discriminator_forward.4} parent=35 // loop_pre_header
                _
              $region38: #{discriminator_forward.4} parent=35 // loop_header
                %s143 = sphi 0, %s147
                %p144 = scmp.ge.s32.totalorder %s143, 1
                %s148 = sphi %s137, %s137
                %s149 = sphi %s134, %s134
              $region39: #{discriminator_forward.4} parent=35 // loop_header_branch
                %146 = sbr.rel (%p144) target = $region43
              $region40: #{discriminator_forward.4} parent=35 // loop_body
                %v150 = vld [vmem:[%s148] sm:$0xff]
                %151 = vst [vmem:[%s149] sm:$0xff] %v150
                %v152 = vld [vmem:[%s148 + $0x8] sm:$0xff]
                %153 = vst [vmem:[%s149 + $0x8] sm:$0xff] %v152
                %v154 = vld [vmem:[%s148 + $0x10] sm:$0xff]
                %155 = vst [vmem:[%s149 + $0x10] sm:$0xff] %v154
                %v156 = vld [vmem:[%s148 + $0x18] sm:$0xff]
                %157 = vst [vmem:[%s149 + $0x18] sm:$0xff] %v156
                %v158 = vld [vmem:[%s148 + $0x40] sm:$0xff]
                %159 = vst [vmem:[%s149 + $0x20] sm:$0xff] %v158
                %v160 = vld [vmem:[%s148 + $0x48] sm:$0xff]
                %161 = vst [vmem:[%s149 + $0x28] sm:$0xff] %v160
                %v162 = vld [vmem:[%s148 + $0x50] sm:$0xff]
                %163 = vst [vmem:[%s149 + $0x30] sm:$0xff] %v162
                %v164 = vld [vmem:[%s148 + $0x58] sm:$0xff]
                %165 = vst [vmem:[%s149 + $0x38] sm:$0xff] %v164
                %v166 = vld [vmem:[%s148 + $0x80] sm:$0xff]
                %167 = vst [vmem:[%s149 + $0x40] sm:$0xff] %v166
                %v168 = vld [vmem:[%s148 + $0x88] sm:$0xff]
                %169 = vst [vmem:[%s149 + $0x48] sm:$0xff] %v168
                %v170 = vld [vmem:[%s148 + $0x90] sm:$0xff]
                %171 = vst [vmem:[%s149 + $0x50] sm:$0xff] %v170
                %v172 = vld [vmem:[%s148 + $0x98] sm:$0xff]
                %173 = vst [vmem:[%s149 + $0x58] sm:$0xff] %v172
                %v174 = vld [vmem:[%s148 + $0xc0] sm:$0xff]
                %175 = vst [vmem:[%s149 + $0x60] sm:$0xff] %v174
                %v176 = vld [vmem:[%s148 + $0xc8] sm:$0xff]
                %177 = vst [vmem:[%s149 + $0x68] sm:$0xff] %v176
                %v178 = vld [vmem:[%s148 + $0xd0] sm:$0xff]
                %179 = vst [vmem:[%s149 + $0x70] sm:$0xff] %v178
                %v180 = vld [vmem:[%s148 + $0xd8] sm:$0xff]
                %181 = vst [vmem:[%s149 + $0x78] sm:$0xff] %v180
                %v182 = vld [vmem:[%s148 + $0x100] sm:$0xff]
                %183 = vst [vmem:[%s149 + $0x80] sm:$0xff] %v182
                %v184 = vld [vmem:[%s148 + $0x108] sm:$0xff]
                %185 = vst [vmem:[%s149 + $0x88] sm:$0xff] %v184
                %v186 = vld [vmem:[%s148 + $0x110] sm:$0xff]
                %187 = vst [vmem:[%s149 + $0x90] sm:$0xff] %v186
                %v188 = vld [vmem:[%s148 + $0x118] sm:$0xff]
                %189 = vst [vmem:[%s149 + $0x98] sm:$0xff] %v188
                %v190 = vld [vmem:[%s148 + $0x140] sm:$0xff]
                %191 = vst [vmem:[%s149 + $0xa0] sm:$0xff] %v190
                %v192 = vld [vmem:[%s148 + $0x148] sm:$0xff]
                %193 = vst [vmem:[%s149 + $0xa8] sm:$0xff] %v192
                %v194 = vld [vmem:[%s148 + $0x150] sm:$0xff]
                %195 = vst [vmem:[%s149 + $0xb0] sm:$0xff] %v194
                %v196 = vld [vmem:[%s148 + $0x158] sm:$0xff]
                %197 = vst [vmem:[%s149 + $0xb8] sm:$0xff] %v196
              $region41: #{discriminator_forward.4} parent=35 // loop_footer
                %s147 = sadd.s32 1, %s143
              $region42: #{discriminator_forward.4} parent=35 // loop_footer_branch
                %142 = sbr.rel target = $region38
              $region43: #{discriminator_forward.4} parent=35 // loop_exit
                _
            $region36: #{discriminator_forward.4} parent=31 // pred_fallthru
              _
            // Predicated region
            $region44: #{discriminator_forward.4} parent=31 // pred_check
              _
            $region45: #{discriminator_forward.4} parent=31 // pred_check_branch
              %199 = sbr.rel target = $region47
            $region46: #{discriminator_forward.4} parent=31 // pred_region
              _
            $region47: #{discriminator_forward.4} parent=31 // pred_fallthru
              _
          $region32: #{discriminator_forward.4} parent=27 // pred_fallthru
            _
          %200 = vnop
        $region28: #{discriminator_forward.4} parent=23 // pred_fallthru
          _
      $region24: #{discriminator_forward.4} parent=5 // pred_fallthru
        _
      %p201 = scmp.le.s32.totalorder 1, %s9
      %p202 = scmp.lt.s32.totalorder %s9, 3
      %p203 = pnand %p201, %p202
      %p204 = pneg %p203
      // Predicated region
      $region48: #{discriminator_forward.4} parent=5 // pred_check
        _
      $region49: #{discriminator_forward.4} parent=5 // pred_check_branch
        %206 = sbr.rel (%p203) target = $region51
      $region50: #{discriminator_forward.4} parent=5 // pred_region
        %s207 = ssub.s32 %s9, 1
        %s208 = sand.u32 %s43, 1
        %s209 = sand.u32 %s43, 1
        %s210 = smul.addr %s209, 192
        %s211 = scalar_lea.vmem [#allocation2], %s210
        // Predicated region
        $region52: #{discriminator_forward.4} parent=50 // pred_check
          %p212 = pneg %p56
        $region53: #{discriminator_forward.4} parent=50 // pred_check_branch
          %214 = sbr.rel (%p212) target = $region55
        $region54: #{discriminator_forward.4} parent=50 // pred_region
          _
        $region55: #{discriminator_forward.4} parent=50 // pred_fallthru
          _
        %p215 = pneg %p30
        %p216 = pneg %p27
        %s217 = sand.u32 %s43, 1
        %s218 = sand.u32 %s43, 1
        %s219 = smul.addr %s218, 192
        %s220 = scalar_lea.vmem [#allocation2], %s219
        %p221 = pneg %p56
        %p222 = pneg %p53
        %p223 = pneg %p77
        %p224 = pneg %p74
        %p225 = pneg %p103
        %p226 = pneg %p100
        %s227 = sand.u32 %s90, 1
        %s228 = sand.u32 %s90, 1
        %s229 = smul.addr %s228, 64
        %s230 = scalar_lea.vmem [#allocation3], %s229
        %s231 = smul.u32 8, %s14
        %s232 = smul.u32 8, %s14
        %v234 = vld [vmem:[%s0] sm:$0xf]
        %v235 = vld [vmem:[%s0 + $0x4] sm:$0xf]
        %v236 = vld [vmem:[%s211] sm:$0xff]
        %v237 = vld [vmem:[%s211 + $0x8] sm:$0xff]
        %v238 = vld [vmem:[%s211 + $0x10] sm:$0xff]
        %v239 = vld [vmem:[%s211 + $0x18] sm:$0xff]
        %v240 = vld [vmem:[%s211 + $0x20] sm:$0xff]
        %v241 = vld [vmem:[%s211 + $0x28] sm:$0xff]
        %v242 = vld [vmem:[%s211 + $0x30] sm:$0xff]
        %v243 = vld [vmem:[%s211 + $0x38] sm:$0xff]
        %v244 = vld [vmem:[%s211 + $0x40] sm:$0xff]
        %v245 = vld [vmem:[%s211 + $0x48] sm:$0xff]
        %v246 = vld [vmem:[%s211 + $0x50] sm:$0xff]
        %v247 = vld [vmem:[%s211 + $0x58] sm:$0xff]
        %v248 = vld [vmem:[%s211 + $0x60] sm:$0xff]
        %v249 = vld [vmem:[%s211 + $0x68] sm:$0xff]
        %v250 = vld [vmem:[%s211 + $0x70] sm:$0xff]
        %v251 = vld [vmem:[%s211 + $0x78] sm:$0xff]
        %v252 = vld [vmem:[%s211 + $0x80] sm:$0xff]
        %v253 = vld [vmem:[%s211 + $0x88] sm:$0xff]
        %v254 = vld [vmem:[%s211 + $0x90] sm:$0xff]
        %v255 = vld [vmem:[%s211 + $0x98] sm:$0xff]
        %v256 = vld [vmem:[%s211 + $0xa0] sm:$0xff]
        %v257 = vld [vmem:[%s211 + $0xa8] sm:$0xff]
        %v258 = vld [vmem:[%s211 + $0xb0] sm:$0xff]
        %v259 = vld [vmem:[%s211 + $0xb8] sm:$0xff]
        %v260 = vld [vmem:[%s2] sm:$0xff]
        %v261 = vld [vmem:[%s2 + $0x8] sm:$0xff]
        %263 = vset.pattern.permute.xlu0 0
        %264 = vperm.xlu0 %263, %v260
        %v265 = vpop.permute.xlu0 %264
        %268 = vset.pattern.permute.xlu0 0
        %269 = vperm.xlu0 %268, %v261
        %v270 = vpop.permute.xlu0 %269
        %v274 = vunpack.c.l.b16 %v234
        %v275 = vunpack.c.l.b16 %v235
        %v276 = vpack.c.b16 %v275, %v274
        %v301 = vunpack.c.l.b16 %v236
        %v302 = vunpack.c.h.b16 %v236
        %v303 = vunpack.c.l.b16 %v237
        %v304 = vunpack.c.h.b16 %v237
        %v305 = vunpack.c.l.b16 %v238
        %v306 = vunpack.c.h.b16 %v238
        %v307 = vunpack.c.l.b16 %v239
        %v308 = vunpack.c.h.b16 %v239
        %v309 = vunpack.c.l.b16 %v240
        %v310 = vunpack.c.h.b16 %v240
        %v311 = vunpack.c.l.b16 %v241
        %v312 = vunpack.c.h.b16 %v241
        %v313 = vunpack.c.l.b16 %v242
        %v314 = vunpack.c.h.b16 %v242
        %v315 = vunpack.c.l.b16 %v243
        %v316 = vunpack.c.h.b16 %v243
        %v317 = vunpack.c.l.b16 %v244
        %v318 = vunpack.c.h.b16 %v244
        %v319 = vunpack.c.l.b16 %v245
        %v320 = vunpack.c.h.b16 %v245
        %v321 = vunpack.c.l.b16 %v246
        %v322 = vunpack.c.h.b16 %v246
        %v323 = vunpack.c.l.b16 %v247
        %v324 = vunpack.c.h.b16 %v247
        %v325 = vunpack.c.l.b16 %v248
        %v326 = vunpack.c.h.b16 %v248
        %v327 = vunpack.c.l.b16 %v249
        %v328 = vunpack.c.h.b16 %v249
        %v329 = vunpack.c.l.b16 %v250
        %v330 = vunpack.c.h.b16 %v250
        %v331 = vunpack.c.l.b16 %v251
        %v332 = vunpack.c.h.b16 %v251
        %v333 = vunpack.c.l.b16 %v252
        %v334 = vunpack.c.h.b16 %v252
        %v335 = vunpack.c.l.b16 %v253
        %v336 = vunpack.c.h.b16 %v253
        %v337 = vunpack.c.l.b16 %v254
        %v338 = vunpack.c.h.b16 %v254
        %v339 = vunpack.c.l.b16 %v255
        %v340 = vunpack.c.h.b16 %v255
        %v341 = vunpack.c.l.b16 %v256
        %v342 = vunpack.c.h.b16 %v256
        %v343 = vunpack.c.l.b16 %v257
        %v344 = vunpack.c.h.b16 %v257
        %v345 = vunpack.c.l.b16 %v258
        %v346 = vunpack.c.h.b16 %v258
        %v347 = vunpack.c.l.b16 %v259
        %v348 = vunpack.c.h.b16 %v259
        %v349 = vpack.c.b16 %v309, %v301
        %v350 = vpack.c.b16 %v310, %v302
        %v351 = vpack.c.b16 %v311, %v303
        %v352 = vpack.c.b16 %v312, %v304
        %v353 = vpack.c.b16 %v313, %v305
        %v354 = vpack.c.b16 %v314, %v306
        %v355 = vpack.c.b16 %v315, %v307
        %v356 = vpack.c.b16 %v316, %v308
        %v357 = vpack.c.b16 %v325, %v317
        %v358 = vpack.c.b16 %v326, %v318
        %v359 = vpack.c.b16 %v327, %v319
        %v360 = vpack.c.b16 %v328, %v320
        %v361 = vpack.c.b16 %v329, %v321
        %v362 = vpack.c.b16 %v330, %v322
        %v363 = vpack.c.b16 %v331, %v323
        %v364 = vpack.c.b16 %v332, %v324
        %v365 = vpack.c.b16 %v341, %v333
        %v366 = vpack.c.b16 %v342, %v334
        %v367 = vpack.c.b16 %v343, %v335
        %v368 = vpack.c.b16 %v344, %v336
        %v369 = vpack.c.b16 %v345, %v337
        %v370 = vpack.c.b16 %v346, %v338
        %v371 = vpack.c.b16 %v347, %v339
        %v372 = vpack.c.b16 %v348, %v340
        %vm397 = vcmask 392192
        %v399 = vsel %vm397, %v276, 0
        %401 = vmatprep.subr.bf16.mxu0 0
        %402 = vmatpush1.bf16.msra.mxu0 0
        %403 = vmatprep.subr.bf16.mxu0 0
        %404 = vmatpush1.bf16.msra.mxu0 0
        %405 = vmatprep.subr.bf16.mxu0 0
        %406 = vmatpush1.bf16.msra.mxu0 0
        %407 = vmatprep.subr.bf16.mxu0 0
        %408 = vmatpush1.bf16.msra.mxu0 0
        %409 = vmatprep.subr.bf16.mxu0 0
        %410 = vmatpush1.bf16.msra.mxu0 0
        %411 = vmatprep.subr.bf16.mxu0 %v366
        %412 = vmatpush1.bf16.msra.mxu0 %v365
        %413 = vmatprep.subr.bf16.mxu0 %v358
        %414 = vmatpush1.bf16.msra.mxu0 %v357
        %415 = vmatprep.subr.bf16.mxu0 %v350
        %416 = vmatpush1.bf16.msra.mxu0 %v349
        %417 = vmatprep.subr.bf16.mxu0 0
        %418 = vmatpush2.bf16.msra.mxu0 0
        %419 = vmatprep.subr.bf16.mxu0 0
        %420 = vmatpush2.bf16.msra.mxu0 0
        %421 = vmatprep.subr.bf16.mxu0 0
        %422 = vmatpush2.bf16.msra.mxu0 0
        %423 = vmatprep.subr.bf16.mxu0 0
        %424 = vmatpush2.bf16.msra.mxu0 0
        %425 = vmatprep.subr.bf16.mxu0 0
        %426 = vmatpush2.bf16.msra.mxu0 0
        %427 = vmatprep.subr.bf16.mxu0 0
        %428 = vmatpush2.bf16.msra.mxu0 0
        %429 = vmatprep.subr.bf16.mxu0 0
        %430 = vmatpush2.bf16.msra.mxu0 0
        %431 = vmatprep.subr.bf16.mxu0 0
        %432 = vmatpush2.bf16.msra.mxu0 0
        %433 = vmatprep.mubr.bf16.mxu0 0
        %434 = vmatmul.mubr.bf16.gmra.mxu0 %v399
        %v435 = vpop.f32.mrf.mxu0
        %v436 = vadd.f32 %v265, %v435
        %v437 = vpop.f32.mrf.mxu0
        %v438 = vadd.f32 %v265, %v437
        %v439 = vpop.f32.mrf.mxu0
        %v440 = vadd.f32 %v270, %v439
        %v441 = vpop.f32.mrf.mxu0
        %v442 = vadd.f32 %v270, %v441
        %443 = vdwg.mxu0
        %444 = vmatprep.subr.bf16.mxu0 0
        %445 = vmatpush1.bf16.msra.mxu0 0
        %446 = vmatprep.subr.bf16.mxu0 0
        %447 = vmatpush1.bf16.msra.mxu0 0
        %448 = vmatprep.subr.bf16.mxu0 0
        %449 = vmatpush1.bf16.msra.mxu0 0
        %450 = vmatprep.subr.bf16.mxu0 0
        %451 = vmatpush1.bf16.msra.mxu0 0
        %452 = vmatprep.subr.bf16.mxu0 0
        %453 = vmatpush1.bf16.msra.mxu0 0
        %454 = vmatprep.subr.bf16.mxu0 %v368
        %455 = vmatpush1.bf16.msra.mxu0 %v367
        %456 = vmatprep.subr.bf16.mxu0 %v360
        %457 = vmatpush1.bf16.msra.mxu0 %v359
        %458 = vmatprep.subr.bf16.mxu0 %v352
        %459 = vmatpush1.bf16.msra.mxu0 %v351
        %460 = vmatprep.subr.bf16.mxu0 0
        %461 = vmatpush2.bf16.msra.mxu0 0
        %462 = vmatprep.subr.bf16.mxu0 0
        %463 = vmatpush2.bf16.msra.mxu0 0
        %464 = vmatprep.subr.bf16.mxu0 0
        %465 = vmatpush2.bf16.msra.mxu0 0
        %466 = vmatprep.subr.bf16.mxu0 0
        %467 = vmatpush2.bf16.msra.mxu0 0
        %468 = vmatprep.subr.bf16.mxu0 0
        %469 = vmatpush2.bf16.msra.mxu0 0
        %470 = vmatprep.subr.bf16.mxu0 0
        %471 = vmatpush2.bf16.msra.mxu0 0
        %472 = vmatprep.subr.bf16.mxu0 0
        %473 = vmatpush2.bf16.msra.mxu0 0
        %474 = vmatprep.subr.bf16.mxu0 0
        %475 = vmatpush2.bf16.msra.mxu0 0
        %476 = vmatprep.mubr.bf16.mxu0 0
        %477 = vmatmul.mubr.bf16.gmra.mxu0 %v399
        %v478 = vpop.f32.mrf.mxu0
        %v479 = vadd.f32 %v265, %v478
        %v480 = vpop.f32.mrf.mxu0
        %v481 = vadd.f32 %v265, %v480
        %v482 = vpop.f32.mrf.mxu0
        %v483 = vadd.f32 %v270, %v482
        %v484 = vpop.f32.mrf.mxu0
        %v485 = vadd.f32 %v270, %v484
        %486 = vdwg.mxu0
        %487 = vmatprep.subr.bf16.mxu0 0
        %488 = vmatpush1.bf16.msra.mxu0 0
        %489 = vmatprep.subr.bf16.mxu0 0
        %490 = vmatpush1.bf16.msra.mxu0 0
        %491 = vmatprep.subr.bf16.mxu0 0
        %492 = vmatpush1.bf16.msra.mxu0 0
        %493 = vmatprep.subr.bf16.mxu0 0
        %494 = vmatpush1.bf16.msra.mxu0 0
        %495 = vmatprep.subr.bf16.mxu0 0
        %496 = vmatpush1.bf16.msra.mxu0 0
        %497 = vmatprep.subr.bf16.mxu0 %v370
        %498 = vmatpush1.bf16.msra.mxu0 %v369
        %499 = vmatprep.subr.bf16.mxu0 %v362
        %500 = vmatpush1.bf16.msra.mxu0 %v361
        %501 = vmatprep.subr.bf16.mxu0 %v354
        %502 = vmatpush1.bf16.msra.mxu0 %v353
        %503 = vmatprep.subr.bf16.mxu0 0
        %504 = vmatpush2.bf16.msra.mxu0 0
        %505 = vmatprep.subr.bf16.mxu0 0
        %506 = vmatpush2.bf16.msra.mxu0 0
        %507 = vmatprep.subr.bf16.mxu0 0
        %508 = vmatpush2.bf16.msra.mxu0 0
        %509 = vmatprep.subr.bf16.mxu0 0
        %510 = vmatpush2.bf16.msra.mxu0 0
        %511 = vmatprep.subr.bf16.mxu0 0
        %512 = vmatpush2.bf16.msra.mxu0 0
        %513 = vmatprep.subr.bf16.mxu0 0
        %514 = vmatpush2.bf16.msra.mxu0 0
        %515 = vmatprep.subr.bf16.mxu0 0
        %516 = vmatpush2.bf16.msra.mxu0 0
        %517 = vmatprep.subr.bf16.mxu0 0
        %518 = vmatpush2.bf16.msra.mxu0 0
        %519 = vmatprep.mubr.bf16.mxu0 0
        %520 = vmatmul.mubr.bf16.gmra.mxu0 %v399
        %v521 = vpop.f32.mrf.mxu0
        %v522 = vadd.f32 %v265, %v521
        %v523 = vpop.f32.mrf.mxu0
        %v524 = vadd.f32 %v265, %v523
        %v525 = vpop.f32.mrf.mxu0
        %v526 = vadd.f32 %v270, %v525
        %v527 = vpop.f32.mrf.mxu0
        %v528 = vadd.f32 %v270, %v527
        %529 = vdwg.mxu0
        %530 = vmatprep.subr.bf16.mxu0 0
        %531 = vmatpush1.bf16.msra.mxu0 0
        %532 = vmatprep.subr.bf16.mxu0 0
        %533 = vmatpush1.bf16.msra.mxu0 0
        %534 = vmatprep.subr.bf16.mxu0 0
        %535 = vmatpush1.bf16.msra.mxu0 0
        %536 = vmatprep.subr.bf16.mxu0 0
        %537 = vmatpush1.bf16.msra.mxu0 0
        %538 = vmatprep.subr.bf16.mxu0 0
        %539 = vmatpush1.bf16.msra.mxu0 0
        %540 = vmatprep.subr.bf16.mxu0 %v372
        %541 = vmatpush1.bf16.msra.mxu0 %v371
        %542 = vmatprep.subr.bf16.mxu0 %v364
        %543 = vmatpush1.bf16.msra.mxu0 %v363
        %544 = vmatprep.subr.bf16.mxu0 %v356
        %545 = vmatpush1.bf16.msra.mxu0 %v355
        %546 = vmatprep.subr.bf16.mxu0 0
        %547 = vmatpush2.bf16.msra.mxu0 0
        %548 = vmatprep.subr.bf16.mxu0 0
        %549 = vmatpush2.bf16.msra.mxu0 0
        %550 = vmatprep.subr.bf16.mxu0 0
        %551 = vmatpush2.bf16.msra.mxu0 0
        %552 = vmatprep.subr.bf16.mxu0 0
        %553 = vmatpush2.bf16.msra.mxu0 0
        %554 = vmatprep.subr.bf16.mxu0 0
        %555 = vmatpush2.bf16.msra.mxu0 0
        %556 = vmatprep.subr.bf16.mxu0 0
        %557 = vmatpush2.bf16.msra.mxu0 0
        %558 = vmatprep.subr.bf16.mxu0 0
        %559 = vmatpush2.bf16.msra.mxu0 0
        %560 = vmatprep.subr.bf16.mxu0 0
        %561 = vmatpush2.bf16.msra.mxu0 0
        %562 = vmatprep.mubr.bf16.mxu0 0
        %563 = vmatmul.mubr.bf16.gmra.mxu0 %v399
        %v564 = vpop.f32.mrf.mxu0
        %v565 = vadd.f32 %v265, %v564
        %v566 = vpop.f32.mrf.mxu0
        %v567 = vadd.f32 %v265, %v566
        %v568 = vpop.f32.mrf.mxu0
        %v569 = vadd.f32 %v270, %v568
        %v570 = vpop.f32.mrf.mxu0
        %v571 = vadd.f32 %v270, %v570
        %572 = vdwg.mxu0
        %v573 = vmul.f32 %v436, 0.2
        %v574 = vmul.f32 %v438, 0.2
        %v575 = vmul.f32 %v479, 0.2
        %v576 = vmul.f32 %v481, 0.2
        %v577 = vmul.f32 %v522, 0.2
        %v578 = vmul.f32 %v524, 0.2
        %v579 = vmul.f32 %v565, 0.2
        %v580 = vmul.f32 %v567, 0.2
        %v581 = vmul.f32 %v440, 0.2
        %v582 = vmul.f32 %v442, 0.2
        %v583 = vmul.f32 %v483, 0.2
        %v584 = vmul.f32 %v485, 0.2
        %v585 = vmul.f32 %v526, 0.2
        %v586 = vmul.f32 %v528, 0.2
        %v587 = vmul.f32 %v569, 0.2
        %v588 = vmul.f32 %v571, 0.2
        %v589 = vmax.f32 %v436, %v573
        %v590 = vmax.f32 %v438, %v574
        %v591 = vmax.f32 %v479, %v575
        %v592 = vmax.f32 %v481, %v576
        %v593 = vmax.f32 %v522, %v577
        %v594 = vmax.f32 %v524, %v578
        %v595 = vmax.f32 %v565, %v579
        %v596 = vmax.f32 %v567, %v580
        %v597 = vmax.f32 %v440, %v581
        %v598 = vmax.f32 %v442, %v582
        %v599 = vmax.f32 %v483, %v583
        %v600 = vmax.f32 %v485, %v584
        %v601 = vmax.f32 %v526, %v585
        %v602 = vmax.f32 %v528, %v586
        %v603 = vmax.f32 %v569, %v587
        %v604 = vmax.f32 %v571, %v588
        %v605 = vpack.c.bf16 %v597, %v589
        %v606 = vpack.c.bf16 %v598, %v590
        %v607 = vpack.c.bf16 %v599, %v591
        %v608 = vpack.c.bf16 %v600, %v592
        %v609 = vpack.c.bf16 %v601, %v593
        %v610 = vpack.c.bf16 %v602, %v594
        %v611 = vpack.c.bf16 %v603, %v595
        %v612 = vpack.c.bf16 %v604, %v596
        %v621 = vunpack.c.l.b16 %v605
        %v622 = vunpack.c.l.b16 %v606
        %v623 = vunpack.c.l.b16 %v607
        %v624 = vunpack.c.l.b16 %v608
        %v625 = vunpack.c.l.b16 %v609
        %v626 = vunpack.c.l.b16 %v610
        %v627 = vunpack.c.l.b16 %v611
        %v628 = vunpack.c.l.b16 %v612
        %v629 = vunpack.c.h.b16 %v605
        %v630 = vunpack.c.h.b16 %v606
        %v631 = vunpack.c.h.b16 %v607
        %v632 = vunpack.c.h.b16 %v608
        %v633 = vunpack.c.h.b16 %v609
        %v634 = vunpack.c.h.b16 %v610
        %v635 = vunpack.c.h.b16 %v611
        %v636 = vunpack.c.h.b16 %v612
        %v637 = vpack.c.b16 %v622, %v621
        %v638 = vpack.c.b16 %v624, %v623
        %v639 = vpack.c.b16 %v626, %v625
        %v640 = vpack.c.b16 %v628, %v627
        %v641 = vpack.c.b16 %v630, %v629
        %v642 = vpack.c.b16 %v632, %v631
        %v643 = vpack.c.b16 %v634, %v633
        %v644 = vpack.c.b16 %v636, %v635
        %653 = vst [vmem:[%s230] sm:$0xff] %v637
        %654 = vst [vmem:[%s230 + $0x8] sm:$0xff] %v638
        %655 = vst [vmem:[%s230 + $0x10] sm:$0xff] %v639
        %656 = vst [vmem:[%s230 + $0x18] sm:$0xff] %v640
        %657 = vst [vmem:[%s230 + $0x20] sm:$0xff] %v641
        %658 = vst [vmem:[%s230 + $0x28] sm:$0xff] %v642
        %659 = vst [vmem:[%s230 + $0x30] sm:$0xff] %v643
        %660 = vst [vmem:[%s230 + $0x38] sm:$0xff] %v644
        %s661 = sand.u32 %s90, 1
        %s662 = sand.u32 %s90, 1
        %s663 = smul.addr %s662, 64
        %s664 = scalar_lea.vmem [#allocation3], %s663
        // Predicated region
        $region56: #{discriminator_forward.4} parent=50 // pred_check
          %p665 = pneg %p100
        $region57: #{discriminator_forward.4} parent=50 // pred_check_branch
          %667 = sbr.rel (%p665) target = $region59
        $region58: #{discriminator_forward.4} parent=50 // pred_region
          %s668 = smul.u32 8, %s14
          %s669 = smul.addr %s668, 4
          %s670 = scalar_lea.vmem %s3, %s669
          // Predicated region
          $region60: #{discriminator_forward.4} parent=58 // pred_check
            _
          $region61: #{discriminator_forward.4} parent=58 // pred_check_branch
            %672 = sbr.rel (0) target = $region63
          $region62: #{discriminator_forward.4} parent=58 // pred_region
            // Predicated region
            $region64: #{discriminator_forward.4} parent=62 // pred_check
              _
            $region65: #{discriminator_forward.4} parent=62 // pred_check_branch
              %674 = sbr.rel (0) target = $region67
            $region66: #{discriminator_forward.4} parent=62 // pred_region
              loop: start=0, step=1, limit=1
              $region68: #{discriminator_forward.4} parent=66 // loop_pre_header
                _
              $region69: #{discriminator_forward.4} parent=66 // loop_header
                %s676 = sphi 0, %s680
                %p677 = scmp.ge.s32.totalorder %s676, 1
                %s681 = sphi %s664, %s664
                %s682 = sphi %s670, %s670
              $region70: #{discriminator_forward.4} parent=66 // loop_header_branch
                %679 = sbr.rel (%p677) target = $region74
              $region71: #{discriminator_forward.4} parent=66 // loop_body
                %v683 = vld [vmem:[%s681] sm:$0xff]
                %684 = vst [vmem:[%s682] sm:$0xff] %v683
                %v685 = vld [vmem:[%s681 + $0x8] sm:$0xff]
                %686 = vst [vmem:[%s682 + $0x8] sm:$0xff] %v685
                %v687 = vld [vmem:[%s681 + $0x10] sm:$0xff]
                %688 = vst [vmem:[%s682 + $0x10] sm:$0xff] %v687
                %v689 = vld [vmem:[%s681 + $0x18] sm:$0xff]
                %690 = vst [vmem:[%s682 + $0x18] sm:$0xff] %v689
                %v691 = vld [vmem:[%s681 + $0x20] sm:$0xff]
                %692 = vst [vmem:[%s682 + $0x40] sm:$0xff] %v691
                %v693 = vld [vmem:[%s681 + $0x28] sm:$0xff]
                %694 = vst [vmem:[%s682 + $0x48] sm:$0xff] %v693
                %v695 = vld [vmem:[%s681 + $0x30] sm:$0xff]
                %696 = vst [vmem:[%s682 + $0x50] sm:$0xff] %v695
                %v697 = vld [vmem:[%s681 + $0x38] sm:$0xff]
                %698 = vst [vmem:[%s682 + $0x58] sm:$0xff] %v697
              $region72: #{discriminator_forward.4} parent=66 // loop_footer
                %s680 = sadd.s32 1, %s676
              $region73: #{discriminator_forward.4} parent=66 // loop_footer_branch
                %675 = sbr.rel target = $region69
              $region74: #{discriminator_forward.4} parent=66 // loop_exit
                _
            $region67: #{discriminator_forward.4} parent=62 // pred_fallthru
              _
            // Predicated region
            $region75: #{discriminator_forward.4} parent=62 // pred_check
              _
            $region76: #{discriminator_forward.4} parent=62 // pred_check_branch
              %700 = sbr.rel target = $region78
            $region77: #{discriminator_forward.4} parent=62 // pred_region
              _
            $region78: #{discriminator_forward.4} parent=62 // pred_fallthru
              _
          $region63: #{discriminator_forward.4} parent=58 // pred_fallthru
            _
          %701 = vnop
        $region59: #{discriminator_forward.4} parent=50 // pred_fallthru
          _
      $region51: #{discriminator_forward.4} parent=5 // pred_fallthru
        _
      %p702 = scmp.le.s32.totalorder 2, %s9
      // Predicated region
      $region79: #{discriminator_forward.4} parent=5 // pred_check
        %p703 = pneg %p702
      $region80: #{discriminator_forward.4} parent=5 // pred_check_branch
        %705 = sbr.rel (%p703) target = $region82
      $region81: #{discriminator_forward.4} parent=5 // pred_region
        %s706 = ssub.s32 %s9, 2
        // Predicated region
        $region83: #{discriminator_forward.4} parent=81 // pred_check
          %p707 = pneg %p106
        $region84: #{discriminator_forward.4} parent=81 // pred_check_branch
          %709 = sbr.rel (%p707) target = $region86
        $region85: #{discriminator_forward.4} parent=81 // pred_region
          %s710 = sand.u32 %s91, 1
          %s711 = sand.u32 %s91, 1
          %s712 = smul.addr %s711, 64
          %s713 = scalar_lea.vmem [#allocation3], %s712
        $region86: #{discriminator_forward.4} parent=81 // pred_fallthru
          _
      $region82: #{discriminator_forward.4} parent=5 // pred_fallthru
        _
    $region6: #{discriminator_forward.4} parent=1 // loop_footer
      %s13 = sadd.s32 1, %s9
    $region7: #{discriminator_forward.4} parent=1 // loop_footer_branch
      %8 = sbr.rel target = $region3
    $region8: #{discriminator_forward.4} parent=1 // loop_exit
      _

// kernel: discriminator_forward.5
$region0: #{discriminator_forward.5}
  #allocation0 [shape = 'u32[]', space=smem, size = 0x4, offset = 0x4, fixed_abs, tag = 'smem constant byte address 0x4 - core index']
  #allocation1 [shape = 'u32[144,128]{1,0:T(1,128)}', space=vmem, size = 0x12000, scoped, tag = 'internal scratch']
  %s0 = inlined_call_operand.vmem [shape: bf16[32,256], index: 0, kind: input, shape index: {}]
  %s1 = inlined_call_operand.vmem [shape: bf16[256,512], index: 1, kind: input, shape index: {}]
  %s2 = inlined_call_operand.vmem [shape: f32[32,1], index: 2, kind: input, shape index: {}]
  %s3 = inlined_call_operand.vmem [shape: bf16[32,512], index: 3, kind: output, shape index: {}]
  %s4 = sld [smem:[#allocation0]]
  $region117: #{discriminator_forward.5} parent=0
    _
  %s6 = ssub.s32 1, %s4
  %s7 = scalar_select 0, %s6, %s4
  $region1: #{discriminator_forward.5} parent=0
    #allocation2 [shape = 'u8[262144]{0}', space=vmem, size = 0x40000, scoped, tag = 'input window, operand 1']
    #allocation3 [shape = 'u8[32768]{0}', space=vmem, size = 0x8000, scoped, tag = 'output window, operand 0']
    loop: start=0, step=1, limit=4
    $region2: #{discriminator_forward.5} parent=1 // loop_pre_header
      _
    $region3: #{discriminator_forward.5} parent=1 // loop_header
      %s9 = sphi 0, %s13
      %p10 = scmp.ge.s32.totalorder %s9, 4
      %s17 = sphi 0, %s17
      %s19 = sphi 0, %s17
      %s20 = sphi 0, %s19
      %s34 = sphi 0, %s20
      %s40 = sphi 0, %s42
      %s43 = sphi 0, %s40
      %s44 = sphi 0, %s43
      %s60 = sphi 0, %s44
      %s64 = sphi 0, %s64
      %s66 = sphi 0, %s64
      %s67 = sphi 0, %s66
      %s81 = sphi 0, %s67
      %s87 = sphi 0, %s89
      %s90 = sphi 0, %s87
      %s91 = sphi 0, %s90
      %s107 = sphi 0, %s91
    $region4: #{discriminator_forward.5} parent=1 // loop_header_branch
      %12 = sbr.rel (%p10) target = $region8
    $region5: #{discriminator_forward.5} parent=1 // loop_body
      %s14 = ssub.s32 %s9, 1
      %s15 = ssub.s32 %s9, 2
      %s16 = sadd.s32 %s9, 1
      %s18 = sadd.s32 %s17, 1
      %p21 = scmp.eq.s32.totalorder %s9, 1
      %p22 = scmp.ne.s32.totalorder %s17, %s19
      %p23 = scmp.eq.s32.totalorder %s9, 0
      %p24 = por %p22, %p23
      %p25 = scmp.ne.s32.totalorder %s17, %s19
      %p26 = scmp.eq.s32.totalorder %s14, 1
      %p27 = por %p25, %p26
      %p28 = scmp.ne.s32.totalorder %s19, %s20
      %p29 = scmp.eq.s32.totalorder %s14, 0
      %p30 = por %p28, %p29
      %p31 = scmp.ne.s32.totalorder %s19, %s20
      %p32 = scmp.eq.s32.totalorder %s15, 1
      %p33 = por %p31, %p32
      %p35 = scmp.ne.s32.totalorder %s20, %s34
      %p36 = scmp.eq.s32.totalorder %s15, 0
      %p37 = por %p35, %p36
      %s38 = ssub.s32 %s9, %s16
      %p39 = scmp.eq.s32.totalorder %s38, 0
      %s41 = sadd.s32 %s40, 1
      %s42 = scalar_select %p39, %s40, %s41
      %p45 = pneg %p39
      %p46 = scmp.eq.s32.totalorder %s9, 1
      %p47 = por %p45, %p46
      %p48 = scmp.ne.s32.totalorder %s40, %s43
      %p49 = scmp.eq.s32.totalorder %s9, 0
      %p50 = por %p48, %p49
      %p51 = scmp.ne.s32.totalorder %s40, %s43
      %p52 = scmp.eq.s32.totalorder %s14, 1
      %p53 = por %p51, %p52
      %p54 = scmp.ne.s32.totalorder %s43, %s44
      %p55 = scmp.eq.s32.totalorder %s14, 0
      %p56 = por %p54, %p55
      %p57 = scmp.ne.s32.totalorder %s43, %s44
      %p58 = scmp.eq.s32.totalorder %s15, 1
      %p59 = por %p57, %p58
      %p61 = scmp.ne.s32.totalorder %s44, %s60
      %p62 = scmp.eq.s32.totalorder %s15, 0
      %p63 = por %p61, %p62
      %s65 = sadd.s32 %s64, 1
      %p68 = scmp.eq.s32.totalorder %s9, 1
      %p69 = scmp.ne.s32.totalorder %s64, %s66
      %p70 = scmp.eq.s32.totalorder %s9, 0
      %p71 = por %p69, %p70
      %p72 = scmp.ne.s32.totalorder %s64, %s66
      %p73 = scmp.eq.s32.totalorder %s14, 1
      %p74 = por %p72, %p73
      %p75 = scmp.ne.s32.totalorder %s66, %s67
      %p76 = scmp.eq.s32.totalorder %s14, 0
      %p77 = por %p75, %p76
      %p78 = scmp.ne.s32.totalorder %s66, %s67
      %p79 = scmp.eq.s32.totalorder %s15, 1
      %p80 = por %p78, %p79
      %p82 = scmp.ne.s32.totalorder %s67, %s81
      %p83 = scmp.eq.s32.totalorder %s15, 0
      %p84 = por %p82, %p83
      %s85 = ssub.s32 %s9, %s16
      %p86 = scmp.eq.s32.totalorder %s85, 0
      %s88 = sadd.s32 %s87, 1
      %s89 = scalar_select %p86, %s87, %s88
      %p92 = pneg %p86
      %p93 = scmp.eq.s32.totalorder %s9, 1
      %p94 = por %p92, %p93
      %p95 = scmp.ne.s32.totalorder %s87, %s90
      %p96 = scmp.eq.s32.totalorder %s9, 0
      %p97 = por %p95, %p96
      %p98 = scmp.ne.s32.totalorder %s87, %s90
      %p99 = scmp.eq.s32.totalorder %s14, 1
      %p100 = por %p98, %p99
      %p101 = scmp.ne.s32.totalorder %s90, %s91
      %p102 = scmp.eq.s32.totalorder %s14, 0
      %p103 = por %p101, %p102
      %p104 = scmp.ne.s32.totalorder %s90, %s91
      %p105 = scmp.eq.s32.totalorder %s15, 1
      %p106 = por %p104, %p105
      %p108 = scmp.ne.s32.totalorder %s91, %s107
      %p109 = scmp.eq.s32.totalorder %s15, 0
      %p110 = por %p108, %p109
      %p111 = scmp.le.s32.totalorder 1, %s9
      %p112 = scmp.lt.s32.totalorder %s9, 3
      %p113 = pnand %p111, %p112
      %p114 = pneg %p113
      // Predicated region
      $region9: #{discriminator_forward.5} parent=5 // pred_check
        _
      $region10: #{discriminator_forward.5} parent=5 // pred_check_branch
        %116 = sbr.rel (%p113) target = $region12
      $region11: #{discriminator_forward.5} parent=5 // pred_region
        %s117 = ssub.s32 %s9, 1
        // Predicated region
        $region13: #{discriminator_forward.5} parent=11 // pred_check
          %p118 = pneg %p30
        $region14: #{discriminator_forward.5} parent=11 // pred_check_branch
          %120 = sbr.rel (%p118) target = $region16
        $region15: #{discriminator_forward.5} parent=11 // pred_region
          _
        $region16: #{discriminator_forward.5} parent=11 // pred_fallthru
          _
        // Predicated region
        $region17: #{discriminator_forward.5} parent=11 // pred_check
          %p121 = pneg %p77
        $region18: #{discriminator_forward.5} parent=11 // pred_check_branch
          %123 = sbr.rel (%p121) target = $region20
        $region19: #{discriminator_forward.5} parent=11 // pred_region
          _
        $region20: #{discriminator_forward.5} parent=11 // pred_fallthru
          _
      $region12: #{discriminator_forward.5} parent=5 // pred_fallthru
        _
      %p124 = scmp.lt.s32.totalorder %s9, 2
      // Predicated region
      $region21: #{discriminator_forward.5} parent=5 // pred_check
        %p125 = pneg %p124
      $region22: #{discriminator_forward.5} parent=5 // pred_check_branch
        %127 = sbr.rel (%p125) target = $region24
      $region23: #{discriminator_forward.5} parent=5 // pred_region
        // Predicated region
        $region25: #{discriminator_forward.5} parent=23 // pred_check
          %p128 = pneg %p50
        $region26: #{discriminator_forward.5} parent=23 // pred_check_branch
          %130 = sbr.rel (%p128) target = $region28
        $region27: #{discriminator_forward.5} parent=23 // pred_region
          %s131 = sand.u32 %s40, 1
          %s132 = sand.u32 %s40, 1
          %s133 = smul.addr %s132, 256
          %s134 = scalar_lea.vmem [#allocation2], %s133
          %s135 = smul.u32 2, %s9
          %s136 = smul.addr %s135, 4
          %s137 = scalar_lea.vmem %s1, %s136
          // Predicated region
          $region29: #{discriminator_forward.5} parent=27 // pred_check
            _
          $region30: #{discriminator_forward.5} parent=27 // pred_check_branch
            %139 = sbr.rel (0) target = $region32
          $region31: #{discriminator_forward.5} parent=27 // pred_region
            // Predicated region
            $region33: #{discriminator_forward.5} parent=31 // pred_check
              _
            $region34: #{discriminator_forward.5} parent=31 // pred_check_branch
              %141 = sbr.rel (0) target = $region36
            $region35: #{discriminator_forward.5} parent=31 // pred_region
              // Predicated region
              $region48: #{discriminator_forward.5} parent=35 // pred_check
                _
              $region49: #{discriminator_forward.5} parent=35 // pred_check_branch
                %219 = sbr.rel (0) target = $region51
              $region50: #{discriminator_forward.5} parent=35 // pred_region
                loop: start=0, step=1, limit=1
                $region52: #{discriminator_forward.5} parent=50 // loop_pre_header
                  _
                $region53: #{discriminator_forward.5} parent=50 // loop_header
                  %s221 = sphi 0, %s225
                  %p222 = scmp.ge.s32.totalorder %s221, 1
                  %s226 = sphi %s137, %s137
                  %s227 = sphi %s134, %s134
                $region54: #{discriminator_forward.5} parent=50 // loop_header_branch
                  %224 = sbr.rel (%p222) target = $region58
                $region55: #{discriminator_forward.5} parent=50 // loop_body
                  %v228 = vld [vmem:[%s226] sm:$0xff]
                  %229 = vst [vmem:[%s227] sm:$0xff] %v228
                  %v230 = vld [vmem:[%s226 + $0x10] sm:$0xff]
                  %231 = vst [vmem:[%s227 + $0x8] sm:$0xff] %v230
                  %v232 = vld [vmem:[%s226 + $0x20] sm:$0xff]
                  %233 = vst [vmem:[%s227 + $0x10] sm:$0xff] %v232
                  %v234 = vld [vmem:[%s226 + $0x30] sm:$0xff]
                  %235 = vst [vmem:[%s227 + $0x18] sm:$0xff] %v234
                  %v236 = vld [vmem:[%s226 + $0x40] sm:$0xff]
                  %237 = vst [vmem:[%s227 + $0x20] sm:$0xff] %v236
                  %v238 = vld [vmem:[%s226 + $0x50] sm:$0xff]
                  %239 = vst [vmem:[%s227 + $0x28] sm:$0xff] %v238
                  %v240 = vld [vmem:[%s226 + $0x60] sm:$0xff]
                  %241 = vst [vmem:[%s227 + $0x30] sm:$0xff] %v240
                  %v242 = vld [vmem:[%s226 + $0x70] sm:$0xff]
                  %243 = vst [vmem:[%s227 + $0x38] sm:$0xff] %v242
                  %v244 = vld [vmem:[%s226 + $0x80] sm:$0xff]
                  %245 = vst [vmem:[%s227 + $0x40] sm:$0xff] %v244
                  %v246 = vld [vmem:[%s226 + $0x90] sm:$0xff]
                  %247 = vst [vmem:[%s227 + $0x48] sm:$0xff] %v246
                  %v248 = vld [vmem:[%s226 + $0xa0] sm:$0xff]
                  %249 = vst [vmem:[%s227 + $0x50] sm:$0xff] %v248
                  %v250 = vld [vmem:[%s226 + $0xb0] sm:$0xff]
                  %251 = vst [vmem:[%s227 + $0x58] sm:$0xff] %v250
                  %v252 = vld [vmem:[%s226 + $0xc0] sm:$0xff]
                  %253 = vst [vmem:[%s227 + $0x60] sm:$0xff] %v252
                  %v254 = vld [vmem:[%s226 + $0xd0] sm:$0xff]
                  %255 = vst [vmem:[%s227 + $0x68] sm:$0xff] %v254
                  %v256 = vld [vmem:[%s226 + $0xe0] sm:$0xff]
                  %257 = vst [vmem:[%s227 + $0x70] sm:$0xff] %v256
                  %v258 = vld [vmem:[%s226 + $0xf0] sm:$0xff]
                  %259 = vst [vmem:[%s227 + $0x78] sm:$0xff] %v258
                  %v260 = vld [vmem:[%s226 + $0x100] sm:$0xff]
                  %261 = vst [vmem:[%s227 + $0x80] sm:$0xff] %v260
                  %v262 = vld [vmem:[%s226 + $0x110] sm:$0xff]
                  %263 = vst [vmem:[%s227 + $0x88] sm:$0xff] %v262
                  %v264 = vld [vmem:[%s226 + $0x120] sm:$0xff]
                  %265 = vst [vmem:[%s227 + $0x90] sm:$0xff] %v264
                  %v266 = vld [vmem:[%s226 + $0x130] sm:$0xff]
                  %267 = vst [vmem:[%s227 + $0x98] sm:$0xff] %v266
                  %v268 = vld [vmem:[%s226 + $0x140] sm:$0xff]
                  %269 = vst [vmem:[%s227 + $0xa0] sm:$0xff] %v268
                  %v270 = vld [vmem:[%s226 + $0x150] sm:$0xff]
                  %271 = vst [vmem:[%s227 + $0xa8] sm:$0xff] %v270
                  %v272 = vld [vmem:[%s226 + $0x160] sm:$0xff]
                  %273 = vst [vmem:[%s227 + $0xb0] sm:$0xff] %v272
                  %v274 = vld [vmem:[%s226 + $0x170] sm:$0xff]
                  %275 = vst [vmem:[%s227 + $0xb8] sm:$0xff] %v274
                  %v276 = vld [vmem:[%s226 + $0x180] sm:$0xff]
                  %277 = vst [vmem:[%s227 + $0xc0] sm:$0xff] %v276
                  %v278 = vld [vmem:[%s226 + $0x190] sm:$0xff]
                  %279 = vst [vmem:[%s227 + $0xc8] sm:$0xff] %v278
                  %v280 = vld [vmem:[%s226 + $0x1a0] sm:$0xff]
                  %281 = vst [vmem:[%s227 + $0xd0] sm:$0xff] %v280
                  %v282 = vld [vmem:[%s226 + $0x1b0] sm:$0xff]
                  %283 = vst [vmem:[%s227 + $0xd8] sm:$0xff] %v282
                  %v284 = vld [vmem:[%s226 + $0x1c0] sm:$0xff]
                  %285 = vst [vmem:[%s227 + $0xe0] sm:$0xff] %v284
                  %v286 = vld [vmem:[%s226 + $0x1d0] sm:$0xff]
                  %287 = vst [vmem:[%s227 + $0xe8] sm:$0xff] %v286
                  %v288 = vld [vmem:[%s226 + $0x1e0] sm:$0xff]
                  %289 = vst [vmem:[%s227 + $0xf0] sm:$0xff] %v288
                  %v290 = vld [vmem:[%s226 + $0x1f0] sm:$0xff]
                  %291 = vst [vmem:[%s227 + $0xf8] sm:$0xff] %v290
                $region56: #{discriminator_forward.5} parent=50 // loop_footer
                  %s225 = sadd.s32 1, %s221
                $region57: #{discriminator_forward.5} parent=50 // loop_footer_branch
                  %220 = sbr.rel target = $region53
                $region58: #{discriminator_forward.5} parent=50 // loop_exit
                  _
              $region51: #{discriminator_forward.5} parent=35 // pred_fallthru
                _
              // Predicated region
              $region59: #{discriminator_forward.5} parent=35 // pred_check
                _
              $region60: #{discriminator_forward.5} parent=35 // pred_check_branch
                %293 = sbr.rel target = $region62
              $region61: #{discriminator_forward.5} parent=35 // pred_region
                _
              $region62: #{discriminator_forward.5} parent=35 // pred_fallthru
                _
            $region36: #{discriminator_forward.5} parent=31 // pred_fallthru
              _
            // Predicated region
            $region37: #{discriminator_forward.5} parent=31 // pred_check
              _
            $region38: #{discriminator_forward.5} parent=31 // pred_check_branch
              %143 = sbr.rel target = $region40
            $region39: #{discriminator_forward.5} parent=31 // pred_region
              %s145 = ssub.s32 256, 1
              loop: start=0, step=1, limit=1
              $region41: #{discriminator_forward.5} parent=39 // loop_pre_header
                _
              $region42: #{discriminator_forward.5} parent=39 // loop_header
                %s147 = sphi 0, %s151
                %p148 = scmp.ge.s32.totalorder %s147, 1
                %s152 = sphi %s137, %s137
                %s153 = sphi %s134, %s134
              $region43: #{discriminator_forward.5} parent=39 // loop_header_branch
                %150 = sbr.rel (%p148) target = $region47
              $region44: #{discriminator_forward.5} parent=39 // loop_body
                %v154 = vld [vmem:[%s152] sm:%s145]
                %155 = vst [vmem:[%s153] sm:%s145] %v154
                %v156 = vld [vmem:[%s152 + $0x10] sm:%s145]
                %157 = vst [vmem:[%s153 + $0x8] sm:%s145] %v156
                %v158 = vld [vmem:[%s152 + $0x20] sm:%s145]
                %159 = vst [vmem:[%s153 + $0x10] sm:%s145] %v158
                %v160 = vld [vmem:[%s152 + $0x30] sm:%s145]
                %161 = vst [vmem:[%s153 + $0x18] sm:%s145] %v160
                %v162 = vld [vmem:[%s152 + $0x40] sm:%s145]
                %163 = vst [vmem:[%s153 + $0x20] sm:%s145] %v162
                %v164 = vld [vmem:[%s152 + $0x50] sm:%s145]
                %165 = vst [vmem:[%s153 + $0x28] sm:%s145] %v164
                %v166 = vld [vmem:[%s152 + $0x60] sm:%s145]
                %167 = vst [vmem:[%s153 + $0x30] sm:%s145] %v166
                %v168 = vld [vmem:[%s152 + $0x70] sm:%s145]
                %169 = vst [vmem:[%s153 + $0x38] sm:%s145] %v168
                %v170 = vld [vmem:[%s152 + $0x80] sm:%s145]
                %171 = vst [vmem:[%s153 + $0x40] sm:%s145] %v170
                %v172 = vld [vmem:[%s152 + $0x90] sm:%s145]
                %173 = vst [vmem:[%s153 + $0x48] sm:%s145] %v172
                %v174 = vld [vmem:[%s152 + $0xa0] sm:%s145]
                %175 = vst [vmem:[%s153 + $0x50] sm:%s145] %v174
                %v176 = vld [vmem:[%s152 + $0xb0] sm:%s145]
                %177 = vst [vmem:[%s153 + $0x58] sm:%s145] %v176
                %v178 = vld [vmem:[%s152 + $0xc0] sm:%s145]
                %179 = vst [vmem:[%s153 + $0x60] sm:%s145] %v178
                %v180 = vld [vmem:[%s152 + $0xd0] sm:%s145]
                %181 = vst [vmem:[%s153 + $0x68] sm:%s145] %v180
                %v182 = vld [vmem:[%s152 + $0xe0] sm:%s145]
                %183 = vst [vmem:[%s153 + $0x70] sm:%s145] %v182
                %v184 = vld [vmem:[%s152 + $0xf0] sm:%s145]
                %185 = vst [vmem:[%s153 + $0x78] sm:%s145] %v184
                %v186 = vld [vmem:[%s152 + $0x100] sm:%s145]
                %187 = vst [vmem:[%s153 + $0x80] sm:%s145] %v186
                %v188 = vld [vmem:[%s152 + $0x110] sm:%s145]
                %189 = vst [vmem:[%s153 + $0x88] sm:%s145] %v188
                %v190 = vld [vmem:[%s152 + $0x120] sm:%s145]
                %191 = vst [vmem:[%s153 + $0x90] sm:%s145] %v190
                %v192 = vld [vmem:[%s152 + $0x130] sm:%s145]
                %193 = vst [vmem:[%s153 + $0x98] sm:%s145] %v192
                %v194 = vld [vmem:[%s152 + $0x140] sm:%s145]
                %195 = vst [vmem:[%s153 + $0xa0] sm:%s145] %v194
                %v196 = vld [vmem:[%s152 + $0x150] sm:%s145]
                %197 = vst [vmem:[%s153 + $0xa8] sm:%s145] %v196
                %v198 = vld [vmem:[%s152 + $0x160] sm:%s145]
                %199 = vst [vmem:[%s153 + $0xb0] sm:%s145] %v198
                %v200 = vld [vmem:[%s152 + $0x170] sm:%s145]
                %201 = vst [vmem:[%s153 + $0xb8] sm:%s145] %v200
                %v202 = vld [vmem:[%s152 + $0x180] sm:%s145]
                %203 = vst [vmem:[%s153 + $0xc0] sm:%s145] %v202
                %v204 = vld [vmem:[%s152 + $0x190] sm:%s145]
                %205 = vst [vmem:[%s153 + $0xc8] sm:%s145] %v204
                %v206 = vld [vmem:[%s152 + $0x1a0] sm:%s145]
                %207 = vst [vmem:[%s153 + $0xd0] sm:%s145] %v206
                %v208 = vld [vmem:[%s152 + $0x1b0] sm:%s145]
                %209 = vst [vmem:[%s153 + $0xd8] sm:%s145] %v208
                %v210 = vld [vmem:[%s152 + $0x1c0] sm:%s145]
                %211 = vst [vmem:[%s153 + $0xe0] sm:%s145] %v210
                %v212 = vld [vmem:[%s152 + $0x1d0] sm:%s145]
                %213 = vst [vmem:[%s153 + $0xe8] sm:%s145] %v212
                %v214 = vld [vmem:[%s152 + $0x1e0] sm:%s145]
                %215 = vst [vmem:[%s153 + $0xf0] sm:%s145] %v214
                %v216 = vld [vmem:[%s152 + $0x1f0] sm:%s145]
                %217 = vst [vmem:[%s153 + $0xf8] sm:%s145] %v216
              $region45: #{discriminator_forward.5} parent=39 // loop_footer
                %s151 = sadd.s32 1, %s147
              $region46: #{discriminator_forward.5} parent=39 // loop_footer_branch
                %146 = sbr.rel target = $region42
              $region47: #{discriminator_forward.5} parent=39 // loop_exit
                _
            $region40: #{discriminator_forward.5} parent=31 // pred_fallthru
              _
          $region32: #{discriminator_forward.5} parent=27 // pred_fallthru
            _
          %294 = vnop
        $region28: #{discriminator_forward.5} parent=23 // pred_fallthru
          _
      $region24: #{discriminator_forward.5} parent=5 // pred_fallthru
        _
      %p295 = scmp.le.s32.totalorder 1, %s9
      %p296 = scmp.lt.s32.totalorder %s9, 3
      %p297 = pnand %p295, %p296
      %p298 = pneg %p297
      // Predicated region
      $region63: #{discriminator_forward.5} parent=5 // pred_check
        _
      $region64: #{discriminator_forward.5} parent=5 // pred_check_branch
        %300 = sbr.rel (%p297) target = $region66
      $region65: #{discriminator_forward.5} parent=5 // pred_region
        %s301 = ssub.s32 %s9, 1
        %s302 = sand.u32 %s43, 1
        %s303 = sand.u32 %s43, 1
        %s304 = smul.addr %s303, 256
        %s305 = scalar_lea.vmem [#allocation2], %s304
        // Predicated region
        $region67: #{discriminator_forward.5} parent=65 // pred_check
          %p306 = pneg %p56
        $region68: #{discriminator_forward.5} parent=65 // pred_check_branch
          %308 = sbr.rel (%p306) target = $region70
        $region69: #{discriminator_forward.5} parent=65 // pred_region
          _
        $region70: #{discriminator_forward.5} parent=65 // pred_fallthru
          _
        %p309 = pneg %p30
        %p310 = pneg %p27
        %s311 = sand.u32 %s43, 1
        %s312 = sand.u32 %s43, 1
        %s313 = smul.addr %s312, 256
        %s314 = scalar_lea.vmem [#allocation2], %s313
        %p315 = pneg %p56
        %p316 = pneg %p53
        %p317 = pneg %p77
        %p318 = pneg %p74
        %p319 = pneg %p103
        %p320 = pneg %p100
        %s321 = sand.u32 %s90, 1
        %s322 = sand.u32 %s90, 1
        %s323 = smul.addr %s322, 32
        %s324 = scalar_lea.vmem [#allocation3], %s323
        %s325 = smul.u32 2, %s14
        %s326 = smul.u32 2, %s14
        %v327 = vld [vmem:[%s0] sm:$0xff]
        %v328 = vld [vmem:[%s0 + $0x8] sm:$0xff]
        %v329 = vld [vmem:[%s0 + $0x10] sm:$0xff]
        %v330 = vld [vmem:[%s0 + $0x18] sm:$0xff]
        %v331 = vld [vmem:[%s305] sm:$0xff]
        %v332 = vld [vmem:[%s305 + $0x8] sm:$0xff]
        %v333 = vld [vmem:[%s305 + $0x10] sm:$0xff]
        %v334 = vld [vmem:[%s305 + $0x18] sm:$0xff]
        %v335 = vld [vmem:[%s305 + $0x20] sm:$0xff]
        %v336 = vld [vmem:[%s305 + $0x28] sm:$0xff]
        %v337 = vld [vmem:[%s305 + $0x30] sm:$0xff]
        %v338 = vld [vmem:[%s305 + $0x38] sm:$0xff]
        %v339 = vld [vmem:[%s305 + $0x40] sm:$0xff]
        %v340 = vld [vmem:[%s305 + $0x48] sm:$0xff]
        %v341 = vld [vmem:[%s305 + $0x50] sm:$0xff]
        %v342 = vld [vmem:[%s305 + $0x58] sm:$0xff]
        %v343 = vld [vmem:[%s305 + $0x60] sm:$0xff]
        %v344 = vld [vmem:[%s305 + $0x68] sm:$0xff]
        %v345 = vld [vmem:[%s305 + $0x70] sm:$0xff]
        %v346 = vld [vmem:[%s305 + $0x78] sm:$0xff]
        %v347 = vld [vmem:[%s305 + $0x80] sm:$0xff]
        %v348 = vld [vmem:[%s305 + $0x88] sm:$0xff]
        %v349 = vld [vmem:[%s305 + $0x90] sm:$0xff]
        %v350 = vld [vmem:[%s305 + $0x98] sm:$0xff]
        %v351 = vld [vmem:[%s305 + $0xa0] sm:$0xff]
        %v352 = vld [vmem:[%s305 + $0xa8] sm:$0xff]
        %v353 = vld [vmem:[%s305 + $0xb0] sm:$0xff]
        %v354 = vld [vmem:[%s305 + $0xb8] sm:$0xff]
        %v355 = vld [vmem:[%s305 + $0xc0] sm:$0xff]
        %v356 = vld [vmem:[%s305 + $0xc8] sm:$0xff]
        %v357 = vld [vmem:[%s305 + $0xd0] sm:$0xff]
        %v358 = vld [vmem:[%s305 + $0xd8] sm:$0xff]
        %v359 = vld [vmem:[%s305 + $0xe0] sm:$0xff]
        %v360 = vld [vmem:[%s305 + $0xe8] sm:$0xff]
        %v361 = vld [vmem:[%s305 + $0xf0] sm:$0xff]
        %v362 = vld [vmem:[%s305 + $0xf8] sm:$0xff]
        %v363 = vld [vmem:[%s2] sm:$0xff]
        %v364 = vld [vmem:[%s2 + $0x8] sm:$0xff]
        %v365 = vld [vmem:[%s2 + $0x10] sm:$0xff]
        %v366 = vld [vmem:[%s2 + $0x18] sm:$0xff]
        %368 = vset.pattern.permute.xlu0 0
        %369 = vperm.xlu0 %368, %v363
        %v370 = vpop.permute.xlu0 %369
        %373 = vset.pattern.permute.xlu0 0
        %374 = vperm.xlu0 %373, %v364
        %v375 = vpop.permute.xlu0 %374
        %378 = vset.pattern.permute.xlu0 0
        %379 = vperm.xlu0 %378, %v365
        %v380 = vpop.permute.xlu0 %379
        %383 = vset.pattern.permute.xlu0 0
        %384 = vperm.xlu0 %383, %v366
        %v385 = vpop.permute.xlu0 %384
        %v391 = vunpack.c.l.b16 %v327
        %v392 = vunpack.c.h.b16 %v327
        %v393 = vunpack.c.l.b16 %v328
        %v394 = vunpack.c.h.b16 %v328
        %v395 = vunpack.c.l.b16 %v329
        %v396 = vunpack.c.h.b16 %v329
        %v397 = vunpack.c.l.b16 %v330
        %v398 = vunpack.c.h.b16 %v330
        %v399 = vpack.c.b16 %v393, %v391
        %v400 = vpack.c.b16 %v394, %v392
        %v401 = vpack.c.b16 %v397, %v395
        %v402 = vpack.c.b16 %v398, %v396
        %v439 = vunpack.c.l.b16 %v331
        %v440 = vunpack.c.h.b16 %v331
        %v441 = vunpack.c.l.b16 %v332
        %v442 = vunpack.c.h.b16 %v332
        %v443 = vunpack.c.l.b16 %v333
        %v444 = vunpack.c.h.b16 %v333
        %v445 = vunpack.c.l.b16 %v334
        %v446 = vunpack.c.h.b16 %v334
        %v447 = vunpack.c.l.b16 %v335
        %v448 = vunpack.c.h.b16 %v335
        %v449 = vunpack.c.l.b16 %v336
        %v450 = vunpack.c.h.b16 %v336
        %v451 = vunpack.c.l.b16 %v337
        %v452 = vunpack.c.h.b16 %v337
        %v453 = vunpack.c.l.b16 %v338
        %v454 = vunpack.c.h.b16 %v338
        %v455 = vunpack.c.l.b16 %v339
        %v456 = vunpack.c.h.b16 %v339
        %v457 = vunpack.c.l.b16 %v340
        %v458 = vunpack.c.h.b16 %v340
        %v459 = vunpack.c.l.b16 %v341
        %v460 = vunpack.c.h.b16 %v341
        %v461 = vunpack.c.l.b16 %v342
        %v462 = vunpack.c.h.b16 %v342
        %v463 = vunpack.c.l.b16 %v343
        %v464 = vunpack.c.h.b16 %v343
        %v465 = vunpack.c.l.b16 %v344
        %v466 = vunpack.c.h.b16 %v344
        %v467 = vunpack.c.l.b16 %v345
        %v468 = vunpack.c.h.b16 %v345
        %v469 = vunpack.c.l.b16 %v346
        %v470 = vunpack.c.h.b16 %v346
        %v471 = vunpack.c.l.b16 %v347
        %v472 = vunpack.c.h.b16 %v347
        %v473 = vunpack.c.l.b16 %v348
        %v474 = vunpack.c.h.b16 %v348
        %v475 = vunpack.c.l.b16 %v349
        %v476 = vunpack.c.h.b16 %v349
        %v477 = vunpack.c.l.b16 %v350
        %v478 = vunpack.c.h.b16 %v350
        %v479 = vunpack.c.l.b16 %v351
        %v480 = vunpack.c.h.b16 %v351
        %v481 = vunpack.c.l.b16 %v352
        %v482 = vunpack.c.h.b16 %v352
        %v483 = vunpack.c.l.b16 %v353
        %v484 = vunpack.c.h.b16 %v353
        %v485 = vunpack.c.l.b16 %v354
        %v486 = vunpack.c.h.b16 %v354
        %v487 = vunpack.c.l.b16 %v355
        %v488 = vunpack.c.h.b16 %v355
        %v489 = vunpack.c.l.b16 %v356
        %v490 = vunpack.c.h.b16 %v356
        %v491 = vunpack.c.l.b16 %v357
        %v492 = vunpack.c.h.b16 %v357
        %v493 = vunpack.c.l.b16 %v358
        %v494 = vunpack.c.h.b16 %v358
        %v495 = vunpack.c.l.b16 %v359
        %v496 = vunpack.c.h.b16 %v359
        %v497 = vunpack.c.l.b16 %v360
        %v498 = vunpack.c.h.b16 %v360
        %v499 = vunpack.c.l.b16 %v361
        %v500 = vunpack.c.h.b16 %v361
        %v501 = vunpack.c.l.b16 %v362
        %v502 = vunpack.c.h.b16 %v362
        %v503 = vpack.c.b16 %v441, %v439
        %v504 = vpack.c.b16 %v442, %v440
        %v505 = vpack.c.b16 %v445, %v443
        %v506 = vpack.c.b16 %v446, %v444
        %v507 = vpack.c.b16 %v449, %v447
        %v508 = vpack.c.b16 %v450, %v448
        %v509 = vpack.c.b16 %v453, %v451
        %v510 = vpack.c.b16 %v454, %v452
        %v511 = vpack.c.b16 %v457, %v455
        %v512 = vpack.c.b16 %v458, %v456
        %v513 = vpack.c.b16 %v461, %v459
        %v514 = vpack.c.b16 %v462, %v460
        %v515 = vpack.c.b16 %v465, %v463
        %v516 = vpack.c.b16 %v466, %v464
        %v517 = vpack.c.b16 %v469, %v467
        %v518 = vpack.c.b16 %v470, %v468
        %v519 = vpack.c.b16 %v473, %v471
        %v520 = vpack.c.b16 %v474, %v472
        %v521 = vpack.c.b16 %v477, %v475
        %v522 = vpack.c.b16 %v478, %v476
        %v523 = vpack.c.b16 %v481, %v479
        %v524 = vpack.c.b16 %v482, %v480
        %v525 = vpack.c.b16 %v485, %v483
        %v526 = vpack.c.b16 %v486, %v484
        %v527 = vpack.c.b16 %v489, %v487
        %v528 = vpack.c.b16 %v490, %v488
        %v529 = vpack.c.b16 %v493, %v491
        %v530 = vpack.c.b16 %v494, %v492
        %v531 = vpack.c.b16 %v497, %v495
        %v532 = vpack.c.b16 %v498, %v496
        %v533 = vpack.c.b16 %v501, %v499
        %v534 = vpack.c.b16 %v502, %v500
        %567 = vmatprep.subr.bf16.mxu0 %v518
        %568 = vmatpush1.bf16.msra.mxu0 %v517
        %569 = vmatprep.subr.bf16.mxu0 %v516
        %570 = vmatpush1.bf16.msra.mxu0 %v515
        %571 = vmatprep.subr.bf16.mxu0 %v514
        %572 = vmatpush1.bf16.msra.mxu0 %v513
        %573 = vmatprep.subr.bf16.mxu0 %v512
        %574 = vmatpush1.bf16.msra.mxu0 %v511
        %575 = vmatprep.subr.bf16.mxu0 %v510
        %576 = vmatpush1.bf16.msra.mxu0 %v509
        %577 = vmatprep.subr.bf16.mxu0 %v508
        %578 = vmatpush1.bf16.msra.mxu0 %v507
        %579 = vmatprep.subr.bf16.mxu0 %v506
        %580 = vmatpush1.bf16.msra.mxu0 %v505
        %581 = vmatprep.subr.bf16.mxu0 %v504
        %582 = vmatpush1.bf16.msra.mxu0 %v503
        %583 = vmatprep.subr.bf16.mxu0 %v534
        %584 = vmatpush2.bf16.msra.mxu0 %v533
        %585 = vmatprep.subr.bf16.mxu0 %v532
        %586 = vmatpush2.bf16.msra.mxu0 %v531
        %587 = vmatprep.subr.bf16.mxu0 %v530
        %588 = vmatpush2.bf16.msra.mxu0 %v529
        %589 = vmatprep.subr.bf16.mxu0 %v528
        %590 = vmatpush2.bf16.msra.mxu0 %v527
        %591 = vmatprep.subr.bf16.mxu0 %v526
        %592 = vmatpush2.bf16.msra.mxu0 %v525
        %593 = vmatprep.subr.bf16.mxu0 %v524
        %594 = vmatpush2.bf16.msra.mxu0 %v523
        %595 = vmatprep.subr.bf16.mxu0 %v522
        %596 = vmatpush2.bf16.msra.mxu0 %v521
        %597 = vmatprep.subr.bf16.mxu0 %v520
        %598 = vmatpush2.bf16.msra.mxu0 %v519
        %599 = vmatprep.mubr.bf16.mxu0 %v400
        %600 = vmatmul.mubr.bf16.gmra.mxu0 %v399
        %v601 = vpop.f32.mrf.mxu0
        %v602 = vadd.f32 %v370, %v601
        %v603 = vpop.f32.mrf.mxu0
        %v604 = vadd.f32 %v370, %v603
        %v605 = vpop.f32.mrf.mxu0
        %v606 = vadd.f32 %v375, %v605
        %v607 = vpop.f32.mrf.mxu0
        %v608 = vadd.f32 %v375, %v607
        %609 = vmatprep.mubr.bf16.mxu0 %v402
        %610 = vmatmul.mubr.bf16.gmra.mxu0 %v401
        %v611 = vpop.f32.mrf.mxu0
        %v612 = vadd.f32 %v380, %v611
        %v613 = vpop.f32.mrf.mxu0
        %v614 = vadd.f32 %v380, %v613
        %v615 = vpop.f32.mrf.mxu0
        %v616 = vadd.f32 %v385, %v615
        %v617 = vpop.f32.mrf.mxu0
        %v618 = vadd.f32 %v385, %v617
        %619 = vdwg.mxu0
        %v620 = vmul.f32 %v602, 0.2
        %v621 = vmul.f32 %v604, 0.2
        %v622 = vmul.f32 %v606, 0.2
        %v623 = vmul.f32 %v608, 0.2
        %v624 = vmul.f32 %v612, 0.2
        %v625 = vmul.f32 %v614, 0.2
        %v626 = vmul.f32 %v616, 0.2
        %v627 = vmul.f32 %v618, 0.2
        %v628 = vmax.f32 %v602, %v620
        %v629 = vmax.f32 %v604, %v621
        %v630 = vmax.f32 %v606, %v622
        %v631 = vmax.f32 %v608, %v623
        %v632 = vmax.f32 %v612, %v624
        %v633 = vmax.f32 %v614, %v625
        %v634 = vmax.f32 %v616, %v626
        %v635 = vmax.f32 %v618, %v627
        %v636 = vpack.c.bf16 %v630, %v628
        %v637 = vpack.c.bf16 %v631, %v629
        %v638 = vpack.c.bf16 %v634, %v632
        %v639 = vpack.c.bf16 %v635, %v633
        %v644 = vunpack.c.l.b16 %v636
        %v645 = vunpack.c.l.b16 %v637
        %v646 = vunpack.c.h.b16 %v636
        %v647 = vunpack.c.h.b16 %v637
        %v648 = vunpack.c.l.b16 %v638
        %v649 = vunpack.c.l.b16 %v639
        %v650 = vunpack.c.h.b16 %v638
        %v651 = vunpack.c.h.b16 %v639
        %v652 = vpack.c.b16 %v645, %v644
        %v653 = vpack.c.b16 %v647, %v646
        %v654 = vpack.c.b16 %v649, %v648
        %v655 = vpack.c.b16 %v651, %v650
        %660 = vst [vmem:[%s324] sm:$0xff] %v652
        %661 = vst [vmem:[%s324 + $0x8] sm:$0xff] %v653
        %662 = vst [vmem:[%s324 + $0x10] sm:$0xff] %v654
        %663 = vst [vmem:[%s324 + $0x18] sm:$0xff] %v655
        %s664 = sand.u32 %s90, 1
        %s665 = sand.u32 %s90, 1
        %s666 = smul.addr %s665, 32
        %s667 = scalar_lea.vmem [#allocation3], %s666
        // Predicated region
        $region71: #{discriminator_forward.5} parent=65 // pred_check
          %p668 = pneg %p100
        $region72: #{discriminator_forward.5} parent=65 // pred_check_branch
          %670 = sbr.rel (%p668) target = $region74
        $region73: #{discriminator_forward.5} parent=65 // pred_region
          %s671 = smul.u32 2, %s14
          %s672 = smul.addr %s671, 4
          %s673 = scalar_lea.vmem %s3, %s672
          // Predicated region
          $region75: #{discriminator_forward.5} parent=73 // pred_check
            _
          $region76: #{discriminator_forward.5} parent=73 // pred_check_branch
            %675 = sbr.rel (0) target = $region78
          $region77: #{discriminator_forward.5} parent=73 // pred_region
            // Predicated region
            $region79: #{discriminator_forward.5} parent=77 // pred_check
              _
            $region80: #{discriminator_forward.5} parent=77 // pred_check_branch
              %677 = sbr.rel (0) target = $region82
            $region81: #{discriminator_forward.5} parent=77 // pred_region
              // Predicated region
              $region94: #{discriminator_forward.5} parent=81 // pred_check
                _
              $region95: #{discriminator_forward.5} parent=81 // pred_check_branch
                %699 = sbr.rel (0) target = $region97
              $region96: #{discriminator_forward.5} parent=81 // pred_region
                loop: start=0, step=1, limit=1
                $region98: #{discriminator_forward.5} parent=96 // loop_pre_header
                  _
                $region99: #{discriminator_forward.5} parent=96 // loop_header
                  %s701 = sphi 0, %s705
                  %p702 = scmp.ge.s32.totalorder %s701, 1
                  %s706 = sphi %s667, %s667
                  %s707 = sphi %s673, %s673
                $region100: #{discriminator_forward.5} parent=96 // loop_header_branch
                  %704 = sbr.rel (%p702) target = $region104
                $region101: #{discriminator_forward.5} parent=96 // loop_body
                  %v708 = vld [vmem:[%s706] sm:$0xff]
                  %709 = vst [vmem:[%s707] sm:$0xff] %v708
                  %v710 = vld [vmem:[%s706 + $0x8] sm:$0xff]
                  %711 = vst [vmem:[%s707 + $0x10] sm:$0xff] %v710
                  %v712 = vld [vmem:[%s706 + $0x10] sm:$0xff]
                  %713 = vst [vmem:[%s707 + $0x20] sm:$0xff] %v712
                  %v714 = vld [vmem:[%s706 + $0x18] sm:$0xff]
                  %715 = vst [vmem:[%s707 + $0x30] sm:$0xff] %v714
                $region102: #{discriminator_forward.5} parent=96 // loop_footer
                  %s705 = sadd.s32 1, %s701
                $region103: #{discriminator_forward.5} parent=96 // loop_footer_branch
                  %700 = sbr.rel target = $region99
                $region104: #{discriminator_forward.5} parent=96 // loop_exit
                  _
              $region97: #{discriminator_forward.5} parent=81 // pred_fallthru
                _
              // Predicated region
              $region105: #{discriminator_forward.5} parent=81 // pred_check
                _
              $region106: #{discriminator_forward.5} parent=81 // pred_check_branch
                %717 = sbr.rel target = $region108
              $region107: #{discriminator_forward.5} parent=81 // pred_region
                _
              $region108: #{discriminator_forward.5} parent=81 // pred_fallthru
                _
            $region82: #{discriminator_forward.5} parent=77 // pred_fallthru
              _
            // Predicated region
            $region83: #{discriminator_forward.5} parent=77 // pred_check
              _
            $region84: #{discriminator_forward.5} parent=77 // pred_check_branch
              %679 = sbr.rel target = $region86
            $region85: #{discriminator_forward.5} parent=77 // pred_region
              %s681 = ssub.s32 256, 1
              loop: start=0, step=1, limit=1
              $region87: #{discriminator_forward.5} parent=85 // loop_pre_header
                _
              $region88: #{discriminator_forward.5} parent=85 // loop_header
                %s683 = sphi 0, %s687
                %p684 = scmp.ge.s32.totalorder %s683, 1
                %s688 = sphi %s667, %s667
                %s689 = sphi %s673, %s673
              $region89: #{discriminator_forward.5} parent=85 // loop_header_branch
                %686 = sbr.rel (%p684) target = $region93
              $region90: #{discriminator_forward.5} parent=85 // loop_body
                %v690 = vld [vmem:[%s688] sm:%s681]
                %691 = vst [vmem:[%s689] sm:%s681] %v690
                %v692 = vld [vmem:[%s688 + $0x8] sm:%s681]
                %693 = vst [vmem:[%s689 + $0x10] sm:%s681] %v692
                %v694 = vld [vmem:[%s688 + $0x10] sm:%s681]
                %695 = vst [vmem:[%s689 + $0x20] sm:%s681] %v694
                %v696 = vld [vmem:[%s688 + $0x18] sm:%s681]
                %697 = vst [vmem:[%s689 + $0x30] sm:%s681] %v696
              $region91: #{discriminator_forward.5} parent=85 // loop_footer
                %s687 = sadd.s32 1, %s683
              $region92: #{discriminator_forward.5} parent=85 // loop_footer_branch
                %682 = sbr.rel target = $region88
              $region93: #{discriminator_forward.5} parent=85 // loop_exit
                _
            $region86: #{discriminator_forward.5} parent=77 // pred_fallthru
              _
          $region78: #{discriminator_forward.5} parent=73 // pred_fallthru
            _
          %718 = vnop
        $region74: #{discriminator_forward.5} parent=65 // pred_fallthru
          _
      $region66: #{discriminator_forward.5} parent=5 // pred_fallthru
        _
      %p719 = scmp.le.s32.totalorder 2, %s9
      // Predicated region
      $region109: #{discriminator_forward.5} parent=5 // pred_check
        %p720 = pneg %p719
      $region110: #{discriminator_forward.5} parent=5 // pred_check_branch
        %722 = sbr.rel (%p720) target = $region112
      $region111: #{discriminator_forward.5} parent=5 // pred_region
        %s723 = ssub.s32 %s9, 2
        // Predicated region
        $region113: #{discriminator_forward.5} parent=111 // pred_check
          %p724 = pneg %p106
        $region114: #{discriminator_forward.5} parent=111 // pred_check_branch
          %726 = sbr.rel (%p724) target = $region116
        $region115: #{discriminator_forward.5} parent=111 // pred_region
          %s727 = sand.u32 %s91, 1
          %s728 = sand.u32 %s91, 1
          %s729 = smul.addr %s728, 32
          %s730 = scalar_lea.vmem [#allocation3], %s729
        $region116: #{discriminator_forward.5} parent=111 // pred_fallthru
          _
      $region112: #{discriminator_forward.5} parent=5 // pred_fallthru
        _
    $region6: #{discriminator_forward.5} parent=1 // loop_footer
      %s13 = sadd.s32 1, %s9
    $region7: #{discriminator_forward.5} parent=1 // loop_footer_branch
      %8 = sbr.rel target = $region3
    $region8: #{discriminator_forward.5} parent=1 // loop_exit
      _

// kernel: discriminator_forward.6
$region0: #{discriminator_forward.6}
  #allocation0 [shape = 'u32[]', space=smem, size = 0x4, offset = 0x4, fixed_abs, tag = 'smem constant byte address 0x4 - core index']
  #allocation1 [shape = 'u32[144,128]{1,0:T(1,128)}', space=vmem, size = 0x12000, scoped, tag = 'internal scratch']
  %s0 = inlined_call_operand.vmem [shape: bf16[64,512], index: 0, kind: input, shape index: {}]
  %s1 = inlined_call_operand.vmem [shape: bf16[512,128], index: 1, kind: input, shape index: {}]
  %s2 = inlined_call_operand.vmem [shape: f32[64,1], index: 2, kind: input, shape index: {}]
  %s3 = inlined_call_operand.vmem [shape: bf16[64,128], index: 3, kind: output, shape index: {}]
  %s4 = sld [smem:[#allocation0]]
  $region22: #{discriminator_forward.6} parent=0
    _
  %s6 = ssub.s32 1, %s4
  %s7 = scalar_select 0, %s6, %s4
  // Predicated region
  $region2: #{discriminator_forward.6} parent=0 // pred_check
    _
  $region3: #{discriminator_forward.6} parent=0 // pred_check_branch
    %9 = sbr.rel (0) target = $region5
  $region4: #{discriminator_forward.6} parent=0 // pred_region
    _
  $region5: #{discriminator_forward.6} parent=0 // pred_fallthru
    _
  // Predicated region
  $region6: #{discriminator_forward.6} parent=0 // pred_check
    _
  $region7: #{discriminator_forward.6} parent=0 // pred_check_branch
    %11 = sbr.rel (0) target = $region9
  $region8: #{discriminator_forward.6} parent=0 // pred_region
    _
  $region9: #{discriminator_forward.6} parent=0 // pred_fallthru
    _
  // Predicated region
  $region10: #{discriminator_forward.6} parent=0 // pred_check
    _
  $region11: #{discriminator_forward.6} parent=0 // pred_check_branch
    %13 = sbr.rel (0) target = $region13
  $region12: #{discriminator_forward.6} parent=0 // pred_region
    _
  $region13: #{discriminator_forward.6} parent=0 // pred_fallthru
    _
  %v15 = vld [vmem:[%s0] sm:$0xff]
  %v16 = vld [vmem:[%s0 + $0x8] sm:$0xff]
  %v17 = vld [vmem:[%s0 + $0x10] sm:$0xff]
  %v18 = vld [vmem:[%s0 + $0x18] sm:$0xff]
  %v19 = vld [vmem:[%s0 + $0x20] sm:$0xff]
  %v20 = vld [vmem:[%s0 + $0x28] sm:$0xff]
  %v21 = vld [vmem:[%s0 + $0x30] sm:$0xff]
  %v22 = vld [vmem:[%s0 + $0x38] sm:$0xff]
  %v23 = vld [vmem:[%s0 + $0x40] sm:$0xff]
  %v24 = vld [vmem:[%s0 + $0x48] sm:$0xff]
  %v25 = vld [vmem:[%s0 + $0x50] sm:$0xff]
  %v26 = vld [vmem:[%s0 + $0x58] sm:$0xff]
  %v27 = vld [vmem:[%s0 + $0x60] sm:$0xff]
  %v28 = vld [vmem:[%s0 + $0x68] sm:$0xff]
  %v29 = vld [vmem:[%s0 + $0x70] sm:$0xff]
  %v30 = vld [vmem:[%s0 + $0x78] sm:$0xff]
  %v31 = vld [vmem:[%s1] sm:$0xf]
  %v32 = vld [vmem:[%s1 + $0x4] sm:$0xf]
  %v33 = vld [vmem:[%s1 + $0x8] sm:$0xf]
  %v34 = vld [vmem:[%s1 + $0xc] sm:$0xf]
  %v35 = vld [vmem:[%s1 + $0x10] sm:$0xf]
  %v36 = vld [vmem:[%s1 + $0x14] sm:$0xf]
  %v37 = vld [vmem:[%s1 + $0x18] sm:$0xf]
  %v38 = vld [vmem:[%s1 + $0x1c] sm:$0xf]
  %v39 = vld [vmem:[%s1 + $0x20] sm:$0xf]
  %v40 = vld [vmem:[%s1 + $0x24] sm:$0xf]
  %v41 = vld [vmem:[%s1 + $0x28] sm:$0xf]
  %v42 = vld [vmem:[%s1 + $0x2c] sm:$0xf]
  %v43 = vld [vmem:[%s1 + $0x30] sm:$0xf]
  %v44 = vld [vmem:[%s1 + $0x34] sm:$0xf]
  %v45 = vld [vmem:[%s1 + $0x38] sm:$0xf]
  %v46 = vld [vmem:[%s1 + $0x3c] sm:$0xf]
  %v47 = vld [vmem:[%s1 + $0x40] sm:$0xf]
  %v48 = vld [vmem:[%s1 + $0x44] sm:$0xf]
  %v49 = vld [vmem:[%s1 + $0x48] sm:$0xf]
  %v50 = vld [vmem:[%s1 + $0x4c] sm:$0xf]
  %v51 = vld [vmem:[%s1 + $0x50] sm:$0xf]
  %v52 = vld [vmem:[%s1 + $0x54] sm:$0xf]
  %v53 = vld [vmem:[%s1 + $0x58] sm:$0xf]
  %v54 = vld [vmem:[%s1 + $0x5c] sm:$0xf]
  %v55 = vld [vmem:[%s1 + $0x60] sm:$0xf]
  %v56 = vld [vmem:[%s1 + $0x64] sm:$0xf]
  %v57 = vld [vmem:[%s1 + $0x68] sm:$0xf]
  %v58 = vld [vmem:[%s1 + $0x6c] sm:$0xf]
  %v59 = vld [vmem:[%s1 + $0x70] sm:$0xf]
  %v60 = vld [vmem:[%s1 + $0x74] sm:$0xf]
  %v61 = vld [vmem:[%s1 + $0x78] sm:$0xf]
  %v62 = vld [vmem:[%s1 + $0x7c] sm:$0xf]
  %v63 = vld [vmem:[%s1 + $0x80] sm:$0xf]
  %v64 = vld [vmem:[%s1 + $0x84] sm:$0xf]
  %v65 = vld [vmem:[%s1 + $0x88] sm:$0xf]
  %v66 = vld [vmem:[%s1 + $0x8c] sm:$0xf]
  %v67 = vld [vmem:[%s1 + $0x90] sm:$0xf]
  %v68 = vld [vmem:[%s1 + $0x94] sm:$0xf]
  %v69 = vld [vmem:[%s1 + $0x98] sm:$0xf]
  %v70 = vld [vmem:[%s1 + $0x9c] sm:$0xf]
  %v71 = vld [vmem:[%s1 + $0xa0] sm:$0xf]
  %v72 = vld [vmem:[%s1 + $0xa4] sm:$0xf]
  %v73 = vld [vmem:[%s1 + $0xa8] sm:$0xf]
  %v74 = vld [vmem:[%s1 + $0xac] sm:$0xf]
  %v75 = vld [vmem:[%s1 + $0xb0] sm:$0xf]
  %v76 = vld [vmem:[%s1 + $0xb4] sm:$0xf]
  %v77 = vld [vmem:[%s1 + $0xb8] sm:$0xf]
  %v78 = vld [vmem:[%s1 + $0xbc] sm:$0xf]
  %v79 = vld [vmem:[%s1 + $0xc0] sm:$0xf]
  %v80 = vld [vmem:[%s1 + $0xc4] sm:$0xf]
  %v81 = vld [vmem:[%s1 + $0xc8] sm:$0xf]
  %v82 = vld [vmem:[%s1 + $0xcc] sm:$0xf]
  %v83 = vld [vmem:[%s1 + $0xd0] sm:$0xf]
  %v84 = vld [vmem:[%s1 + $0xd4] sm:$0xf]
  %v85 = vld [vmem:[%s1 + $0xd8] sm:$0xf]
  %v86 = vld [vmem:[%s1 + $0xdc] sm:$0xf]
  %v87 = vld [vmem:[%s1 + $0xe0] sm:$0xf]
  %v88 = vld [vmem:[%s1 + $0xe4] sm:$0xf]
  %v89 = vld [vmem:[%s1 + $0xe8] sm:$0xf]
  %v90 = vld [vmem:[%s1 + $0xec] sm:$0xf]
  %v91 = vld [vmem:[%s1 + $0xf0] sm:$0xf]
  %v92 = vld [vmem:[%s1 + $0xf4] sm:$0xf]
  %v93 = vld [vmem:[%s1 + $0xf8] sm:$0xf]
  %v94 = vld [vmem:[%s1 + $0xfc] sm:$0xf]
  %v95 = vld [vmem:[%s2] sm:$0xff]
  %v96 = vld [vmem:[%s2 + $0x8] sm:$0xff]
  %v97 = vld [vmem:[%s2 + $0x10] sm:$0xff]
  %v98 = vld [vmem:[%s2 + $0x18] sm:$0xff]
  %v99 = vld [vmem:[%s2 + $0x20] sm:$0xff]
  %v100 = vld [vmem:[%s2 + $0x28] sm:$0xff]
  %v101 = vld [vmem:[%s2 + $0x30] sm:$0xff]
  %v102 = vld [vmem:[%s2 + $0x38] sm:$0xff]
  %104 = vset.pattern.permute.xlu0 0
  %105 = vperm.xlu0 %104, %v95
  %v106 = vpop.permute.xlu0 %105
  %109 = vset.pattern.permute.xlu0 0
  %110 = vperm.xlu0 %109, %v96
  %v111 = vpop.permute.xlu0 %110
  %114 = vset.pattern.permute.xlu0 0
  %115 = vperm.xlu0 %114, %v97
  %v116 = vpop.permute.xlu0 %115
  %119 = vset.pattern.permute.xlu0 0
  %120 = vperm.xlu0 %119, %v98
  %v121 = vpop.permute.xlu0 %120
  %124 = vset.pattern.permute.xlu0 0
  %125 = vperm.xlu0 %124, %v99
  %v126 = vpop.permute.xlu0 %125
  %129 = vset.pattern.permute.xlu0 0
  %130 = vperm.xlu0 %129, %v100
  %v131 = vpop.permute.xlu0 %130
  %134 = vset.pattern.permute.xlu0 0
  %135 = vperm.xlu0 %134, %v101
  %v136 = vpop.permute.xlu0 %135
  %139 = vset.pattern.permute.xlu0 0
  %140 = vperm.xlu0 %139, %v102
  %v141 = vpop.permute.xlu0 %140
  %v159 = vunpack.c.l.b16 %v15
  %v160 = vunpack.c.h.b16 %v15
  %v161 = vunpack.c.l.b16 %v16
  %v162 = vunpack.c.h.b16 %v16
  %v163 = vunpack.c.l.b16 %v17
  %v164 = vunpack.c.h.b16 %v17
  %v165 = vunpack.c.l.b16 %v18
  %v166 = vunpack.c.h.b16 %v18
  %v167 = vunpack.c.l.b16 %v19
  %v168 = vunpack.c.h.b16 %v19
  %v169 = vunpack.c.l.b16 %v20
  %v170 = vunpack.c.h.b16 %v20
  %v171 = vunpack.c.l.b16 %v21
  %v172 = vunpack.c.h.b16 %v21
  %v173 = vunpack.c.l.b16 %v22
  %v174 = vunpack.c.h.b16 %v22
  %v175 = vunpack.c.l.b16 %v23
  %v176 = vunpack.c.h.b16 %v23
  %v177 = vunpack.c.l.b16 %v24
  %v178 = vunpack.c.h.b16 %v24
  %v179 = vunpack.c.l.b16 %v25
  %v180 = vunpack.c.h.b16 %v25
  %v181 = vunpack.c.l.b16 %v26
  %v182 = vunpack.c.h.b16 %v26
  %v183 = vunpack.c.l.b16 %v27
  %v184 = vunpack.c.h.b16 %v27
  %v185 = vunpack.c.l.b16 %v28
  %v186 = vunpack.c.h.b16 %v28
  %v187 = vunpack.c.l.b16 %v29
  %v188 = vunpack.c.h.b16 %v29
  %v189 = vunpack.c.l.b16 %v30
  %v190 = vunpack.c.h.b16 %v30
  %v191 = vpack.c.b16 %v163, %v159
  %v192 = vpack.c.b16 %v164, %v160
  %v193 = vpack.c.b16 %v165, %v161
  %v194 = vpack.c.b16 %v166, %v162
  %v195 = vpack.c.b16 %v171, %v167
  %v196 = vpack.c.b16 %v172, %v168
  %v197 = vpack.c.b16 %v173, %v169
  %v198 = vpack.c.b16 %v174, %v170
  %v199 = vpack.c.b16 %v179, %v175
  %v200 = vpack.c.b16 %v180, %v176
  %v201 = vpack.c.b16 %v181, %v177
  %v202 = vpack.c.b16 %v182, %v178
  %v203 = vpack.c.b16 %v187, %v183
  %v204 = vpack.c.b16 %v188, %v184
  %v205 = vpack.c.b16 %v189, %v185
  %v206 = vpack.c.b16 %v190, %v186
  %v287 = vunpack.c.l.b16 %v31
  %v288 = vunpack.c.l.b16 %v32
  %v289 = vunpack.c.l.b16 %v33
  %v290 = vunpack.c.l.b16 %v34
  %v291 = vunpack.c.l.b16 %v35
  %v292 = vunpack.c.l.b16 %v36
  %v293 = vunpack.c.l.b16 %v37
  %v294 = vunpack.c.l.b16 %v38
  %v295 = vunpack.c.l.b16 %v39
  %v296 = vunpack.c.l.b16 %v40
  %v297 = vunpack.c.l.b16 %v41
  %v298 = vunpack.c.l.b16 %v42
  %v299 = vunpack.c.l.b16 %v43
  %v300 = vunpack.c.l.b16 %v44
  %v301 = vunpack.c.l.b16 %v45
  %v302 = vunpack.c.l.b16 %v46
  %v303 = vunpack.c.l.b16 %v47
  %v304 = vunpack.c.l.b16 %v48
  %v305 = vunpack.c.l.b16 %v49
  %v306 = vunpack.c.l.b16 %v50
  %v307 = vunpack.c.l.b16 %v51
  %v308 = vunpack.c.l.b16 %v52
  %v309 = vunpack.c.l.b16 %v53
  %v310 = vunpack.c.l.b16 %v54
  %v311 = vunpack.c.l.b16 %v55
  %v312 = vunpack.c.l.b16 %v56
  %v313 = vunpack.c.l.b16 %v57
  %v314 = vunpack.c.l.b16 %v58
  %v315 = vunpack.c.l.b16 %v59
  %v316 = vunpack.c.l.b16 %v60
  %v317 = vunpack.c.l.b16 %v61
  %v318 = vunpack.c.l.b16 %v62
  %v319 = vunpack.c.l.b16 %v63
  %v320 = vunpack.c.l.b16 %v64
  %v321 = vunpack.c.l.b16 %v65
  %v322 = vunpack.c.l.b16 %v66
  %v323 = vunpack.c.l.b16 %v67
  %v324 = vunpack.c.l.b16 %v68
  %v325 = vunpack.c.l.b16 %v69
  %v326 = vunpack.c.l.b16 %v70
  %v327 = vunpack.c.l.b16 %v71
  %v328 = vunpack.c.l.b16 %v72
  %v329 = vunpack.c.l.b16 %v73
  %v330 = vunpack.c.l.b16 %v74
  %v331 = vunpack.c.l.b16 %v75
  %v332 = vunpack.c.l.b16 %v76
  %v333 = vunpack.c.l.b16 %v77
  %v334 = vunpack.c.l.b16 %v78
  %v335 = vunpack.c.l.b16 %v79
  %v336 = vunpack.c.l.b16 %v80
  %v337 = vunpack.c.l.b16 %v81
  %v338 = vunpack.c.l.b16 %v82
  %v339 = vunpack.c.l.b16 %v83
  %v340 = vunpack.c.l.b16 %v84
  %v341 = vunpack.c.l.b16 %v85
  %v342 = vunpack.c.l.b16 %v86
  %v343 = vunpack.c.l.b16 %v87
  %v344 = vunpack.c.l.b16 %v88
  %v345 = vunpack.c.l.b16 %v89
  %v346 = vunpack.c.l.b16 %v90
  %v347 = vunpack.c.l.b16 %v91
  %v348 = vunpack.c.l.b16 %v92
  %v349 = vunpack.c.l.b16 %v93
  %v350 = vunpack.c.l.b16 %v94
  %v351 = vpack.c.b16 %v288, %v287
  %v352 = vpack.c.b16 %v290, %v289
  %v353 = vpack.c.b16 %v292, %v291
  %v354 = vpack.c.b16 %v294, %v293
  %v355 = vpack.c.b16 %v296, %v295
  %v356 = vpack.c.b16 %v298, %v297
  %v357 = vpack.c.b16 %v300, %v299
  %v358 = vpack.c.b16 %v302, %v301
  %v359 = vpack.c.b16 %v304, %v303
  %v360 = vpack.c.b16 %v306, %v305
  %v361 = vpack.c.b16 %v308, %v307
  %v362 = vpack.c.b16 %v310, %v309
  %v363 = vpack.c.b16 %v312, %v311
  %v364 = vpack.c.b16 %v314, %v313
  %v365 = vpack.c.b16 %v316, %v315
  %v366 = vpack.c.b16 %v318, %v317
  %v367 = vpack.c.b16 %v320, %v319
  %v368 = vpack.c.b16 %v322, %v321
  %v369 = vpack.c.b16 %v324, %v323
  %v370 = vpack.c.b16 %v326, %v325
  %v371 = vpack.c.b16 %v328, %v327
  %v372 = vpack.c.b16 %v330, %v329
  %v373 = vpack.c.b16 %v332, %v331
  %v374 = vpack.c.b16 %v334, %v333
  %v375 = vpack.c.b16 %v336, %v335
  %v376 = vpack.c.b16 %v338, %v337
  %v377 = vpack.c.b16 %v340, %v339
  %v378 = vpack.c.b16 %v342, %v341
  %v379 = vpack.c.b16 %v344, %v343
  %v380 = vpack.c.b16 %v346, %v345
  %v381 = vpack.c.b16 %v348, %v347
  %v382 = vpack.c.b16 %v350, %v349
  %415 = vmatprep.subr.bf16.mxu0 0
  %416 = vmatpush1.bf16.msra.mxu0 %v358
  %417 = vmatprep.subr.bf16.mxu0 0
  %418 = vmatpush1.bf16.msra.mxu0 %v357
  %419 = vmatprep.subr.bf16.mxu0 0
  %420 = vmatpush1.bf16.msra.mxu0 %v356
  %421 = vmatprep.subr.bf16.mxu0 0
  %422 = vmatpush1.bf16.msra.mxu0 %v355
  %423 = vmatprep.subr.bf16.mxu0 0
  %424 = vmatpush1.bf16.msra.mxu0 %v354
  %425 = vmatprep.subr.bf16.mxu0 0
  %426 = vmatpush1.bf16.msra.mxu0 %v353
  %427 = vmatprep.subr.bf16.mxu0 0
  %428 = vmatpush1.bf16.msra.mxu0 %v352
  %429 = vmatprep.subr.bf16.mxu0 0
  %430 = vmatpush1.bf16.msra.mxu0 %v351
  %431 = vmatprep.subr.bf16.mxu0 0
  %432 = vmatpush2.bf16.msra.mxu0 %v366
  %433 = vmatprep.subr.bf16.mxu0 0
  %434 = vmatpush2.bf16.msra.mxu0 %v365
  %435 = vmatprep.subr.bf16.mxu0 0
  %436 = vmatpush2.bf16.msra.mxu0 %v364
  %437 = vmatprep.subr.bf16.mxu0 0
  %438 = vmatpush2.bf16.msra.mxu0 %v363
  %439 = vmatprep.subr.bf16.mxu0 0
  %440 = vmatpush2.bf16.msra.mxu0 %v362
  %441 = vmatprep.subr.bf16.mxu0 0
  %442 = vmatpush2.bf16.msra.mxu0 %v361
  %443 = vmatprep.subr.bf16.mxu0 0
  %444 = vmatpush2.bf16.msra.mxu0 %v360
  %445 = vmatprep.subr.bf16.mxu0 0
  %446 = vmatpush2.bf16.msra.mxu0 %v359
  %447 = vmatprep.mubr.bf16.mxu0 %v192
  %448 = vmatmul.mubr.bf16.gmra.mxu0 %v191
  %v449 = vpop.f32.mrf.mxu0
  %v450 = vadd.f32 %v106, %v449
  %v451 = vpop.f32.mrf.mxu0
  %v452 = vpop.f32.mrf.mxu0
  %v453 = vadd.f32 %v111, %v452
  %v454 = vpop.f32.mrf.mxu0
  %455 = vmatprep.mubr.bf16.mxu0 %v196
  %456 = vmatmul.mubr.bf16.gmra.mxu0 %v195
  %v457 = vpop.f32.mrf.mxu0
  %v458 = vadd.f32 %v116, %v457
  %v459 = vpop.f32.mrf.mxu0
  %v460 = vpop.f32.mrf.mxu0
  %v461 = vadd.f32 %v121, %v460
  %v462 = vpop.f32.mrf.mxu0
  %463 = vmatprep.mubr.bf16.mxu0 %v200
  %464 = vmatmul.mubr.bf16.gmra.mxu0 %v199
  %v465 = vpop.f32.mrf.mxu0
  %v466 = vadd.f32 %v126, %v465
  %v467 = vpop.f32.mrf.mxu0
  %v468 = vpop.f32.mrf.mxu0
  %v469 = vadd.f32 %v131, %v468
  %v470 = vpop.f32.mrf.mxu0
  %471 = vmatprep.mubr.bf16.mxu0 %v204
  %472 = vmatmul.mubr.bf16.gmra.mxu0 %v203
  %v473 = vpop.f32.mrf.mxu0
  %v474 = vadd.f32 %v136, %v473
  %v475 = vpop.f32.mrf.mxu0
  %v476 = vpop.f32.mrf.mxu0
  %v477 = vadd.f32 %v141, %v476
  %v478 = vpop.f32.mrf.mxu0
  %479 = vdwg.mxu0
  %480 = vmatprep.subr.bf16.mxu0 0
  %481 = vmatpush1.bf16.msra.mxu0 %v374
  %482 = vmatprep.subr.bf16.mxu0 0
  %483 = vmatpush1.bf16.msra.mxu0 %v373
  %484 = vmatprep.subr.bf16.mxu0 0
  %485 = vmatpush1.bf16.msra.mxu0 %v372
  %486 = vmatprep.subr.bf16.mxu0 0
  %487 = vmatpush1.bf16.msra.mxu0 %v371
  %488 = vmatprep.subr.bf16.mxu0 0
  %489 = vmatpush1.bf16.msra.mxu0 %v370
  %490 = vmatprep.subr.bf16.mxu0 0
  %491 = vmatpush1.bf16.msra.mxu0 %v369
  %492 = vmatprep.subr.bf16.mxu0 0
  %493 = vmatpush1.bf16.msra.mxu0 %v368
  %494 = vmatprep.subr.bf16.mxu0 0
  %495 = vmatpush1.bf16.msra.mxu0 %v367
  %496 = vmatprep.subr.bf16.mxu0 0
  %497 = vmatpush2.bf16.msra.mxu0 %v382
  %498 = vmatprep.subr.bf16.mxu0 0
  %499 = vmatpush2.bf16.msra.mxu0 %v381
  %500 = vmatprep.subr.bf16.mxu0 0
  %501 = vmatpush2.bf16.msra.mxu0 %v380
  %502 = vmatprep.subr.bf16.mxu0 0
  %503 = vmatpush2.bf16.msra.mxu0 %v379
  %504 = vmatprep.subr.bf16.mxu0 0
  %505 = vmatpush2.bf16.msra.mxu0 %v378
  %506 = vmatprep.subr.bf16.mxu0 0
  %507 = vmatpush2.bf16.msra.mxu0 %v377
  %508 = vmatprep.subr.bf16.mxu0 0
  %509 = vmatpush2.bf16.msra.mxu0 %v376
  %510 = vmatprep.subr.bf16.mxu0 0
  %511 = vmatpush2.bf16.msra.mxu0 %v375
  %512 = vmatprep.mubr.bf16.mxu0 %v194
  %513 = vmatmul.mubr.bf16.gmra.mxu0 %v193
  %v514 = vpop.f32.mrf.mxu0
  %v515 = vadd.f32 %v450, %v514
  %v516 = vpop.f32.mrf.mxu0
  %v517 = vpop.f32.mrf.mxu0
  %v518 = vadd.f32 %v453, %v517
  %v519 = vpop.f32.mrf.mxu0
  %520 = vmatprep.mubr.bf16.mxu0 %v198
  %521 = vmatmul.mubr.bf16.gmra.mxu0 %v197
  %v522 = vpop.f32.mrf.mxu0
  %v523 = vadd.f32 %v458, %v522
  %v524 = vpop.f32.mrf.mxu0
  %v525 = vpop.f32.mrf.mxu0
  %v526 = vadd.f32 %v461, %v525
  %v527 = vpop.f32.mrf.mxu0
  %528 = vmatprep.mubr.bf16.mxu0 %v202
  %529 = vmatmul.mubr.bf16.gmra.mxu0 %v201
  %v530 = vpop.f32.mrf.mxu0
  %v531 = vadd.f32 %v466, %v530
  %v532 = vpop.f32.mrf.mxu0
  %v533 = vpop.f32.mrf.mxu0
  %v534 = vadd.f32 %v469, %v533
  %v535 = vpop.f32.mrf.mxu0
  %536 = vmatprep.mubr.bf16.mxu0 %v206
  %537 = vmatmul.mubr.bf16.gmra.mxu0 %v205
  %v538 = vpop.f32.mrf.mxu0
  %v539 = vadd.f32 %v474, %v538
  %v540 = vpop.f32.mrf.mxu0
  %v541 = vpop.f32.mrf.mxu0
  %v542 = vadd.f32 %v477, %v541
  %v543 = vpop.f32.mrf.mxu0
  %544 = vdwg.mxu0
  %v545 = vmul.f32 %v515, 0.2
  %v546 = vmul.f32 %v518, 0.2
  %v547 = vmul.f32 %v523, 0.2
  %v548 = vmul.f32 %v526, 0.2
  %v549 = vmul.f32 %v531, 0.2
  %v550 = vmul.f32 %v534, 0.2
  %v551 = vmul.f32 %v539, 0.2
  %v552 = vmul.f32 %v542, 0.2
  %v553 = vmax.f32 %v515, %v545
  %v554 = vmax.f32 %v518, %v546
  %v555 = vmax.f32 %v523, %v547
  %v556 = vmax.f32 %v526, %v548
  %v557 = vmax.f32 %v531, %v549
  %v558 = vmax.f32 %v534, %v550
  %v559 = vmax.f32 %v539, %v551
  %v560 = vmax.f32 %v542, %v552
  %v561 = vpack.c.bf16 %v554, %v553
  %v562 = vpack.c.bf16 %v556, %v555
  %v563 = vpack.c.bf16 %v558, %v557
  %v564 = vpack.c.bf16 %v560, %v559
  %v569 = vunpack.c.l.b16 %v561
  %v570 = vunpack.c.h.b16 %v561
  %v571 = vunpack.c.l.b16 %v562
  %v572 = vunpack.c.h.b16 %v562
  %v573 = vunpack.c.l.b16 %v563
  %v574 = vunpack.c.h.b16 %v563
  %v575 = vunpack.c.l.b16 %v564
  %v576 = vunpack.c.h.b16 %v564
  %v577 = vpack.c.b16 %v569, %v569
  %v578 = vpack.c.b16 %v570, %v570
  %v579 = vpack.c.b16 %v571, %v571
  %v580 = vpack.c.b16 %v572, %v572
  %v581 = vpack.c.b16 %v573, %v573
  %v582 = vpack.c.b16 %v574, %v574
  %v583 = vpack.c.b16 %v575, %v575
  %v584 = vpack.c.b16 %v576, %v576
  %593 = vst [vmem:[%s3] sm:$0xf] %v577
  %594 = vst [vmem:[%s3 + $0x4] sm:$0xf] %v578
  %595 = vst [vmem:[%s3 + $0x8] sm:$0xf] %v579
  %596 = vst [vmem:[%s3 + $0xc] sm:$0xf] %v580
  %597 = vst [vmem:[%s3 + $0x10] sm:$0xf] %v581
  %598 = vst [vmem:[%s3 + $0x14] sm:$0xf] %v582
  %599 = vst [vmem:[%s3 + $0x18] sm:$0xf] %v583
  %600 = vst [vmem:[%s3 + $0x1c] sm:$0xf] %v584
  // Predicated region
  $region14: #{discriminator_forward.6} parent=0 // pred_check
    _
  $region15: #{discriminator_forward.6} parent=0 // pred_check_branch
    %602 = sbr.rel (0) target = $region17
  $region16: #{discriminator_forward.6} parent=0 // pred_region
    _
  $region17: #{discriminator_forward.6} parent=0 // pred_fallthru
    _
  // Predicated region
  $region18: #{discriminator_forward.6} parent=0 // pred_check
    _
  $region19: #{discriminator_forward.6} parent=0 // pred_check_branch
    %604 = sbr.rel (0) target = $region21
  $region20: #{discriminator_forward.6} parent=0 // pred_region
    _
  $region21: #{discriminator_forward.6} parent=0 // pred_fallthru
    _

// kernel: discriminator_forward.7
$region0: #{discriminator_forward.7}
  #allocation0 [shape = 'u32[]', space=smem, size = 0x4, offset = 0x4, fixed_abs, tag = 'smem constant byte address 0x4 - core index']
  #allocation1 [shape = 'u32[144,128]{1,0:T(1,128)}', space=vmem, size = 0x12000, scoped, tag = 'internal scratch']
  #allocation2 [shape = 'f32[1,1]{1,0:T(1,128)S(1)}', space=vmem, size = 0x200, scoped, tag = 'scoped memory for discriminator_forward.7']
  %s0 = inlined_call_operand.vmem [shape: bf16[128,1024], index: 0, kind: input, shape index: {}]
  %s1 = inlined_call_operand.vmem [shape: bf16[1024,32], index: 1, kind: input, shape index: {}]
  %s2 = inlined_call_operand.vmem [shape: f32[128,1], index: 2, kind: input, shape index: {}]
  %s3 = inlined_call_operand.vmem [shape: f32[128,32], index: 3, kind: input, shape index: {}]
  %s4 = inlined_call_operand.vmem [shape: f32[32,2], index: 4, kind: input, shape index: {}]
  %s5 = inlined_call_operand.<no memory space> [shape: f32[1,1], index: 5, kind: input, shape index: {}]
  %s6 = inlined_call_operand.hbm [shape: f32[1,2], index: 6, kind: output, shape index: {}]
  %s7 = sld [smem:[#allocation0]]
  $region34: #{discriminator_forward.7} parent=0
    _
  %s9 = ssub.s32 1, %s7
  %s10 = scalar_select 0, %s9, %s7
  %v11 = vstv %s5
  %12 = vst [vmem:[#allocation2] sm:$0x1] %v11
  $region1: #{discriminator_forward.7} parent=0
    #allocation3 [shape = 'u8[512]{0}', space=vmem, size = 0x400, scoped, tag = 'output window, operand 0, single buffered']
    #allocation4 [shape = 's32[1]{0}', space=sflag, size = 0x4, scoped, tag = 'scoped memory for discriminator_forward.7']
    %13 = vsyncpa [#allocation4], 0
    // Predicated region
    $region2: #{discriminator_forward.7} parent=1 // pred_check
      _
    $region3: #{discriminator_forward.7} parent=1 // pred_check_branch
      %15 = sbr.rel (0) target = $region5
    $region4: #{discriminator_forward.7} parent=1 // pred_region
      _
    $region5: #{discriminator_forward.7} parent=1 // pred_fallthru
      _
    // Predicated region
    $region6: #{discriminator_forward.7} parent=1 // pred_check
      _
    $region7: #{discriminator_forward.7} parent=1 // pred_check_branch
      %17 = sbr.rel (0) target = $region9
    $region8: #{discriminator_forward.7} parent=1 // pred_region
      _
    $region9: #{discriminator_forward.7} parent=1 // pred_fallthru
      _
    // Predicated region
    $region10: #{discriminator_forward.7} parent=1 // pred_check
      _
    $region11: #{discriminator_forward.7} parent=1 // pred_check_branch
      %19 = sbr.rel (0) target = $region13
    $region12: #{discriminator_forward.7} parent=1 // pred_region
      _
    $region13: #{discriminator_forward.7} parent=1 // pred_fallthru
      _
    // Predicated region
    $region14: #{discriminator_forward.7} parent=1 // pred_check
      _
    $region15: #{discriminator_forward.7} parent=1 // pred_check_branch
      %21 = sbr.rel (0) target = $region17
    $region16: #{discriminator_forward.7} parent=1 // pred_region
      _
    $region17: #{discriminator_forward.7} parent=1 // pred_fallthru
      _
    // Predicated region
    $region18: #{discriminator_forward.7} parent=1 // pred_check
      _
    $region19: #{discriminator_forward.7} parent=1 // pred_check_branch
      %23 = sbr.rel (0) target = $region21
    $region20: #{discriminator_forward.7} parent=1 // pred_region
      _
    $region21: #{discriminator_forward.7} parent=1 // pred_fallthru
      _
    // Predicated region
    $region22: #{discriminator_forward.7} parent=1 // pred_check
      _
    $region23: #{discriminator_forward.7} parent=1 // pred_check_branch
      %25 = sbr.rel (0) target = $region25
    $region24: #{discriminator_forward.7} parent=1 // pred_region
      _
    $region25: #{discriminator_forward.7} parent=1 // pred_fallthru
      _
    %v27 = vld [vmem:[%s0] sm:$0xff]
    %v28 = vld [vmem:[%s0 + $0x8] sm:$0xff]
    %v29 = vld [vmem:[%s0 + $0x10] sm:$0xff]
    %v30 = vld [vmem:[%s0 + $0x18] sm:$0xff]
    %v31 = vld [vmem:[%s0 + $0x20] sm:$0xff]
    %v32 = vld [vmem:[%s0 + $0x28] sm:$0xff]
    %v33 = vld [vmem:[%s0 + $0x30] sm:$0xff]
    %v34 = vld [vmem:[%s0 + $0x38] sm:$0xff]
    %v35 = vld [vmem:[%s0 + $0x40] sm:$0xff]
    %v36 = vld [vmem:[%s0 + $0x48] sm:$0xff]
    %v37 = vld [vmem:[%s0 + $0x50] sm:$0xff]
    %v38 = vld [vmem:[%s0 + $0x58] sm:$0xff]
    %v39 = vld [vmem:[%s0 + $0x60] sm:$0xff]
    %v40 = vld [vmem:[%s0 + $0x68] sm:$0xff]
    %v41 = vld [vmem:[%s0 + $0x70] sm:$0xff]
    %v42 = vld [vmem:[%s0 + $0x78] sm:$0xff]
    %v43 = vld [vmem:[%s0 + $0x80] sm:$0xff]
    %v44 = vld [vmem:[%s0 + $0x88] sm:$0xff]
    %v45 = vld [vmem:[%s0 + $0x90] sm:$0xff]
    %v46 = vld [vmem:[%s0 + $0x98] sm:$0xff]
    %v47 = vld [vmem:[%s0 + $0xa0] sm:$0xff]
    %v48 = vld [vmem:[%s0 + $0xa8] sm:$0xff]
    %v49 = vld [vmem:[%s0 + $0xb0] sm:$0xff]
    %v50 = vld [vmem:[%s0 + $0xb8] sm:$0xff]
    %v51 = vld [vmem:[%s0 + $0xc0] sm:$0xff]
    %v52 = vld [vmem:[%s0 + $0xc8] sm:$0xff]
    %v53 = vld [vmem:[%s0 + $0xd0] sm:$0xff]
    %v54 = vld [vmem:[%s0 + $0xd8] sm:$0xff]
    %v55 = vld [vmem:[%s0 + $0xe0] sm:$0xff]
    %v56 = vld [vmem:[%s0 + $0xe8] sm:$0xff]
    %v57 = vld [vmem:[%s0 + $0xf0] sm:$0xff]
    %v58 = vld [vmem:[%s0 + $0xf8] sm:$0xff]
    %v59 = vld [vmem:[%s0 + $0x100] sm:$0xff]
    %v60 = vld [vmem:[%s0 + $0x108] sm:$0xff]
    %v61 = vld [vmem:[%s0 + $0x110] sm:$0xff]
    %v62 = vld [vmem:[%s0 + $0x118] sm:$0xff]
    %v63 = vld [vmem:[%s0 + $0x120] sm:$0xff]
    %v64 = vld [vmem:[%s0 + $0x128] sm:$0xff]
    %v65 = vld [vmem:[%s0 + $0x130] sm:$0xff]
    %v66 = vld [vmem:[%s0 + $0x138] sm:$0xff]
    %v67 = vld [vmem:[%s0 + $0x140] sm:$0xff]
    %v68 = vld [vmem:[%s0 + $0x148] sm:$0xff]
    %v69 = vld [vmem:[%s0 + $0x150] sm:$0xff]
    %v70 = vld [vmem:[%s0 + $0x158] sm:$0xff]
    %v71 = vld [vmem:[%s0 + $0x160] sm:$0xff]
    %v72 = vld [vmem:[%s0 + $0x168] sm:$0xff]
    %v73 = vld [vmem:[%s0 + $0x170] sm:$0xff]
    %v74 = vld [vmem:[%s0 + $0x178] sm:$0xff]
    %v75 = vld [vmem:[%s0 + $0x180] sm:$0xff]
    %v76 = vld [vmem:[%s0 + $0x188] sm:$0xff]
    %v77 = vld [vmem:[%s0 + $0x190] sm:$0xff]
    %v78 = vld [vmem:[%s0 + $0x198] sm:$0xff]
    %v79 = vld [vmem:[%s0 + $0x1a0] sm:$0xff]
    %v80 = vld [vmem:[%s0 + $0x1a8] sm:$0xff]
    %v81 = vld [vmem:[%s0 + $0x1b0] sm:$0xff]
    %v82 = vld [vmem:[%s0 + $0x1b8] sm:$0xff]
    %v83 = vld [vmem:[%s0 + $0x1c0] sm:$0xff]
    %v84 = vld [vmem:[%s0 + $0x1c8] sm:$0xff]
    %v85 = vld [vmem:[%s0 + $0x1d0] sm:$0xff]
    %v86 = vld [vmem:[%s0 + $0x1d8] sm:$0xff]
    %v87 = vld [vmem:[%s0 + $0x1e0] sm:$0xff]
    %v88 = vld [vmem:[%s0 + $0x1e8] sm:$0xff]
    %v89 = vld [vmem:[%s0 + $0x1f0] sm:$0xff]
    %v90 = vld [vmem:[%s0 + $0x1f8] sm:$0xff]
    %v91 = vld [vmem:[%s1] sm:$0xf]
    %v92 = vld [vmem:[%s1 + $0x4] sm:$0xf]
    %v93 = vld [vmem:[%s1 + $0x8] sm:$0xf]
    %v94 = vld [vmem:[%s1 + $0xc] sm:$0xf]
    %v95 = vld [vmem:[%s1 + $0x10] sm:$0xf]
    %v96 = vld [vmem:[%s1 + $0x14] sm:$0xf]
    %v97 = vld [vmem:[%s1 + $0x18] sm:$0xf]
    %v98 = vld [vmem:[%s1 + $0x1c] sm:$0xf]
    %v99 = vld [vmem:[%s1 + $0x20] sm:$0xf]
    %v100 = vld [vmem:[%s1 + $0x24] sm:$0xf]
    %v101 = vld [vmem:[%s1 + $0x28] sm:$0xf]
    %v102 = vld [vmem:[%s1 + $0x2c] sm:$0xf]
    %v103 = vld [vmem:[%s1 + $0x30] sm:$0xf]
    %v104 = vld [vmem:[%s1 + $0x34] sm:$0xf]
    %v105 = vld [vmem:[%s1 + $0x38] sm:$0xf]
    %v106 = vld [vmem:[%s1 + $0x3c] sm:$0xf]
    %v107 = vld [vmem:[%s1 + $0x40] sm:$0xf]
    %v108 = vld [vmem:[%s1 + $0x44] sm:$0xf]
    %v109 = vld [vmem:[%s1 + $0x48] sm:$0xf]
    %v110 = vld [vmem:[%s1 + $0x4c] sm:$0xf]
    %v111 = vld [vmem:[%s1 + $0x50] sm:$0xf]
    %v112 = vld [vmem:[%s1 + $0x54] sm:$0xf]
    %v113 = vld [vmem:[%s1 + $0x58] sm:$0xf]
    %v114 = vld [vmem:[%s1 + $0x5c] sm:$0xf]
    %v115 = vld [vmem:[%s1 + $0x60] sm:$0xf]
    %v116 = vld [vmem:[%s1 + $0x64] sm:$0xf]
    %v117 = vld [vmem:[%s1 + $0x68] sm:$0xf]
    %v118 = vld [vmem:[%s1 + $0x6c] sm:$0xf]
    %v119 = vld [vmem:[%s1 + $0x70] sm:$0xf]
    %v120 = vld [vmem:[%s1 + $0x74] sm:$0xf]
    %v121 = vld [vmem:[%s1 + $0x78] sm:$0xf]
    %v122 = vld [vmem:[%s1 + $0x7c] sm:$0xf]
    %v123 = vld [vmem:[%s1 + $0x80] sm:$0xf]
    %v124 = vld [vmem:[%s1 + $0x84] sm:$0xf]
    %v125 = vld [vmem:[%s1 + $0x88] sm:$0xf]
    %v126 = vld [vmem:[%s1 + $0x8c] sm:$0xf]
    %v127 = vld [vmem:[%s1 + $0x90] sm:$0xf]
    %v128 = vld [vmem:[%s1 + $0x94] sm:$0xf]
    %v129 = vld [vmem:[%s1 + $0x98] sm:$0xf]
    %v130 = vld [vmem:[%s1 + $0x9c] sm:$0xf]
    %v131 = vld [vmem:[%s1 + $0xa0] sm:$0xf]
    %v132 = vld [vmem:[%s1 + $0xa4] sm:$0xf]
    %v133 = vld [vmem:[%s1 + $0xa8] sm:$0xf]
    %v134 = vld [vmem:[%s1 + $0xac] sm:$0xf]
    %v135 = vld [vmem:[%s1 + $0xb0] sm:$0xf]
    %v136 = vld [vmem:[%s1 + $0xb4] sm:$0xf]
    %v137 = vld [vmem:[%s1 + $0xb8] sm:$0xf]
    %v138 = vld [vmem:[%s1 + $0xbc] sm:$0xf]
    %v139 = vld [vmem:[%s1 + $0xc0] sm:$0xf]
    %v140 = vld [vmem:[%s1 + $0xc4] sm:$0xf]
    %v141 = vld [vmem:[%s1 + $0xc8] sm:$0xf]
    %v142 = vld [vmem:[%s1 + $0xcc] sm:$0xf]
    %v143 = vld [vmem:[%s1 + $0xd0] sm:$0xf]
    %v144 = vld [vmem:[%s1 + $0xd4] sm:$0xf]
    %v145 = vld [vmem:[%s1 + $0xd8] sm:$0xf]
    %v146 = vld [vmem:[%s1 + $0xdc] sm:$0xf]
    %v147 = vld [vmem:[%s1 + $0xe0] sm:$0xf]
    %v148 = vld [vmem:[%s1 + $0xe4] sm:$0xf]
    %v149 = vld [vmem:[%s1 + $0xe8] sm:$0xf]
    %v150 = vld [vmem:[%s1 + $0xec] sm:$0xf]
    %v151 = vld [vmem:[%s1 + $0xf0] sm:$0xf]
    %v152 = vld [vmem:[%s1 + $0xf4] sm:$0xf]
    %v153 = vld [vmem:[%s1 + $0xf8] sm:$0xf]
    %v154 = vld [vmem:[%s1 + $0xfc] sm:$0xf]
    %v155 = vld [vmem:[%s1 + $0x100] sm:$0xf]
    %v156 = vld [vmem:[%s1 + $0x104] sm:$0xf]
    %v157 = vld [vmem:[%s1 + $0x108] sm:$0xf]
    %v158 = vld [vmem:[%s1 + $0x10c] sm:$0xf]
    %v159 = vld [vmem:[%s1 + $0x110] sm:$0xf]
    %v160 = vld [vmem:[%s1 + $0x114] sm:$0xf]
    %v161 = vld [vmem:[%s1 + $0x118] sm:$0xf]
    %v162 = vld [vmem:[%s1 + $0x11c] sm:$0xf]
    %v163 = vld [vmem:[%s1 + $0x120] sm:$0xf]
    %v164 = vld [vmem:[%s1 + $0x124] sm:$0xf]
    %v165 = vld [vmem:[%s1 + $0x128] sm:$0xf]
    %v166 = vld [vmem:[%s1 + $0x12c] sm:$0xf]
    %v167 = vld [vmem:[%s1 + $0x130] sm:$0xf]
    %v168 = vld [vmem:[%s1 + $0x134] sm:$0xf]
    %v169 = vld [vmem:[%s1 + $0x138] sm:$0xf]
    %v170 = vld [vmem:[%s1 + $0x13c] sm:$0xf]
    %v171 = vld [vmem:[%s1 + $0x140] sm:$0xf]
    %v172 = vld [vmem:[%s1 + $0x144] sm:$0xf]
    %v173 = vld [vmem:[%s1 + $0x148] sm:$0xf]
    %v174 = vld [vmem:[%s1 + $0x14c] sm:$0xf]
    %v175 = vld [vmem:[%s1 + $0x150] sm:$0xf]
    %v176 = vld [vmem:[%s1 + $0x154] sm:$0xf]
    %v177 = vld [vmem:[%s1 + $0x158] sm:$0xf]
    %v178 = vld [vmem:[%s1 + $0x15c] sm:$0xf]
    %v179 = vld [vmem:[%s1 + $0x160] sm:$0xf]
    %v180 = vld [vmem:[%s1 + $0x164] sm:$0xf]
    %v181 = vld [vmem:[%s1 + $0x168] sm:$0xf]
    %v182 = vld [vmem:[%s1 + $0x16c] sm:$0xf]
    %v183 = vld [vmem:[%s1 + $0x170] sm:$0xf]
    %v184 = vld [vmem:[%s1 + $0x174] sm:$0xf]
    %v185 = vld [vmem:[%s1 + $0x178] sm:$0xf]
    %v186 = vld [vmem:[%s1 + $0x17c] sm:$0xf]
    %v187 = vld [vmem:[%s1 + $0x180] sm:$0xf]
    %v188 = vld [vmem:[%s1 + $0x184] sm:$0xf]
    %v189 = vld [vmem:[%s1 + $0x188] sm:$0xf]
    %v190 = vld [vmem:[%s1 + $0x18c] sm:$0xf]
    %v191 = vld [vmem:[%s1 + $0x190] sm:$0xf]
    %v192 = vld [vmem:[%s1 + $0x194] sm:$0xf]
    %v193 = vld [vmem:[%s1 + $0x198] sm:$0xf]
    %v194 = vld [vmem:[%s1 + $0x19c] sm:$0xf]
    %v195 = vld [vmem:[%s1 + $0x1a0] sm:$0xf]
    %v196 = vld [vmem:[%s1 + $0x1a4] sm:$0xf]
    %v197 = vld [vmem:[%s1 + $0x1a8] sm:$0xf]
    %v198 = vld [vmem:[%s1 + $0x1ac] sm:$0xf]
    %v199 = vld [vmem:[%s1 + $0x1b0] sm:$0xf]
    %v200 = vld [vmem:[%s1 + $0x1b4] sm:$0xf]
    %v201 = vld [vmem:[%s1 + $0x1b8] sm:$0xf]
    %v202 = vld [vmem:[%s1 + $0x1bc] sm:$0xf]
    %v203 = vld [vmem:[%s1 + $0x1c0] sm:$0xf]
    %v204 = vld [vmem:[%s1 + $0x1c4] sm:$0xf]
    %v205 = vld [vmem:[%s1 + $0x1c8] sm:$0xf]
    %v206 = vld [vmem:[%s1 + $0x1cc] sm:$0xf]
    %v207 = vld [vmem:[%s1 + $0x1d0] sm:$0xf]
    %v208 = vld [vmem:[%s1 + $0x1d4] sm:$0xf]
    %v209 = vld [vmem:[%s1 + $0x1d8] sm:$0xf]
    %v210 = vld [vmem:[%s1 + $0x1dc] sm:$0xf]
    %v211 = vld [vmem:[%s1 + $0x1e0] sm:$0xf]
    %v212 = vld [vmem:[%s1 + $0x1e4] sm:$0xf]
    %v213 = vld [vmem:[%s1 + $0x1e8] sm:$0xf]
    %v214 = vld [vmem:[%s1 + $0x1ec] sm:$0xf]
    %v215 = vld [vmem:[%s1 + $0x1f0] sm:$0xf]
    %v216 = vld [vmem:[%s1 + $0x1f4] sm:$0xf]
    %v217 = vld [vmem:[%s1 + $0x1f8] sm:$0xf]
    %v218 = vld [vmem:[%s1 + $0x1fc] sm:$0xf]
    %v219 = vld [vmem:[%s2] sm:$0xff]
    %v220 = vld [vmem:[%s2 + $0x8] sm:$0xff]
    %v221 = vld [vmem:[%s2 + $0x10] sm:$0xff]
    %v222 = vld [vmem:[%s2 + $0x18] sm:$0xff]
    %v223 = vld [vmem:[%s2 + $0x20] sm:$0xff]
    %v224 = vld [vmem:[%s2 + $0x28] sm:$0xff]
    %v225 = vld [vmem:[%s2 + $0x30] sm:$0xff]
    %v226 = vld [vmem:[%s2 + $0x38] sm:$0xff]
    %v227 = vld [vmem:[%s2 + $0x40] sm:$0xff]
    %v228 = vld [vmem:[%s2 + $0x48] sm:$0xff]
    %v229 = vld [vmem:[%s2 + $0x50] sm:$0xff]
    %v230 = vld [vmem:[%s2 + $0x58] sm:$0xff]
    %v231 = vld [vmem:[%s2 + $0x60] sm:$0xff]
    %v232 = vld [vmem:[%s2 + $0x68] sm:$0xff]
    %v233 = vld [vmem:[%s2 + $0x70] sm:$0xff]
    %v234 = vld [vmem:[%s2 + $0x78] sm:$0xff]
    %236 = vset.pattern.permute.xlu0 0
    %237 = vperm.xlu0 %236, %v219
    %v238 = vpop.permute.xlu0 %237
    %241 = vset.pattern.permute.xlu0 0
    %242 = vperm.xlu0 %241, %v220
    %v243 = vpop.permute.xlu0 %242
    %246 = vset.pattern.permute.xlu0 0
    %247 = vperm.xlu0 %246, %v221
    %v248 = vpop.permute.xlu0 %247
    %251 = vset.pattern.permute.xlu0 0
    %252 = vperm.xlu0 %251, %v222
    %v253 = vpop.permute.xlu0 %252
    %256 = vset.pattern.permute.xlu0 0
    %257 = vperm.xlu0 %256, %v223
    %v258 = vpop.permute.xlu0 %257
    %261 = vset.pattern.permute.xlu0 0
    %262 = vperm.xlu0 %261, %v224
    %v263 = vpop.permute.xlu0 %262
    %266 = vset.pattern.permute.xlu0 0
    %267 = vperm.xlu0 %266, %v225
    %v268 = vpop.permute.xlu0 %267
    %271 = vset.pattern.permute.xlu0 0
    %272 = vperm.xlu0 %271, %v226
    %v273 = vpop.permute.xlu0 %272
    %276 = vset.pattern.permute.xlu0 0
    %277 = vperm.xlu0 %276, %v227
    %v278 = vpop.permute.xlu0 %277
    %281 = vset.pattern.permute.xlu0 0
    %282 = vperm.xlu0 %281, %v228
    %v283 = vpop.permute.xlu0 %282
    %286 = vset.pattern.permute.xlu0 0
    %287 = vperm.xlu0 %286, %v229
    %v288 = vpop.permute.xlu0 %287
    %291 = vset.pattern.permute.xlu0 0
    %292 = vperm.xlu0 %291, %v230
    %v293 = vpop.permute.xlu0 %292
    %296 = vset.pattern.permute.xlu0 0
    %297 = vperm.xlu0 %296, %v231
    %v298 = vpop.permute.xlu0 %297
    %301 = vset.pattern.permute.xlu0 0
    %302 = vperm.xlu0 %301, %v232
    %v303 = vpop.permute.xlu0 %302
    %306 = vset.pattern.permute.xlu0 0
    %307 = vperm.xlu0 %306, %v233
    %v308 = vpop.permute.xlu0 %307
    %311 = vset.pattern.permute.xlu0 0
    %312 = vperm.xlu0 %311, %v234
    %v313 = vpop.permute.xlu0 %312
    %v379 = vunpack.c.l.b16 %v27
    %v380 = vunpack.c.h.b16 %v27
    %v381 = vunpack.c.l.b16 %v28
    %v382 = vunpack.c.h.b16 %v28
    %v383 = vunpack.c.l.b16 %v29
    %v384 = vunpack.c.h.b16 %v29
    %v385 = vunpack.c.l.b16 %v30
    %v386 = vunpack.c.h.b16 %v30
    %v387 = vunpack.c.l.b16 %v31
    %v388 = vunpack.c.h.b16 %v31
    %v389 = vunpack.c.l.b16 %v32
    %v390 = vunpack.c.h.b16 %v32
    %v391 = vunpack.c.l.b16 %v33
    %v392 = vunpack.c.h.b16 %v33
    %v393 = vunpack.c.l.b16 %v34
    %v394 = vunpack.c.h.b16 %v34
    %v395 = vunpack.c.l.b16 %v35
    %v396 = vunpack.c.h.b16 %v35
    %v397 = vunpack.c.l.b16 %v36
    %v398 = vunpack.c.h.b16 %v36
    %v399 = vunpack.c.l.b16 %v37
    %v400 = vunpack.c.h.b16 %v37
    %v401 = vunpack.c.l.b16 %v38
    %v402 = vunpack.c.h.b16 %v38
    %v403 = vunpack.c.l.b16 %v39
    %v404 = vunpack.c.h.b16 %v39
    %v405 = vunpack.c.l.b16 %v40
    %v406 = vunpack.c.h.b16 %v40
    %v407 = vunpack.c.l.b16 %v41
    %v408 = vunpack.c.h.b16 %v41
    %v409 = vunpack.c.l.b16 %v42
    %v410 = vunpack.c.h.b16 %v42
    %v411 = vunpack.c.l.b16 %v43
    %v412 = vunpack.c.h.b16 %v43
    %v413 = vunpack.c.l.b16 %v44
    %v414 = vunpack.c.h.b16 %v44
    %v415 = vunpack.c.l.b16 %v45
    %v416 = vunpack.c.h.b16 %v45
    %v417 = vunpack.c.l.b16 %v46
    %v418 = vunpack.c.h.b16 %v46
    %v419 = vunpack.c.l.b16 %v47
    %v420 = vunpack.c.h.b16 %v47
    %v421 = vunpack.c.l.b16 %v48
    %v422 = vunpack.c.h.b16 %v48
    %v423 = vunpack.c.l.b16 %v49
    %v424 = vunpack.c.h.b16 %v49
    %v425 = vunpack.c.l.b16 %v50
    %v426 = vunpack.c.h.b16 %v50
    %v427 = vunpack.c.l.b16 %v51
    %v428 = vunpack.c.h.b16 %v51
    %v429 = vunpack.c.l.b16 %v52
    %v430 = vunpack.c.h.b16 %v52
    %v431 = vunpack.c.l.b16 %v53
    %v432 = vunpack.c.h.b16 %v53
    %v433 = vunpack.c.l.b16 %v54
    %v434 = vunpack.c.h.b16 %v54
    %v435 = vunpack.c.l.b16 %v55
    %v436 = vunpack.c.h.b16 %v55
    %v437 = vunpack.c.l.b16 %v56
    %v438 = vunpack.c.h.b16 %v56
    %v439 = vunpack.c.l.b16 %v57
    %v440 = vunpack.c.h.b16 %v57
    %v441 = vunpack.c.l.b16 %v58
    %v442 = vunpack.c.h.b16 %v58
    %v443 = vunpack.c.l.b16 %v59
    %v444 = vunpack.c.h.b16 %v59
    %v445 = vunpack.c.l.b16 %v60
    %v446 = vunpack.c.h.b16 %v60
    %v447 = vunpack.c.l.b16 %v61
    %v448 = vunpack.c.h.b16 %v61
    %v449 = vunpack.c.l.b16 %v62
    %v450 = vunpack.c.h.b16 %v62
    %v451 = vunpack.c.l.b16 %v63
    %v452 = vunpack.c.h.b16 %v63
    %v453 = vunpack.c.l.b16 %v64
    %v454 = vunpack.c.h.b16 %v64
    %v455 = vunpack.c.l.b16 %v65
    %v456 = vunpack.c.h.b16 %v65
    %v457 = vunpack.c.l.b16 %v66
    %v458 = vunpack.c.h.b16 %v66
    %v459 = vunpack.c.l.b16 %v67
    %v460 = vunpack.c.h.b16 %v67
    %v461 = vunpack.c.l.b16 %v68
    %v462 = vunpack.c.h.b16 %v68
    %v463 = vunpack.c.l.b16 %v69
    %v464 = vunpack.c.h.b16 %v69
    %v465 = vunpack.c.l.b16 %v70
    %v466 = vunpack.c.h.b16 %v70
    %v467 = vunpack.c.l.b16 %v71
    %v468 = vunpack.c.h.b16 %v71
    %v469 = vunpack.c.l.b16 %v72
    %v470 = vunpack.c.h.b16 %v72
    %v471 = vunpack.c.l.b16 %v73
    %v472 = vunpack.c.h.b16 %v73
    %v473 = vunpack.c.l.b16 %v74
    %v474 = vunpack.c.h.b16 %v74
    %v475 = vunpack.c.l.b16 %v75
    %v476 = vunpack.c.h.b16 %v75
    %v477 = vunpack.c.l.b16 %v76
    %v478 = vunpack.c.h.b16 %v76
    %v479 = vunpack.c.l.b16 %v77
    %v480 = vunpack.c.h.b16 %v77
    %v481 = vunpack.c.l.b16 %v78
    %v482 = vunpack.c.h.b16 %v78
    %v483 = vunpack.c.l.b16 %v79
    %v484 = vunpack.c.h.b16 %v79
    %v485 = vunpack.c.l.b16 %v80
    %v486 = vunpack.c.h.b16 %v80
    %v487 = vunpack.c.l.b16 %v81
    %v488 = vunpack.c.h.b16 %v81
    %v489 = vunpack.c.l.b16 %v82
    %v490 = vunpack.c.h.b16 %v82
    %v491 = vunpack.c.l.b16 %v83
    %v492 = vunpack.c.h.b16 %v83
    %v493 = vunpack.c.l.b16 %v84
    %v494 = vunpack.c.h.b16 %v84
    %v495 = vunpack.c.l.b16 %v85
    %v496 = vunpack.c.h.b16 %v85
    %v497 = vunpack.c.l.b16 %v86
    %v498 = vunpack.c.h.b16 %v86
    %v499 = vunpack.c.l.b16 %v87
    %v500 = vunpack.c.h.b16 %v87
    %v501 = vunpack.c.l.b16 %v88
    %v502 = vunpack.c.h.b16 %v88
    %v503 = vunpack.c.l.b16 %v89
    %v504 = vunpack.c.h.b16 %v89
    %v505 = vunpack.c.l.b16 %v90
    %v506 = vunpack.c.h.b16 %v90
    %v507 = vpack.c.b16 %v387, %v379
    %v508 = vpack.c.b16 %v388, %v380
    %v509 = vpack.c.b16 %v389, %v381
    %v510 = vpack.c.b16 %v390, %v382
    %v511 = vpack.c.b16 %v391, %v383
    %v512 = vpack.c.b16 %v392, %v384
    %v513 = vpack.c.b16 %v393, %v385
    %v514 = vpack.c.b16 %v394, %v386
    %v515 = vpack.c.b16 %v403, %v395
    %v516 = vpack.c.b16 %v404, %v396
    %v517 = vpack.c.b16 %v405, %v397
    %v518 = vpack.c.b16 %v406, %v398
    %v519 = vpack.c.b16 %v407, %v399
    %v520 = vpack.c.b16 %v408, %v400
    %v521 = vpack.c.b16 %v409, %v401
    %v522 = vpack.c.b16 %v410, %v402
    %v523 = vpack.c.b16 %v419, %v411
    %v524 = vpack.c.b16 %v420, %v412
    %v525 = vpack.c.b16 %v421, %v413
    %v526 = vpack.c.b16 %v422, %v414
    %v527 = vpack.c.b16 %v423, %v415
    %v528 = vpack.c.b16 %v424, %v416
    %v529 = vpack.c.b16 %v425, %v417
    %v530 = vpack.c.b16 %v426, %v418
    %v531 = vpack.c.b16 %v435, %v427
    %v532 = vpack.c.b16 %v436, %v428
    %v533 = vpack.c.b16 %v437, %v429
    %v534 = vpack.c.b16 %v438, %v430
    %v535 = vpack.c.b16 %v439, %v431
    %v536 = vpack.c.b16 %v440, %v432
    %v537 = vpack.c.b16 %v441, %v433
    %v538 = vpack.c.b16 %v442, %v434
    %v539 = vpack.c.b16 %v451, %v443
    %v540 = vpack.c.b16 %v452, %v444
    %v541 = vpack.c.b16 %v453, %v445
    %v542 = vpack.c.b16 %v454, %v446
    %v543 = vpack.c.b16 %v455, %v447
    %v544 = vpack.c.b16 %v456, %v448
    %v545 = vpack.c.b16 %v457, %v449
    %v546 = vpack.c.b16 %v458, %v450
    %v547 = vpack.c.b16 %v467, %v459
    %v548 = vpack.c.b16 %v468, %v460
    %v549 = vpack.c.b16 %v469, %v461
    %v550 = vpack.c.b16 %v470, %v462
    %v551 = vpack.c.b16 %v471, %v463
    %v552 = vpack.c.b16 %v472, %v464
    %v553 = vpack.c.b16 %v473, %v465
    %v554 = vpack.c.b16 %v474, %v466
    %v555 = vpack.c.b16 %v483, %v475
    %v556 = vpack.c.b16 %v484, %v476
    %v557 = vpack.c.b16 %v485, %v477
    %v558 = vpack.c.b16 %v486, %v478
    %v559 = vpack.c.b16 %v487, %v479
    %v560 = vpack.c.b16 %v488, %v480
    %v561 = vpack.c.b16 %v489, %v481
    %v562 = vpack.c.b16 %v490, %v482
    %v563 = vpack.c.b16 %v499, %v491
    %v564 = vpack.c.b16 %v500, %v492
    %v565 = vpack.c.b16 %v501, %v493
    %v566 = vpack.c.b16 %v502, %v494
    %v567 = vpack.c.b16 %v503, %v495
    %v568 = vpack.c.b16 %v504, %v496
    %v569 = vpack.c.b16 %v505, %v497
    %v570 = vpack.c.b16 %v506, %v498
    %v763 = vunpack.c.l.b16 %v91
    %v764 = vunpack.c.l.b16 %v92
    %v765 = vunpack.c.l.b16 %v93
    %v766 = vunpack.c.l.b16 %v94
    %v767 = vunpack.c.l.b16 %v95
    %v768 = vunpack.c.l.b16 %v96
    %v769 = vunpack.c.l.b16 %v97
    %v770 = vunpack.c.l.b16 %v98
    %v771 = vunpack.c.l.b16 %v99
    %v772 = vunpack.c.l.b16 %v100
    %v773 = vunpack.c.l.b16 %v101
    %v774 = vunpack.c.l.b16 %v102
    %v775 = vunpack.c.l.b16 %v103
    %v776 = vunpack.c.l.b16 %v104
    %v777 = vunpack.c.l.b16 %v105
    %v778 = vunpack.c.l.b16 %v106
    %v779 = vunpack.c.l.b16 %v107
    %v780 = vunpack.c.l.b16 %v108
    %v781 = vunpack.c.l.b16 %v109
    %v782 = vunpack.c.l.b16 %v110
    %v783 = vunpack.c.l.b16 %v111
    %v784 = vunpack.c.l.b16 %v112
    %v785 = vunpack.c.l.b16 %v113
    %v786 = vunpack.c.l.b16 %v114
    %v787 = vunpack.c.l.b16 %v115
    %v788 = vunpack.c.l.b16 %v116
    %v789 = vunpack.c.l.b16 %v117
    %v790 = vunpack.c.l.b16 %v118
    %v791 = vunpack.c.l.b16 %v119
    %v792 = vunpack.c.l.b16 %v120
    %v793 = vunpack.c.l.b16 %v121
    %v794 = vunpack.c.l.b16 %v122
    %v795 = vunpack.c.l.b16 %v123
    %v796 = vunpack.c.l.b16 %v124
    %v797 = vunpack.c.l.b16 %v125
    %v798 = vunpack.c.l.b16 %v126
    %v799 = vunpack.c.l.b16 %v127
    %v800 = vunpack.c.l.b16 %v128
    %v801 = vunpack.c.l.b16 %v129
    %v802 = vunpack.c.l.b16 %v130
    %v803 = vunpack.c.l.b16 %v131
    %v804 = vunpack.c.l.b16 %v132
    %v805 = vunpack.c.l.b16 %v133
    %v806 = vunpack.c.l.b16 %v134
    %v807 = vunpack.c.l.b16 %v135
    %v808 = vunpack.c.l.b16 %v136
    %v809 = vunpack.c.l.b16 %v137
    %v810 = vunpack.c.l.b16 %v138
    %v811 = vunpack.c.l.b16 %v139
    %v812 = vunpack.c.l.b16 %v140
    %v813 = vunpack.c.l.b16 %v141
    %v814 = vunpack.c.l.b16 %v142
    %v815 = vunpack.c.l.b16 %v143
    %v816 = vunpack.c.l.b16 %v144
    %v817 = vunpack.c.l.b16 %v145
    %v818 = vunpack.c.l.b16 %v146
    %v819 = vunpack.c.l.b16 %v147
    %v820 = vunpack.c.l.b16 %v148
    %v821 = vunpack.c.l.b16 %v149
    %v822 = vunpack.c.l.b16 %v150
    %v823 = vunpack.c.l.b16 %v151
    %v824 = vunpack.c.l.b16 %v152
    %v825 = vunpack.c.l.b16 %v153
    %v826 = vunpack.c.l.b16 %v154
    %v827 = vunpack.c.l.b16 %v155
    %v828 = vunpack.c.l.b16 %v156
    %v829 = vunpack.c.l.b16 %v157
    %v830 = vunpack.c.l.b16 %v158
    %v831 = vunpack.c.l.b16 %v159
    %v832 = vunpack.c.l.b16 %v160
    %v833 = vunpack.c.l.b16 %v161
    %v834 = vunpack.c.l.b16 %v162
    %v835 = vunpack.c.l.b16 %v163
    %v836 = vunpack.c.l.b16 %v164
    %v837 = vunpack.c.l.b16 %v165
    %v838 = vunpack.c.l.b16 %v166
    %v839 = vunpack.c.l.b16 %v167
    %v840 = vunpack.c.l.b16 %v168
    %v841 = vunpack.c.l.b16 %v169
    %v842 = vunpack.c.l.b16 %v170
    %v843 = vunpack.c.l.b16 %v171
    %v844 = vunpack.c.l.b16 %v172
    %v845 = vunpack.c.l.b16 %v173
    %v846 = vunpack.c.l.b16 %v174
    %v847 = vunpack.c.l.b16 %v175
    %v848 = vunpack.c.l.b16 %v176
    %v849 = vunpack.c.l.b16 %v177
    %v850 = vunpack.c.l.b16 %v178
    %v851 = vunpack.c.l.b16 %v179
    %v852 = vunpack.c.l.b16 %v180
    %v853 = vunpack.c.l.b16 %v181
    %v854 = vunpack.c.l.b16 %v182
    %v855 = vunpack.c.l.b16 %v183
    %v856 = vunpack.c.l.b16 %v184
    %v857 = vunpack.c.l.b16 %v185
    %v858 = vunpack.c.l.b16 %v186
    %v859 = vunpack.c.l.b16 %v187
    %v860 = vunpack.c.l.b16 %v188
    %v861 = vunpack.c.l.b16 %v189
    %v862 = vunpack.c.l.b16 %v190
    %v863 = vunpack.c.l.b16 %v191
    %v864 = vunpack.c.l.b16 %v192
    %v865 = vunpack.c.l.b16 %v193
    %v866 = vunpack.c.l.b16 %v194
    %v867 = vunpack.c.l.b16 %v195
    %v868 = vunpack.c.l.b16 %v196
    %v869 = vunpack.c.l.b16 %v197
    %v870 = vunpack.c.l.b16 %v198
    %v871 = vunpack.c.l.b16 %v199
    %v872 = vunpack.c.l.b16 %v200
    %v873 = vunpack.c.l.b16 %v201
    %v874 = vunpack.c.l.b16 %v202
    %v875 = vunpack.c.l.b16 %v203
    %v876 = vunpack.c.l.b16 %v204
    %v877 = vunpack.c.l.b16 %v205
    %v878 = vunpack.c.l.b16 %v206
    %v879 = vunpack.c.l.b16 %v207
    %v880 = vunpack.c.l.b16 %v208
    %v881 = vunpack.c.l.b16 %v209
    %v882 = vunpack.c.l.b16 %v210
    %v883 = vunpack.c.l.b16 %v211
    %v884 = vunpack.c.l.b16 %v212
    %v885 = vunpack.c.l.b16 %v213
    %v886 = vunpack.c.l.b16 %v214
    %v887 = vunpack.c.l.b16 %v215
    %v888 = vunpack.c.l.b16 %v216
    %v889 = vunpack.c.l.b16 %v217
    %v890 = vunpack.c.l.b16 %v218
    %v891 = vpack.c.b16 %v764, %v763
    %v892 = vpack.c.b16 %v766, %v765
    %v893 = vpack.c.b16 %v768, %v767
    %v894 = vpack.c.b16 %v770, %v769
    %v895 = vpack.c.b16 %v772, %v771
    %v896 = vpack.c.b16 %v774, %v773
    %v897 = vpack.c.b16 %v776, %v775
    %v898 = vpack.c.b16 %v778, %v777
    %v899 = vpack.c.b16 %v780, %v779
    %v900 = vpack.c.b16 %v782, %v781
    %v901 = vpack.c.b16 %v784, %v783
    %v902 = vpack.c.b16 %v786, %v785
    %v903 = vpack.c.b16 %v788, %v787
    %v904 = vpack.c.b16 %v790, %v789
    %v905 = vpack.c.b16 %v792, %v791
    %v906 = vpack.c.b16 %v794, %v793
    %v907 = vpack.c.b16 %v796, %v795
    %v908 = vpack.c.b16 %v798, %v797
    %v909 = vpack.c.b16 %v800, %v799
    %v910 = vpack.c.b16 %v802, %v801
    %v911 = vpack.c.b16 %v804, %v803
    %v912 = vpack.c.b16 %v806, %v805
    %v913 = vpack.c.b16 %v808, %v807
    %v914 = vpack.c.b16 %v810, %v809
    %v915 = vpack.c.b16 %v812, %v811
    %v916 = vpack.c.b16 %v814, %v813
    %v917 = vpack.c.b16 %v816, %v815
    %v918 = vpack.c.b16 %v818, %v817
    %v919 = vpack.c.b16 %v820, %v819
    %v920 = vpack.c.b16 %v822, %v821
    %v921 = vpack.c.b16 %v824, %v823
    %v922 = vpack.c.b16 %v826, %v825
    %v923 = vpack.c.b16 %v828, %v827
    %v924 = vpack.c.b16 %v830, %v829
    %v925 = vpack.c.b16 %v832, %v831
    %v926 = vpack.c.b16 %v834, %v833
    %v927 = vpack.c.b16 %v836, %v835
    %v928 = vpack.c.b16 %v838, %v837
    %v929 = vpack.c.b16 %v840, %v839
    %v930 = vpack.c.b16 %v842, %v841
    %v931 = vpack.c.b16 %v844, %v843
    %v932 = vpack.c.b16 %v846, %v845
    %v933 = vpack.c.b16 %v848, %v847
    %v934 = vpack.c.b16 %v850, %v849
    %v935 = vpack.c.b16 %v852, %v851
    %v936 = vpack.c.b16 %v854, %v853
    %v937 = vpack.c.b16 %v856, %v855
    %v938 = vpack.c.b16 %v858, %v857
    %v939 = vpack.c.b16 %v860, %v859
    %v940 = vpack.c.b16 %v862, %v861
    %v941 = vpack.c.b16 %v864, %v863
    %v942 = vpack.c.b16 %v866, %v865
    %v943 = vpack.c.b16 %v868, %v867
    %v944 = vpack.c.b16 %v870, %v869
    %v945 = vpack.c.b16 %v872, %v871
    %v946 = vpack.c.b16 %v874, %v873
    %v947 = vpack.c.b16 %v876, %v875
    %v948 = vpack.c.b16 %v878, %v877
    %v949 = vpack.c.b16 %v880, %v879
    %v950 = vpack.c.b16 %v882, %v881
    %v951 = vpack.c.b16 %v884, %v883
    %v952 = vpack.c.b16 %v886, %v885
    %v953 = vpack.c.b16 %v888, %v887
    %v954 = vpack.c.b16 %v890, %v889
    %1019 = vmatprep.subr.bf16.mxu0 0
    %1020 = vmatpush1.bf16.msra.mxu0 %v898
    %1021 = vmatprep.subr.bf16.mxu0 0
    %1022 = vmatpush1.bf16.msra.mxu0 %v897
    %1023 = vmatprep.subr.bf16.mxu0 0
    %1024 = vmatpush1.bf16.msra.mxu0 %v896
    %1025 = vmatprep.subr.bf16.mxu0 0
    %1026 = vmatpush1.bf16.msra.mxu0 %v895
    %1027 = vmatprep.subr.bf16.mxu0 0
    %1028 = vmatpush1.bf16.msra.mxu0 %v894
    %1029 = vmatprep.subr.bf16.mxu0 0
    %1030 = vmatpush1.bf16.msra.mxu0 %v893
    %1031 = vmatprep.subr.bf16.mxu0 0
    %1032 = vmatpush1.bf16.msra.mxu0 %v892
    %1033 = vmatprep.subr.bf16.mxu0 0
    %1034 = vmatpush1.bf16.msra.mxu0 %v891
    %1035 = vmatprep.subr.bf16.mxu0 0
    %1036 = vmatpush2.bf16.msra.mxu0 %v906
    %1037 = vmatprep.subr.bf16.mxu0 0
    %1038 = vmatpush2.bf16.msra.mxu0 %v905
    %1039 = vmatprep.subr.bf16.mxu0 0
    %1040 = vmatpush2.bf16.msra.mxu0 %v904
    %1041 = vmatprep.subr.bf16.mxu0 0
    %1042 = vmatpush2.bf16.msra.mxu0 %v903
    %1043 = vmatprep.subr.bf16.mxu0 0
    %1044 = vmatpush2.bf16.msra.mxu0 %v902
    %1045 = vmatprep.subr.bf16.mxu0 0
    %1046 = vmatpush2.bf16.msra.mxu0 %v901
    %1047 = vmatprep.subr.bf16.mxu0 0
    %1048 = vmatpush2.bf16.msra.mxu0 %v900
    %1049 = vmatprep.subr.bf16.mxu0 0
    %1050 = vmatpush2.bf16.msra.mxu0 %v899
    %1051 = vmatprep.mubr.bf16.mxu0 %v508
    %1052 = vmatmul.mubr.bf16.gmra.mxu0 %v507
    %v1053 = vpop.f32.mrf.mxu0
    %v1054 = vadd.f32 %v238, %v1053
    %v1055 = vpop.f32.mrf.mxu0
    %v1056 = vpop.f32.mrf.mxu0
    %v1057 = vadd.f32 %v243, %v1056
    %v1058 = vpop.f32.mrf.mxu0
    %1059 = vmatprep.mubr.bf16.mxu0 %v516
    %1060 = vmatmul.mubr.bf16.gmra.mxu0 %v515
    %v1061 = vpop.f32.mrf.mxu0
    %v1062 = vadd.f32 %v248, %v1061
    %v1063 = vpop.f32.mrf.mxu0
    %v1064 = vpop.f32.mrf.mxu0
    %v1065 = vadd.f32 %v253, %v1064
    %v1066 = vpop.f32.mrf.mxu0
    %1067 = vmatprep.mubr.bf16.mxu0 %v524
    %1068 = vmatmul.mubr.bf16.gmra.mxu0 %v523
    %v1069 = vpop.f32.mrf.mxu0
    %v1070 = vadd.f32 %v258, %v1069
    %v1071 = vpop.f32.mrf.mxu0
    %v1072 = vpop.f32.mrf.mxu0
    %v1073 = vadd.f32 %v263, %v1072
    %v1074 = vpop.f32.mrf.mxu0
    %1075 = vmatprep.mubr.bf16.mxu0 %v532
    %1076 = vmatmul.mubr.bf16.gmra.mxu0 %v531
    %v1077 = vpop.f32.mrf.mxu0
    %v1078 = vadd.f32 %v268, %v1077
    %v1079 = vpop.f32.mrf.mxu0
    %v1080 = vpop.f32.mrf.mxu0
    %v1081 = vadd.f32 %v273, %v1080
    %v1082 = vpop.f32.mrf.mxu0
    %1083 = vmatprep.mubr.bf16.mxu0 %v540
    %1084 = vmatmul.mubr.bf16.gmra.mxu0 %v539
    %v1085 = vpop.f32.mrf.mxu0
    %v1086 = vadd.f32 %v278, %v1085
    %v1087 = vpop.f32.mrf.mxu0
    %v1088 = vpop.f32.mrf.mxu0
    %v1089 = vadd.f32 %v283, %v1088
    %v1090 = vpop.f32.mrf.mxu0
    %1091 = vmatprep.mubr.bf16.mxu0 %v548
    %1092 = vmatmul.mubr.bf16.gmra.mxu0 %v547
    %v1093 = vpop.f32.mrf.mxu0
    %v1094 = vadd.f32 %v288, %v1093
    %v1095 = vpop.f32.mrf.mxu0
    %v1096 = vpop.f32.mrf.mxu0
    %v1097 = vadd.f32 %v293, %v1096
    %v1098 = vpop.f32.mrf.mxu0
    %1099 = vmatprep.mubr.bf16.mxu0 %v556
    %1100 = vmatmul.mubr.bf16.gmra.mxu0 %v555
    %v1101 = vpop.f32.mrf.mxu0
    %v1102 = vadd.f32 %v298, %v1101
    %v1103 = vpop.f32.mrf.mxu0
    %v1104 = vpop.f32.mrf.mxu0
    %v1105 = vadd.f32 %v303, %v1104
    %v1106 = vpop.f32.mrf.mxu0
    %1107 = vmatprep.mubr.bf16.mxu0 %v564
    %1108 = vmatmul.mubr.bf16.gmra.mxu0 %v563
    %v1109 = vpop.f32.mrf.mxu0
    %v1110 = vadd.f32 %v308, %v1109
    %v1111 = vpop.f32.mrf.mxu0
    %v1112 = vpop.f32.mrf.mxu0
    %v1113 = vadd.f32 %v313, %v1112
    %v1114 = vpop.f32.mrf.mxu0
    %1115 = vdwg.mxu0
    %1116 = vmatprep.subr.bf16.mxu0 0
    %1117 = vmatpush1.bf16.msra.mxu0 %v914
    %1118 = vmatprep.subr.bf16.mxu0 0
    %1119 = vmatpush1.bf16.msra.mxu0 %v913
    %1120 = vmatprep.subr.bf16.mxu0 0
    %1121 = vmatpush1.bf16.msra.mxu0 %v912
    %1122 = vmatprep.subr.bf16.mxu0 0
    %1123 = vmatpush1.bf16.msra.mxu0 %v911
    %1124 = vmatprep.subr.bf16.mxu0 0
    %1125 = vmatpush1.bf16.msra.mxu0 %v910
    %1126 = vmatprep.subr.bf16.mxu0 0
    %1127 = vmatpush1.bf16.msra.mxu0 %v909
    %1128 = vmatprep.subr.bf16.mxu0 0
    %1129 = vmatpush1.bf16.msra.mxu0 %v908
    %1130 = vmatprep.subr.bf16.mxu0 0
    %1131 = vmatpush1.bf16.msra.mxu0 %v907
    %1132 = vmatprep.subr.bf16.mxu0 0
    %1133 = vmatpush2.bf16.msra.mxu0 %v922
    %1134 = vmatprep.subr.bf16.mxu0 0
    %1135 = vmatpush2.bf16.msra.mxu0 %v921
    %1136 = vmatprep.subr.bf16.mxu0 0
    %1137 = vmatpush2.bf16.msra.mxu0 %v920
    %1138 = vmatprep.subr.bf16.mxu0 0
    %1139 = vmatpush2.bf16.msra.mxu0 %v919
    %1140 = vmatprep.subr.bf16.mxu0 0
    %1141 = vmatpush2.bf16.msra.mxu0 %v918
    %1142 = vmatprep.subr.bf16.mxu0 0
    %1143 = vmatpush2.bf16.msra.mxu0 %v917
    %1144 = vmatprep.subr.bf16.mxu0 0
    %1145 = vmatpush2.bf16.msra.mxu0 %v916
    %1146 = vmatprep.subr.bf16.mxu0 0
    %1147 = vmatpush2.bf16.msra.mxu0 %v915
    %1148 = vmatprep.mubr.bf16.mxu0 %v510
    %1149 = vmatmul.mubr.bf16.gmra.mxu0 %v509
    %v1150 = vpop.f32.mrf.mxu0
    %v1151 = vadd.f32 %v1054, %v1150
    %v1152 = vpop.f32.mrf.mxu0
    %v1153 = vpop.f32.mrf.mxu0
    %v1154 = vadd.f32 %v1057, %v1153
    %v1155 = vpop.f32.mrf.mxu0
    %1156 = vmatprep.mubr.bf16.mxu0 %v518
    %1157 = vmatmul.mubr.bf16.gmra.mxu0 %v517
    %v1158 = vpop.f32.mrf.mxu0
    %v1159 = vadd.f32 %v1062, %v1158
    %v1160 = vpop.f32.mrf.mxu0
    %v1161 = vpop.f32.mrf.mxu0
    %v1162 = vadd.f32 %v1065, %v1161
    %v1163 = vpop.f32.mrf.mxu0
    %1164 = vmatprep.mubr.bf16.mxu0 %v526
    %1165 = vmatmul.mubr.bf16.gmra.mxu0 %v525
    %v1166 = vpop.f32.mrf.mxu0
    %v1167 = vadd.f32 %v1070, %v1166
    %v1168 = vpop.f32.mrf.mxu0
    %v1169 = vpop.f32.mrf.mxu0
    %v1170 = vadd.f32 %v1073, %v1169
    %v1171 = vpop.f32.mrf.mxu0
    %1172 = vmatprep.mubr.bf16.mxu0 %v534
    %1173 = vmatmul.mubr.bf16.gmra.mxu0 %v533
    %v1174 = vpop.f32.mrf.mxu0
    %v1175 = vadd.f32 %v1078, %v1174
    %v1176 = vpop.f32.mrf.mxu0
    %v1177 = vpop.f32.mrf.mxu0
    %v1178 = vadd.f32 %v1081, %v1177
    %v1179 = vpop.f32.mrf.mxu0
    %1180 = vmatprep.mubr.bf16.mxu0 %v542
    %1181 = vmatmul.mubr.bf16.gmra.mxu0 %v541
    %v1182 = vpop.f32.mrf.mxu0
    %v1183 = vadd.f32 %v1086, %v1182
    %v1184 = vpop.f32.mrf.mxu0
    %v1185 = vpop.f32.mrf.mxu0
    %v1186 = vadd.f32 %v1089, %v1185
    %v1187 = vpop.f32.mrf.mxu0
    %1188 = vmatprep.mubr.bf16.mxu0 %v550
    %1189 = vmatmul.mubr.bf16.gmra.mxu0 %v549
    %v1190 = vpop.f32.mrf.mxu0
    %v1191 = vadd.f32 %v1094, %v1190
    %v1192 = vpop.f32.mrf.mxu0
    %v1193 = vpop.f32.mrf.mxu0
    %v1194 = vadd.f32 %v1097, %v1193
    %v1195 = vpop.f32.mrf.mxu0
    %1196 = vmatprep.mubr.bf16.mxu0 %v558
    %1197 = vmatmul.mubr.bf16.gmra.mxu0 %v557
    %v1198 = vpop.f32.mrf.mxu0
    %v1199 = vadd.f32 %v1102, %v1198
    %v1200 = vpop.f32.mrf.mxu0
    %v1201 = vpop.f32.mrf.mxu0
    %v1202 = vadd.f32 %v1105, %v1201
    %v1203 = vpop.f32.mrf.mxu0
    %1204 = vmatprep.mubr.bf16.mxu0 %v566
    %1205 = vmatmul.mubr.bf16.gmra.mxu0 %v565
    %v1206 = vpop.f32.mrf.mxu0
    %v1207 = vadd.f32 %v1110, %v1206
    %v1208 = vpop.f32.mrf.mxu0
    %v1209 = vpop.f32.mrf.mxu0
    %v1210 = vadd.f32 %v1113, %v1209
    %v1211 = vpop.f32.mrf.mxu0
    %1212 = vdwg.mxu0
    %1213 = vmatprep.subr.bf16.mxu0 0
    %1214 = vmatpush1.bf16.msra.mxu0 %v930
    %1215 = vmatprep.subr.bf16.mxu0 0
    %1216 = vmatpush1.bf16.msra.mxu0 %v929
    %1217 = vmatprep.subr.bf16.mxu0 0
    %1218 = vmatpush1.bf16.msra.mxu0 %v928
    %1219 = vmatprep.subr.bf16.mxu0 0
    %1220 = vmatpush1.bf16.msra.mxu0 %v927
    %1221 = vmatprep.subr.bf16.mxu0 0
    %1222 = vmatpush1.bf16.msra.mxu0 %v926
    %1223 = vmatprep.subr.bf16.mxu0 0
    %1224 = vmatpush1.bf16.msra.mxu0 %v925
    %1225 = vmatprep.subr.bf16.mxu0 0
    %1226 = vmatpush1.bf16.msra.mxu0 %v924
    %1227 = vmatprep.subr.bf16.mxu0 0
    %1228 = vmatpush1.bf16.msra.mxu0 %v923
    %1229 = vmatprep.subr.bf16.mxu0 0
    %1230 = vmatpush2.bf16.msra.mxu0 %v938
    %1231 = vmatprep.subr.bf16.mxu0 0
    %1232 = vmatpush2.bf16.msra.mxu0 %v937
    %1233 = vmatprep.subr.bf16.mxu0 0
    %1234 = vmatpush2.bf16.msra.mxu0 %v936
    %1235 = vmatprep.subr.bf16.mxu0 0
    %1236 = vmatpush2.bf16.msra.mxu0 %v935
    %1237 = vmatprep.subr.bf16.mxu0 0
    %1238 = vmatpush2.bf16.msra.mxu0 %v934
    %1239 = vmatprep.subr.bf16.mxu0 0
    %1240 = vmatpush2.bf16.msra.mxu0 %v933
    %1241 = vmatprep.subr.bf16.mxu0 0
    %1242 = vmatpush2.bf16.msra.mxu0 %v932
    %1243 = vmatprep.subr.bf16.mxu0 0
    %1244 = vmatpush2.bf16.msra.mxu0 %v931
    %1245 = vmatprep.mubr.bf16.mxu0 %v512
    %1246 = vmatmul.mubr.bf16.gmra.mxu0 %v511
    %v1247 = vpop.f32.mrf.mxu0
    %v1248 = vadd.f32 %v1151, %v1247
    %v1249 = vpop.f32.mrf.mxu0
    %v1250 = vpop.f32.mrf.mxu0
    %v1251 = vadd.f32 %v1154, %v1250
    %v1252 = vpop.f32.mrf.mxu0
    %1253 = vmatprep.mubr.bf16.mxu0 %v520
    %1254 = vmatmul.mubr.bf16.gmra.mxu0 %v519
    %v1255 = vpop.f32.mrf.mxu0
    %v1256 = vadd.f32 %v1159, %v1255
    %v1257 = vpop.f32.mrf.mxu0
    %v1258 = vpop.f32.mrf.mxu0
    %v1259 = vadd.f32 %v1162, %v1258
    %v1260 = vpop.f32.mrf.mxu0
    %1261 = vmatprep.mubr.bf16.mxu0 %v528
    %1262 = vmatmul.mubr.bf16.gmra.mxu0 %v527
    %v1263 = vpop.f32.mrf.mxu0
    %v1264 = vadd.f32 %v1167, %v1263
    %v1265 = vpop.f32.mrf.mxu0
    %v1266 = vpop.f32.mrf.mxu0
    %v1267 = vadd.f32 %v1170, %v1266
    %v1268 = vpop.f32.mrf.mxu0
    %1269 = vmatprep.mubr.bf16.mxu0 %v536
    %1270 = vmatmul.mubr.bf16.gmra.mxu0 %v535
    %v1271 = vpop.f32.mrf.mxu0
    %v1272 = vadd.f32 %v1175, %v1271
    %v1273 = vpop.f32.mrf.mxu0
    %v1274 = vpop.f32.mrf.mxu0
    %v1275 = vadd.f32 %v1178, %v1274
    %v1276 = vpop.f32.mrf.mxu0
    %1277 = vmatprep.mubr.bf16.mxu0 %v544
    %1278 = vmatmul.mubr.bf16.gmra.mxu0 %v543
    %v1279 = vpop.f32.mrf.mxu0
    %v1280 = vadd.f32 %v1183, %v1279
    %v1281 = vpop.f32.mrf.mxu0
    %v1282 = vpop.f32.mrf.mxu0
    %v1283 = vadd.f32 %v1186, %v1282
    %v1284 = vpop.f32.mrf.mxu0
    %1285 = vmatprep.mubr.bf16.mxu0 %v552
    %1286 = vmatmul.mubr.bf16.gmra.mxu0 %v551
    %v1287 = vpop.f32.mrf.mxu0
    %v1288 = vadd.f32 %v1191, %v1287
    %v1289 = vpop.f32.mrf.mxu0
    %v1290 = vpop.f32.mrf.mxu0
    %v1291 = vadd.f32 %v1194, %v1290
    %v1292 = vpop.f32.mrf.mxu0
    %1293 = vmatprep.mubr.bf16.mxu0 %v560
    %1294 = vmatmul.mubr.bf16.gmra.mxu0 %v559
    %v1295 = vpop.f32.mrf.mxu0
    %v1296 = vadd.f32 %v1199, %v1295
    %v1297 = vpop.f32.mrf.mxu0
    %v1298 = vpop.f32.mrf.mxu0
    %v1299 = vadd.f32 %v1202, %v1298
    %v1300 = vpop.f32.mrf.mxu0
    %1301 = vmatprep.mubr.bf16.mxu0 %v568
    %1302 = vmatmul.mubr.bf16.gmra.mxu0 %v567
    %v1303 = vpop.f32.mrf.mxu0
    %v1304 = vadd.f32 %v1207, %v1303
    %v1305 = vpop.f32.mrf.mxu0
    %v1306 = vpop.f32.mrf.mxu0
    %v1307 = vadd.f32 %v1210, %v1306
    %v1308 = vpop.f32.mrf.mxu0
    %1309 = vdwg.mxu0
    %1310 = vmatprep.subr.bf16.mxu0 0
    %1311 = vmatpush1.bf16.msra.mxu0 %v946
    %1312 = vmatprep.subr.bf16.mxu0 0
    %1313 = vmatpush1.bf16.msra.mxu0 %v945
    %1314 = vmatprep.subr.bf16.mxu0 0
    %1315 = vmatpush1.bf16.msra.mxu0 %v944
    %1316 = vmatprep.subr.bf16.mxu0 0
    %1317 = vmatpush1.bf16.msra.mxu0 %v943
    %1318 = vmatprep.subr.bf16.mxu0 0
    %1319 = vmatpush1.bf16.msra.mxu0 %v942
    %1320 = vmatprep.subr.bf16.mxu0 0
    %1321 = vmatpush1.bf16.msra.mxu0 %v941
    %1322 = vmatprep.subr.bf16.mxu0 0
    %1323 = vmatpush1.bf16.msra.mxu0 %v940
    %1324 = vmatprep.subr.bf16.mxu0 0
    %1325 = vmatpush1.bf16.msra.mxu0 %v939
    %1326 = vmatprep.subr.bf16.mxu0 0
    %1327 = vmatpush2.bf16.msra.mxu0 %v954
    %1328 = vmatprep.subr.bf16.mxu0 0
    %1329 = vmatpush2.bf16.msra.mxu0 %v953
    %1330 = vmatprep.subr.bf16.mxu0 0
    %1331 = vmatpush2.bf16.msra.mxu0 %v952
    %1332 = vmatprep.subr.bf16.mxu0 0
    %1333 = vmatpush2.bf16.msra.mxu0 %v951
    %1334 = vmatprep.subr.bf16.mxu0 0
    %1335 = vmatpush2.bf16.msra.mxu0 %v950
    %1336 = vmatprep.subr.bf16.mxu0 0
    %1337 = vmatpush2.bf16.msra.mxu0 %v949
    %1338 = vmatprep.subr.bf16.mxu0 0
    %1339 = vmatpush2.bf16.msra.mxu0 %v948
    %1340 = vmatprep.subr.bf16.mxu0 0
    %1341 = vmatpush2.bf16.msra.mxu0 %v947
    %1342 = vmatprep.mubr.bf16.mxu0 %v514
    %1343 = vmatmul.mubr.bf16.gmra.mxu0 %v513
    %v1344 = vpop.f32.mrf.mxu0
    %v1345 = vadd.f32 %v1248, %v1344
    %v1346 = vpop.f32.mrf.mxu0
    %v1347 = vpop.f32.mrf.mxu0
    %v1348 = vadd.f32 %v1251, %v1347
    %v1349 = vpop.f32.mrf.mxu0
    %1350 = vmatprep.mubr.bf16.mxu0 %v522
    %1351 = vmatmul.mubr.bf16.gmra.mxu0 %v521
    %v1352 = vpop.f32.mrf.mxu0
    %v1353 = vadd.f32 %v1256, %v1352
    %v1354 = vpop.f32.mrf.mxu0
    %v1355 = vpop.f32.mrf.mxu0
    %v1356 = vadd.f32 %v1259, %v1355
    %v1357 = vpop.f32.mrf.mxu0
    %1358 = vmatprep.mubr.bf16.mxu0 %v530
    %1359 = vmatmul.mubr.bf16.gmra.mxu0 %v529
    %v1360 = vpop.f32.mrf.mxu0
    %v1361 = vadd.f32 %v1264, %v1360
    %v1362 = vpop.f32.mrf.mxu0
    %v1363 = vpop.f32.mrf.mxu0
    %v1364 = vadd.f32 %v1267, %v1363
    %v1365 = vpop.f32.mrf.mxu0
    %1366 = vmatprep.mubr.bf16.mxu0 %v538
    %1367 = vmatmul.mubr.bf16.gmra.mxu0 %v537
    %v1368 = vpop.f32.mrf.mxu0
    %v1369 = vadd.f32 %v1272, %v1368
    %v1370 = vpop.f32.mrf.mxu0
    %v1371 = vpop.f32.mrf.mxu0
    %v1372 = vadd.f32 %v1275, %v1371
    %v1373 = vpop.f32.mrf.mxu0
    %1374 = vmatprep.mubr.bf16.mxu0 %v546
    %1375 = vmatmul.mubr.bf16.gmra.mxu0 %v545
    %v1376 = vpop.f32.mrf.mxu0
    %v1377 = vadd.f32 %v1280, %v1376
    %v1378 = vpop.f32.mrf.mxu0
    %v1379 = vpop.f32.mrf.mxu0
    %v1380 = vadd.f32 %v1283, %v1379
    %v1381 = vpop.f32.mrf.mxu0
    %1382 = vmatprep.mubr.bf16.mxu0 %v554
    %1383 = vmatmul.mubr.bf16.gmra.mxu0 %v553
    %v1384 = vpop.f32.mrf.mxu0
    %v1385 = vadd.f32 %v1288, %v1384
    %v1386 = vpop.f32.mrf.mxu0
    %v1387 = vpop.f32.mrf.mxu0
    %v1388 = vadd.f32 %v1291, %v1387
    %v1389 = vpop.f32.mrf.mxu0
    %1390 = vmatprep.mubr.bf16.mxu0 %v562
    %1391 = vmatmul.mubr.bf16.gmra.mxu0 %v561
    %v1392 = vpop.f32.mrf.mxu0
    %v1393 = vadd.f32 %v1296, %v1392
    %v1394 = vpop.f32.mrf.mxu0
    %v1395 = vpop.f32.mrf.mxu0
    %v1396 = vadd.f32 %v1299, %v1395
    %v1397 = vpop.f32.mrf.mxu0
    %1398 = vmatprep.mubr.bf16.mxu0 %v570
    %1399 = vmatmul.mubr.bf16.gmra.mxu0 %v569
    %v1400 = vpop.f32.mrf.mxu0
    %v1401 = vadd.f32 %v1304, %v1400
    %v1402 = vpop.f32.mrf.mxu0
    %v1403 = vpop.f32.mrf.mxu0
    %v1404 = vadd.f32 %v1307, %v1403
    %v1405 = vpop.f32.mrf.mxu0
    %1406 = vdwg.mxu0
    %v1407 = vmul.f32 %v1345, 0.2
    %v1408 = vmul.f32 %v1348, 0.2
    %v1409 = vmul.f32 %v1353, 0.2
    %v1410 = vmul.f32 %v1356, 0.2
    %v1411 = vmul.f32 %v1361, 0.2
    %v1412 = vmul.f32 %v1364, 0.2
    %v1413 = vmul.f32 %v1369, 0.2
    %v1414 = vmul.f32 %v1372, 0.2
    %v1415 = vmul.f32 %v1377, 0.2
    %v1416 = vmul.f32 %v1380, 0.2
    %v1417 = vmul.f32 %v1385, 0.2
    %v1418 = vmul.f32 %v1388, 0.2
    %v1419 = vmul.f32 %v1393, 0.2
    %v1420 = vmul.f32 %v1396, 0.2
    %v1421 = vmul.f32 %v1401, 0.2
    %v1422 = vmul.f32 %v1404, 0.2
    %v1423 = vmax.f32 %v1345, %v1407
    %v1424 = vmax.f32 %v1348, %v1408
    %v1425 = vmax.f32 %v1353, %v1409
    %v1426 = vmax.f32 %v1356, %v1410
    %v1427 = vmax.f32 %v1361, %v1411
    %v1428 = vmax.f32 %v1364, %v1412
    %v1429 = vmax.f32 %v1369, %v1413
    %v1430 = vmax.f32 %v1372, %v1414
    %v1431 = vmax.f32 %v1377, %v1415
    %v1432 = vmax.f32 %v1380, %v1416
    %v1433 = vmax.f32 %v1385, %v1417
    %v1434 = vmax.f32 %v1388, %v1418
    %v1435 = vmax.f32 %v1393, %v1419
    %v1436 = vmax.f32 %v1396, %v1420
    %v1437 = vmax.f32 %v1401, %v1421
    %v1438 = vmax.f32 %v1404, %v1422
    %v1439 = vld [vmem:[%s3] sm:$0xff]
    %v1440 = vld [vmem:[%s3 + $0x8] sm:$0xff]
    %v1441 = vld [vmem:[%s3 + $0x10] sm:$0xff]
    %v1442 = vld [vmem:[%s3 + $0x18] sm:$0xff]
    %v1443 = vld [vmem:[%s3 + $0x20] sm:$0xff]
    %v1444 = vld [vmem:[%s3 + $0x28] sm:$0xff]
    %v1445 = vld [vmem:[%s3 + $0x30] sm:$0xff]
    %v1446 = vld [vmem:[%s3 + $0x38] sm:$0xff]
    %v1447 = vld [vmem:[%s3 + $0x40] sm:$0xff]
    %v1448 = vld [vmem:[%s3 + $0x48] sm:$0xff]
    %v1449 = vld [vmem:[%s3 + $0x50] sm:$0xff]
    %v1450 = vld [vmem:[%s3 + $0x58] sm:$0xff]
    %v1451 = vld [vmem:[%s3 + $0x60] sm:$0xff]
    %v1452 = vld [vmem:[%s3 + $0x68] sm:$0xff]
    %v1453 = vld [vmem:[%s3 + $0x70] sm:$0xff]
    %v1454 = vld [vmem:[%s3 + $0x78] sm:$0xff]
    %v1455 = vmul.f32 %v1423, %v1439
    %v1456 = vmul.f32 %v1424, %v1440
    %v1457 = vmul.f32 %v1425, %v1441
    %v1458 = vmul.f32 %v1426, %v1442
    %v1459 = vmul.f32 %v1427, %v1443
    %v1460 = vmul.f32 %v1428, %v1444
    %v1461 = vmul.f32 %v1429, %v1445
    %v1462 = vmul.f32 %v1430, %v1446
    %v1463 = vmul.f32 %v1431, %v1447
    %v1464 = vmul.f32 %v1432, %v1448
    %v1465 = vmul.f32 %v1433, %v1449
    %v1466 = vmul.f32 %v1434, %v1450
    %v1467 = vmul.f32 %v1435, %v1451
    %v1468 = vmul.f32 %v1436, %v1452
    %v1469 = vmul.f32 %v1437, %v1453
    %v1470 = vmul.f32 %v1438, %v1454
    %v1471 = vld [vmem:[%s4] sm:$0xff]
    %v1472 = vld [vmem:[%s4 + $0x8] sm:$0xff]
    %v1473 = vld [vmem:[%s4 + $0x10] sm:$0xff]
    %v1474 = vld [vmem:[%s4 + $0x18] sm:$0xff]
    %vm1475 = vcmask 261120
    %v1477 = vsel %vm1475, %v1455, 0
    %v1480 = vsel %vm1475, %v1456, 0
    %v1483 = vsel %vm1475, %v1457, 0
    %v1486 = vsel %vm1475, %v1458, 0
    %v1489 = vsel %vm1475, %v1459, 0
    %v1492 = vsel %vm1475, %v1460, 0
    %v1495 = vsel %vm1475, %v1461, 0
    %v1498 = vsel %vm1475, %v1462, 0
    %v1501 = vsel %vm1475, %v1463, 0
    %v1504 = vsel %vm1475, %v1464, 0
    %v1507 = vsel %vm1475, %v1465, 0
    %v1510 = vsel %vm1475, %v1466, 0
    %v1513 = vsel %vm1475, %v1467, 0
    %v1516 = vsel %vm1475, %v1468, 0
    %v1519 = vsel %vm1475, %v1469, 0
    %v1522 = vsel %vm1475, %v1470, 0
    %1524 = vmatprep.subr.mxu0 0.0
    %1525 = vmatpush1.msra.mxu0 0.0
    %1526 = vmatprep.subr.mxu0 0.0
    %1527 = vmatpush1.msra.mxu0 0.0
    %1528 = vmatprep.subr.mxu0 0.0
    %1529 = vmatpush1.msra.mxu0 0.0
    %1530 = vmatprep.subr.mxu0 0.0
    %1531 = vmatpush1.msra.mxu0 0.0
    %1532 = vmatprep.subr.mxu0 0.0
    %1533 = vmatpush1.msra.mxu0 0.0
    %1534 = vmatprep.subr.mxu0 0.0
    %1535 = vmatpush1.msra.mxu0 0.0
    %1536 = vmatprep.subr.mxu0 0.0
    %1537 = vmatpush1.msra.mxu0 0.0
    %1538 = vmatprep.subr.mxu0 0.0
    %1539 = vmatpush1.msra.mxu0 0.0
    %1540 = vmatprep.subr.mxu0 0.0
    %1541 = vmatpush1.msra.mxu0 0.0
    %1542 = vmatprep.subr.mxu0 0.0
    %1543 = vmatpush1.msra.mxu0 0.0
    %1544 = vmatprep.subr.mxu0 0.0
    %1545 = vmatpush1.msra.mxu0 0.0
    %1546 = vmatprep.subr.mxu0 0.0
    %1547 = vmatpush1.msra.mxu0 0.0
    %1548 = vmatprep.subr.mxu0 0.0
    %1549 = vmatpush1.msra.mxu0 %v1474
    %1550 = vmatprep.subr.mxu0 0.0
    %1551 = vmatpush1.msra.mxu0 %v1473
    %1552 = vmatprep.subr.mxu0 0.0
    %1553 = vmatpush1.msra.mxu0 %v1472
    %1554 = vmatprep.subr.mxu0 0.0
    %1555 = vmatpush1.msra.mxu0 %v1471
    %1556 = vmatprep.subr.mxu0 0.0
    %1557 = vmatpush2.msra.mxu0 0.0
    %1558 = vmatprep.subr.mxu0 0.0
    %1559 = vmatpush2.msra.mxu0 0.0
    %1560 = vmatprep.subr.mxu0 0.0
    %1561 = vmatpush2.msra.mxu0 0.0
    %1562 = vmatprep.subr.mxu0 0.0
    %1563 = vmatpush2.msra.mxu0 0.0
    %1564 = vmatprep.subr.mxu0 0.0
    %1565 = vmatpush2.msra.mxu0 0.0
    %1566 = vmatprep.subr.mxu0 0.0
    %1567 = vmatpush2.msra.mxu0 0.0
    %1568 = vmatprep.subr.mxu0 0.0
    %1569 = vmatpush2.msra.mxu0 0.0
    %1570 = vmatprep.subr.mxu0 0.0
    %1571 = vmatpush2.msra.mxu0 0.0
    %1572 = vmatprep.subr.mxu0 0.0
    %1573 = vmatpush2.msra.mxu0 0.0
    %1574 = vmatprep.subr.mxu0 0.0
    %1575 = vmatpush2.msra.mxu0 0.0
    %1576 = vmatprep.subr.mxu0 0.0
    %1577 = vmatpush2.msra.mxu0 0.0
    %1578 = vmatprep.subr.mxu0 0.0
    %1579 = vmatpush2.msra.mxu0 0.0
    %1580 = vmatprep.subr.mxu0 0.0
    %1581 = vmatpush2.msra.mxu0 0.0
    %1582 = vmatprep.subr.mxu0 0.0
    %1583 = vmatpush2.msra.mxu0 0.0
    %1584 = vmatprep.subr.mxu0 0.0
    %1585 = vmatpush2.msra.mxu0 0.0
    %1586 = vmatprep.subr.mxu0 0.0
    %1587 = vmatpush2.msra.mxu0 0.0
    %1588 = vmatprep.mubr.f32.mxu0 0.0
    %1589 = vmatmul.mubr.f32.gmra.mxu0 %v1477
    %v1590 = vpop.f32.mrf.mxu0
    %v1591 = vadd.f32 0.0, %v1590
    %v1592 = vpop.f32.mrf.mxu0
    %1593 = vmatprep.mubr.f32.mxu0 0.0
    %1594 = vmatmul.mubr.f32.gmra.mxu0 %v1480
    %v1595 = vpop.f32.mrf.mxu0
    %v1596 = vadd.f32 0.0, %v1595
    %v1597 = vpop.f32.mrf.mxu0
    %1598 = vmatprep.mubr.f32.mxu0 0.0
    %1599 = vmatmul.mubr.f32.gmra.mxu0 %v1483
    %v1600 = vpop.f32.mrf.mxu0
    %v1601 = vadd.f32 0.0, %v1600
    %v1602 = vpop.f32.mrf.mxu0
    %1603 = vmatprep.mubr.f32.mxu0 0.0
    %1604 = vmatmul.mubr.f32.gmra.mxu0 %v1486
    %v1605 = vpop.f32.mrf.mxu0
    %v1606 = vadd.f32 0.0, %v1605
    %v1607 = vpop.f32.mrf.mxu0
    %1608 = vmatprep.mubr.f32.mxu0 0.0
    %1609 = vmatmul.mubr.f32.gmra.mxu0 %v1489
    %v1610 = vpop.f32.mrf.mxu0
    %v1611 = vadd.f32 0.0, %v1610
    %v1612 = vpop.f32.mrf.mxu0
    %1613 = vmatprep.mubr.f32.mxu0 0.0
    %1614 = vmatmul.mubr.f32.gmra.mxu0 %v1492
    %v1615 = vpop.f32.mrf.mxu0
    %v1616 = vadd.f32 0.0, %v1615
    %v1617 = vpop.f32.mrf.mxu0
    %1618 = vmatprep.mubr.f32.mxu0 0.0
    %1619 = vmatmul.mubr.f32.gmra.mxu0 %v1495
    %v1620 = vpop.f32.mrf.mxu0
    %v1621 = vadd.f32 0.0, %v1620
    %v1622 = vpop.f32.mrf.mxu0
    %1623 = vmatprep.mubr.f32.mxu0 0.0
    %1624 = vmatmul.mubr.f32.gmra.mxu0 %v1498
    %v1625 = vpop.f32.mrf.mxu0
    %v1626 = vadd.f32 0.0, %v1625
    %v1627 = vpop.f32.mrf.mxu0
    %1628 = vmatprep.mubr.f32.mxu0 0.0
    %1629 = vmatmul.mubr.f32.gmra.mxu0 %v1501
    %v1630 = vpop.f32.mrf.mxu0
    %v1631 = vadd.f32 0.0, %v1630
    %v1632 = vpop.f32.mrf.mxu0
    %1633 = vmatprep.mubr.f32.mxu0 0.0
    %1634 = vmatmul.mubr.f32.gmra.mxu0 %v1504
    %v1635 = vpop.f32.mrf.mxu0
    %v1636 = vadd.f32 0.0, %v1635
    %v1637 = vpop.f32.mrf.mxu0
    %1638 = vmatprep.mubr.f32.mxu0 0.0
    %1639 = vmatmul.mubr.f32.gmra.mxu0 %v1507
    %v1640 = vpop.f32.mrf.mxu0
    %v1641 = vadd.f32 0.0, %v1640
    %v1642 = vpop.f32.mrf.mxu0
    %1643 = vmatprep.mubr.f32.mxu0 0.0
    %1644 = vmatmul.mubr.f32.gmra.mxu0 %v1510
    %v1645 = vpop.f32.mrf.mxu0
    %v1646 = vadd.f32 0.0, %v1645
    %v1647 = vpop.f32.mrf.mxu0
    %1648 = vmatprep.mubr.f32.mxu0 0.0
    %1649 = vmatmul.mubr.f32.gmra.mxu0 %v1513
    %v1650 = vpop.f32.mrf.mxu0
    %v1651 = vadd.f32 0.0, %v1650
    %v1652 = vpop.f32.mrf.mxu0
    %1653 = vmatprep.mubr.f32.mxu0 0.0
    %1654 = vmatmul.mubr.f32.gmra.mxu0 %v1516
    %v1655 = vpop.f32.mrf.mxu0
    %v1656 = vadd.f32 0.0, %v1655
    %v1657 = vpop.f32.mrf.mxu0
    %1658 = vmatprep.mubr.f32.mxu0 0.0
    %1659 = vmatmul.mubr.f32.gmra.mxu0 %v1519
    %v1660 = vpop.f32.mrf.mxu0
    %v1661 = vadd.f32 0.0, %v1660
    %v1662 = vpop.f32.mrf.mxu0
    %1663 = vmatprep.mubr.f32.mxu0 0.0
    %1664 = vmatmul.mubr.f32.gmra.mxu0 %v1522
    %v1665 = vpop.f32.mrf.mxu0
    %v1666 = vadd.f32 0.0, %v1665
    %v1667 = vpop.f32.mrf.mxu0
    %1668 = vdwg.mxu0
    %vm1669 = vcmask 15360
    %v1670 = vsel %vm1669, %v1591, 0.0
    %v1671 = vsel %vm1669, %v1596, 0.0
    %v1672 = vadd.f32 %v1670, %v1671
    %v1673 = vsel %vm1669, %v1601, 0.0
    %v1674 = vadd.f32 %v1672, %v1673
    %v1675 = vsel %vm1669, %v1606, 0.0
    %v1676 = vadd.f32 %v1674, %v1675
    %v1677 = vsel %vm1669, %v1611, 0.0
    %v1678 = vadd.f32 %v1676, %v1677
    %v1679 = vsel %vm1669, %v1616, 0.0
    %v1680 = vadd.f32 %v1678, %v1679
    %v1681 = vsel %vm1669, %v1621, 0.0
    %v1682 = vadd.f32 %v1680, %v1681
    %v1683 = vsel %vm1669, %v1626, 0.0
    %v1684 = vadd.f32 %v1682, %v1683
    %v1685 = vsel %vm1669, %v1631, 0.0
    %v1686 = vadd.f32 %v1684, %v1685
    %v1687 = vsel %vm1669, %v1636, 0.0
    %v1688 = vadd.f32 %v1686, %v1687
    %v1689 = vsel %vm1669, %v1641, 0.0
    %v1690 = vadd.f32 %v1688, %v1689
    %v1691 = vsel %vm1669, %v1646, 0.0
    %v1692 = vadd.f32 %v1690, %v1691
    %v1693 = vsel %vm1669, %v1651, 0.0
    %v1694 = vadd.f32 %v1692, %v1693
    %v1695 = vsel %vm1669, %v1656, 0.0
    %v1696 = vadd.f32 %v1694, %v1695
    %v1697 = vsel %vm1669, %v1661, 0.0
    %v1698 = vadd.f32 %v1696, %v1697
    %v1699 = vsel %vm1669, %v1666, 0.0
    %v1700 = vadd.f32 %v1698, %v1699
    %v1701 = vrot.slane %v1700, 4
    %v1702 = vadd.f32 %v1700, %v1701
    %v1703 = vrot.slane %v1702, 2
    %v1704 = vadd.f32 %v1702, %v1703
    %v1705 = vrot.slane %v1704, 1
    %v1706 = vadd.f32 %v1704, %v1705
    %v1707 = vld [vmem:[#allocation2] sm:$0x1]
    %1709 = vset.pattern.permute.xlu0 0
    %1710 = vperm.xlu0 %1709, %v1707
    %v1711 = vpop.permute.xlu0 %1710
    %v1713 = vlaneseq
    %v1714 = vshrl.u32 %v1713, 7
    %v1715 = vsub.s32 0, %v1714
    %v1716 = vrot.slane %v1711, %v1715
    %v1717 = vadd.f32 %v1706, %v1716
    %vm1718 = vcmask 8192
    %1719 = vst.msk [vmem:[#allocation3] sm:$0x1] %vm1718, %v1717
    // Predicated region
    $region26: #{discriminator_forward.7} parent=1 // pred_check
      _
    $region27: #{discriminator_forward.7} parent=1 // pred_check_branch
      %1721 = sbr.rel (0) target = $region29
    $region28: #{discriminator_forward.7} parent=1 // pred_region
      %s1723 = ssub.s32 16, 16
      %1724 = vsyncadd [#allocation4], %s1723
      %s1726 = sshll.u32 [#allocation3], 4
      %s1727 = int_to_ptr.vmem [resolvable:$true] %s1726
      %1729 = dma.vmem_to_hbm [thread:$0]  %s1727, 16, %s6, [#allocation4]
    $region29: #{discriminator_forward.7} parent=1 // pred_fallthru
      _
    // Predicated region
    $region30: #{discriminator_forward.7} parent=1 // pred_check
      _
    $region31: #{discriminator_forward.7} parent=1 // pred_check_branch
      %1731 = sbr.rel (0) target = $region33
    $region32: #{discriminator_forward.7} parent=1 // pred_region
      %1732 = dma.done [#allocation4], 16
    $region33: #{discriminator_forward.7} parent=1 // pred_fallthru
      _
    %1733 = vsyncpa [#allocation4], 1

</llo_original>
